<compile_context>
chip_gen: v7x
topology: tpu7x:2x2x1
jax: 0.10.0
libtpu: 0.0.40
codegen_flags: <defaults>
</compile_context>

<pallas_src>
from functools import partial

import jax
import jax.numpy as jnp
from jax import lax
from jax.experimental import pallas as pl
from jax.experimental.pallas import tpu as pltpu


# --------------------------------------------------------------------------
# Pallas kernel: one image per grid step.
#   conv1x1+bias+ReLU -> conv3x3(stride,pad=1)+bias+ReLU -> conv1x1+bias
#   -> SE -> (+ residual, optionally 1x1-stride conv + bias) -> ReLU
# (BN scale already folded into every conv weight by the wrapper.)
# --------------------------------------------------------------------------
def bottleneck_kernel(x_ref, w1_ref, b1_ref, w2_ref, b2_ref,
                      w3_ref, b3_ref, wfc1_ref, wfc2_ref,
                      wd_ref, bd_ref, o_ref, pad_ref,
                      *, stride, down_sampling):
    H, W, Cin = x_ref.shape
    Cmid = w1_ref.shape[1]
    Cout = w3_ref.shape[1]
    Ho = (H - 1) // stride + 1
    Wo = (W - 1) // stride + 1
    Hp, Wp = H + 2, W + 2
    f32, bf16 = jnp.float32, jnp.bfloat16

    # ---- conv1: 1x1 (BN scale folded) + bias + ReLU --------------------------
    x = x_ref[...]                                               # (H, W, Cin) bf16
    h1 = jnp.dot(x.reshape(H * W, Cin), w1_ref[...],
                 preferred_element_type=f32)                     # MXU, f32 acc
    h1 = jnp.maximum(h1 + b1_ref[...], 0.0)                      # f32 epilogue
    h1 = h1.reshape(H, W, Cmid).astype(bf16)

    # ---- halo-padded scratch: aligned slab store + 2 row stores --------------
    # Rewritten every grid step (scratch persists across grid iterations and
    # megacore shards, so no pl.when(program_id==0) guard).
    zero_col = jnp.zeros((H, 1, Cmid), bf16)
    zero_row = jnp.zeros((1, Wp, Cmid), bf16)
    pad_ref[0:1, :, :] = zero_row
    pad_ref[Hp - 1:Hp, :, :] = zero_row
    pad_ref[1:H + 1, :, :] = jnp.concatenate([zero_col, h1, zero_col], axis=1)

    # ---- conv2: 3x3, stride, pad=1 (BN scale folded) + bias + ReLU -----------
    # im2col over kx: contraction K = 3*Cmid per matmul (3 matmuls total)
    # instead of 9 matmuls with K = Cmid -> fills the wide MXU contraction.
    acc = None
    for ky in range(3):
        if stride == 1:
            views = [pad_ref[ky:ky + Ho, kx:kx + Wo, :] for kx in range(3)]
        else:
            # TODO(synk): de-interleave the scratch by W parity so stride-2
            # taps become contiguous sublane slices instead of strided loads.
            views = [pad_ref[pl.ds(ky, Ho, stride), pl.ds(kx, Wo, stride), :]
                     for kx in range(3)]
        patch = jnp.concatenate(views, axis=-1).reshape(Ho * Wo, 3 * Cmid)
        t = jnp.dot(patch, w2_ref[ky], preferred_element_type=f32)
        acc = t if acc is None else acc + t
    h2 = jnp.maximum(acc + b2_ref[...], 0.0)                     # (Ho*Wo, Cmid) f32

    # ---- conv3: 1x1 (BN scale folded) + bias (no ReLU) -----------------------
    h3 = jnp.dot(h2.astype(bf16), w3_ref[...],
                 preferred_element_type=f32) + b3_ref[...]       # (Ho*Wo, Cout)

    # ---- SE: pool(h2) -> conv3 affine -> FC -> ReLU -> FC -> sigmoid ---------
    # mean(h3) == mean(h2) @ w3 + b3 (conv3+BN is affine): pool the Cmid-wide
    # h2 (4x less reduction at expansion=4) then one tiny (1,Cmid)x(Cmid,Cout)
    # matmul.  Mean = sum * compile-time reciprocal (no divide).
    pooled_mid = jnp.sum(h2, axis=0, keepdims=True) * (1.0 / (Ho * Wo))
    pooled = jnp.dot(pooled_mid, w3_ref[...].astype(f32),
                     preferred_element_type=f32) + b3_ref[...]   # (1, Cout)
    y = jnp.maximum(jnp.dot(pooled, wfc1_ref[...],
                            preferred_element_type=f32), 0.0)
    se = jax.nn.sigmoid(jnp.dot(y, wfc2_ref[...],
                                preferred_element_type=f32))     # (1, Cout)

    # ---- residual (+ 1x1-stride conv if down-sampling) + SE + add + ReLU -----
    if down_sampling:
        if stride == 1:
            xs = x.reshape(H * W, Cin)
        else:
            xs = x_ref[pl.ds(0, Ho, stride), pl.ds(0, Wo, stride), :]
            xs = xs.reshape(Ho * Wo, Cin)
        res = jnp.dot(xs, wd_ref[...], preferred_element_type=f32) + bd_ref[...]
    else:
        # identity shortcut: requires Cin == Cout and stride == 1
        res = x.reshape(H * W, Cin).astype(f32)

    out = jnp.maximum(h3 * se + res, 0.0)
    o_ref[...] = out.reshape(Ho, Wo, Cout).astype(o_ref.dtype)


# --------------------------------------------------------------------------
# Wrapper: NCHW <-> NHWC, BN folding, bf16 casts, grid/BlockSpec plumbing.
# --------------------------------------------------------------------------
def bottleneck_forward(x_nchw, params, *, stride=1, down_sampling=False,
                       out_dtype=jnp.bfloat16):
    assert stride in (1, 2), "ResNet bottleneck uses stride 1 or 2"
    bf16 = jnp.bfloat16
    # Activation shipped as bf16 (halves the x DMA + VMEM); transpose in bf16.
    x = jnp.transpose(x_nchw.astype(bf16), (0, 2, 3, 1))          # NHWC
    N, H, W, Cin = x.shape
    Cmid = params["w1"].shape[1]
    Cout = params["w3"].shape[1]
    Ho = (H - 1) // stride + 1
    Wo = (W - 1) // stride + 1
    if not down_sampling:
        assert stride == 1 and Cin == Cout, "identity shortcut shape mismatch"

    # Fold BN scales into conv weights (exact, per-output-channel linear),
    # cast once to bf16.  Only the bias add (+ReLU) remains in the kernel.
    w1 = (params["w1"] * params["s1"]).astype(bf16)               # (Cin, Cmid)
    w2 = (params["w2_hwio"] * params["s2"].reshape(1, 1, 1, Cmid)
          ).reshape(3, 3 * Cmid, Cmid).astype(bf16)               # kx folded into K
    w3 = (params["w3"] * params["s3"]).astype(bf16)               # (Cmid, Cout)
    wd = (params["wd"] * params["sd"]).astype(bf16)               # (Cin, Cout)
    b1, b2, b3, bd = params["b1"], params["b2"], params["b3"], params["bd"]
    wfc1, wfc2 = params["wfc1"], params["wfc2"]

    def fullspec(a):
        nd = a.ndim
        return pl.BlockSpec(block_shape=a.shape,
                            index_map=lambda n, _nd=nd: (0,) * _nd)

    in_specs = [
        pl.BlockSpec(block_shape=(None, H, W, Cin),
                     index_map=lambda n: (n, 0, 0, 0)),
        fullspec(w1), fullspec(b1),
        fullspec(w2), fullspec(b2),
        fullspec(w3), fullspec(b3),
        fullspec(wfc1), fullspec(wfc2),
        fullspec(wd), fullspec(bd),
    ]
    out_spec = pl.BlockSpec(block_shape=(None, Ho, Wo, Cout),
                            index_map=lambda n: (n, 0, 0, 0))

    # VMEM budget derived from the actual block sizes (x/out double-buffered,
    # grid-invariant weights double-buffered by default, + padded scratch),
    # with 2x + 4 MiB headroom, clamped to [16 MiB, 100 MiB].
    # TODO(synk): single-buffer the grid-invariant weight blocks
    # (pipeline_mode=pl.Buffered(1)) for the 64 MiB v7x part at production
    # stage-4 shapes.
    w_bytes = 2 * int(w1.size + w2.size + w3.size + wd.size)          # bf16
    s_bytes = 4 * int(b1.size + b2.size + b3.size + bd.size
                      + wfc1.size + wfc2.size)                        # f32
    blk_bytes = (2 * H * W * Cin * 2
                 + 2 * Ho * Wo * Cout * jnp.dtype(out_dtype).itemsize
                 + 2 * (w_bytes + s_bytes)
                 + (H + 2) * (W + 2) * Cmid * 2)
    vmem_limit = int(min(max(2 * blk_bytes + (4 << 20), 16 << 20), 100 << 20))

    # CompilerParams was named TPUCompilerParams in older JAX releases.
    compiler_params_cls = (getattr(pltpu, "CompilerParams", None)
                           or getattr(pltpu, "TPUCompilerParams"))

    kern = partial(bottleneck_kernel, stride=stride,
                   down_sampling=down_sampling)
    out = pl.pallas_call(
        kern,
        grid=(N,),
        in_specs=in_specs,
        out_specs=out_spec,
        out_shape=jax.ShapeDtypeStruct((N, Ho, Wo, Cout), out_dtype),
        scratch_shapes=[pltpu.VMEM((H + 2, W + 2, Cmid), bf16)],
        compiler_params=compiler_params_cls(
            # batch axis is fully independent -> megacore-shardable on v7x
            dimension_semantics=("parallel",),
            vmem_limit_bytes=vmem_limit,
        ),
    )(x, w1, b1, w2, b2, w3, b3, wfc1, wfc2, wd, bd)
    return jnp.transpose(out, (0, 3, 1, 2))                       # NCHW


# --------------------------------------------------------------------------
# Deterministic parameter construction (inference-mode BN, folded later).
# --------------------------------------------------------------------------
def _fold_bn(key, c):
    k1, k2, k3, k4 = jax.random.split(key, 4)
    gamma = jax.random.uniform(k1, (c,), minval=0.8, maxval=1.2)
    beta = 0.1 * jax.random.normal(k2, (c,))
    mean = 0.1 * jax.random.normal(k3, (c,))
    var = jax.random.uniform(k4, (c,), minval=0.5, maxval=1.5)
    scale = gamma / jnp.sqrt(var + 1e-5)
    bias = beta - mean * scale
    return (scale.reshape(1, c).astype(jnp.float32),
            bias.reshape(1, c).astype(jnp.float32))


def init_params(key, in_places, places, expansion=4, reduction=16):
    cmid = places
    cout = places * expansion
    cse = max(cout // reduction, 1)
    ks = jax.random.split(key, 10)
    s1, b1 = _fold_bn(ks[6], cmid)
    s2, b2 = _fold_bn(ks[7], cmid)
    s3, b3 = _fold_bn(ks[8], cout)
    sd, bd = _fold_bn(ks[9], cout)
    return dict(
        w1=0.1 * jax.random.normal(ks[0], (in_places, cmid), jnp.float32),
        w2_hwio=0.1 * jax.random.normal(ks[1], (3, 3, cmid, cmid), jnp.float32),
        w3=0.1 * jax.random.normal(ks[2], (cmid, cout), jnp.float32),
        wd=0.1 * jax.random.normal(ks[3], (in_places, cout), jnp.float32),
        wfc1=0.1 * jax.random.normal(ks[4], (cout, cse), jnp.float32),
        wfc2=0.1 * jax.random.normal(ks[5], (cse, cout), jnp.float32),
        s1=s1, b1=b1, s2=s2, b2=b2, s3=s3, b3=b3, sd=sd, bd=bd,
    )


# --------------------------------------------------------------------------
# Pure-JAX reference with bf16 conv operands / f32 accumulation (unfolded BN
# scale applied in f32), so the comparison tolerance stays tight.
# --------------------------------------------------------------------------
def bottleneck_ref(x_nchw, params, *, stride=1, down_sampling=False):
    dn = ("NHWC", "HWIO", "NHWC")
    bf16, f32 = jnp.bfloat16, jnp.float32
    x = jnp.transpose(x_nchw, (0, 2, 3, 1)).astype(f32)
    Cin = x.shape[-1]
    Cmid = params["w1"].shape[1]
    Cout = params["w3"].shape[1]

    def conv(inp, w, s, pad):
        return lax.conv_general_dilated(
            inp.astype(bf16), w.astype(bf16), (s, s), pad,
            dimension_numbers=dn, preferred_element_type=f32)

    h = conv(x, params["w1"].reshape(1, 1, Cin, Cmid), 1, "VALID")
    h = jnp.maximum(h * params["s1"] + params["b1"], 0.0)

    h = conv(h, params["w2_hwio"], stride, ((1, 1), (1, 1)))
    h = jnp.maximum(h * params["s2"] + params["b2"], 0.0)

    h = conv(h, params["w3"].reshape(1, 1, Cmid, Cout), 1, "VALID")
    h = h * params["s3"] + params["b3"]

    y = jnp.mean(h, axis=(1, 2))
    y = jnp.maximum(y @ params["wfc1"], 0.0)
    y = jax.nn.sigmoid(y @ params["wfc2"])
    h = h * y[:, None, None, :]

    if down_sampling:
        res = conv(x, params["wd"].reshape(1, 1, Cin, Cout), stride, "VALID")
        res = res * params["sd"] + params["bd"]
    else:
        res = x

    out = jnp.maximum(h + res, 0.0)
    return jnp.transpose(out, (0, 3, 1, 2))


if __name__ == "__main__":
    key = jax.random.PRNGKey(0)
    N, H, W = 2, 16, 16
    configs = [
        dict(in_places=64, places=32, stride=1, down_sampling=True),
        dict(in_places=128, places=32, stride=1, down_sampling=False),
        dict(in_places=64, places=32, stride=2, down_sampling=True),
    ]
    all_ok = True
    for cfg in configs:
        key, kp, kx = jax.random.split(key, 3)
        params = init_params(kp, cfg["in_places"], cfg["places"],
                             expansion=4, reduction=16)
        x = jax.random.normal(kx, (N, cfg["in_places"], H, W), jnp.float32)
        out = bottleneck_forward(x, params, stride=cfg["stride"],
                                 down_sampling=cfg["down_sampling"])
        out = jax.block_until_ready(out)
        ref = bottleneck_ref(x, params, stride=cfg["stride"],
                             down_sampling=cfg["down_sampling"])
        # Slightly larger atol than before: folded-BN weights and the bf16
        # identity shortcut each add ~1 ulp(bf16) of extra rounding.
        ok = bool(jnp.allclose(out.astype(jnp.float32), ref,
                               rtol=2e-2, atol=3e-2))
        all_ok &= ok
    assert all_ok, "Pallas kernel does not match JAX reference"
    print("KERNEL_OK")
</pallas_src>

<mosaic_0001>
module attributes {stable_mosaic.version = 11 : i64} {
  func.func @bottleneck_kernel(%arg0: i32, %arg1: memref<1x16x16x64xbf16, #tpu.memory_space<vmem>>, %arg2: memref<64x32xbf16, #tpu.memory_space<vmem>>, %arg3: memref<1x32xf32, #tpu.memory_space<vmem>>, %arg4: memref<3x96x32xbf16, #tpu.memory_space<vmem>>, %arg5: memref<1x32xf32, #tpu.memory_space<vmem>>, %arg6: memref<32x128xbf16, #tpu.memory_space<vmem>>, %arg7: memref<1x128xf32, #tpu.memory_space<vmem>>, %arg8: memref<128x8xf32, #tpu.memory_space<vmem>>, %arg9: memref<8x128xf32, #tpu.memory_space<vmem>>, %arg10: memref<64x128xbf16, #tpu.memory_space<vmem>>, %arg11: memref<1x128xf32, #tpu.memory_space<vmem>>, %arg12: memref<1x16x16x128xbf16, #tpu.memory_space<vmem>>, %arg13: memref<18x18x32xbf16, #tpu.memory_space<vmem>>) attributes {dimension_semantics = [#tpu.dimension_semantics<parallel>], iteration_bounds = array<i64: 2>, scalar_prefetch = 0 : i64, scratch_operands = 1 : i64, tpu.core_type = #tpu.core_type<tc>, window_params = [{transform_indices = @transform_0, window_bounds = array<i64: 1, 16, 16, 64>}, {pipeline_mode = #tpu.pipeline_mode<synchronous>, transform_indices = @transform_1, window_bounds = array<i64: 64, 32>}, {pipeline_mode = #tpu.pipeline_mode<synchronous>, transform_indices = @transform_2, window_bounds = array<i64: 1, 32>}, {pipeline_mode = #tpu.pipeline_mode<synchronous>, transform_indices = @transform_3, window_bounds = array<i64: 3, 96, 32>}, {pipeline_mode = #tpu.pipeline_mode<synchronous>, transform_indices = @transform_4, window_bounds = array<i64: 1, 32>}, {pipeline_mode = #tpu.pipeline_mode<synchronous>, transform_indices = @transform_5, window_bounds = array<i64: 32, 128>}, {pipeline_mode = #tpu.pipeline_mode<synchronous>, transform_indices = @transform_6, window_bounds = array<i64: 1, 128>}, {pipeline_mode = #tpu.pipeline_mode<synchronous>, transform_indices = @transform_7, window_bounds = array<i64: 128, 8>}, {pipeline_mode = #tpu.pipeline_mode<synchronous>, transform_indices = @transform_8, window_bounds = array<i64: 8, 128>}, {pipeline_mode = #tpu.pipeline_mode<synchronous>, transform_indices = @transform_9, window_bounds = array<i64: 64, 128>}, {pipeline_mode = #tpu.pipeline_mode<synchronous>, transform_indices = @transform_10, window_bounds = array<i64: 1, 128>}, {transform_indices = @transform_11, window_bounds = array<i64: 1, 16, 16, 128>}]} {
    %c0 = arith.constant 0 : index
    %c0_0 = arith.constant 0 : index
    %c0_1 = arith.constant 0 : index
    %c0_2 = arith.constant 0 : index
    %0 = vector.load %arg1[%c0, %c0_0, %c0_1, %c0_2] : memref<1x16x16x64xbf16, #tpu.memory_space<vmem>>, vector<1x16x16x64xbf16>
    %1 = vector.shape_cast %0 : vector<1x16x16x64xbf16> to vector<16x16x64xbf16>
    %2 = vector.shape_cast %1 : vector<16x16x64xbf16> to vector<256x64xbf16>
    %c0_3 = arith.constant 0 : index
    %c0_4 = arith.constant 0 : index
    %3 = vector.load %arg2[%c0_3, %c0_4] : memref<64x32xbf16, #tpu.memory_space<vmem>>, vector<64x32xbf16>
    %cst = arith.constant dense<0.000000e+00> : vector<256x32xf32>
    %4 = tpu.matmul %2, %3, %cst {dimension_numbers = #tpu.dot_dimension_numbers<[1], [0], [0], [1], [0, 0, 1, 1], [], []>} : vector<256x64xbf16>, vector<64x32xbf16>, vector<256x32xf32> -> vector<256x32xf32>
    %c0_5 = arith.constant 0 : index
    %c0_6 = arith.constant 0 : index
    %5 = vector.load %arg3[%c0_5, %c0_6] : memref<1x32xf32, #tpu.memory_space<vmem>>, vector<1x32xf32>
    %6 = vector.broadcast %5 : vector<1x32xf32> to vector<256x32xf32>
    %7 = arith.addf %4, %6 : vector<256x32xf32>
    %cst_7 = arith.constant 0.000000e+00 : f32
    %8 = vector.broadcast %cst_7 : f32 to vector<256x32xf32>
    %9 = arith.maximumf %7, %8 : vector<256x32xf32>
    %10 = vector.shape_cast %9 : vector<256x32xf32> to vector<16x16x32xf32>
    %11 = arith.truncf %10 : vector<16x16x32xf32> to vector<16x16x32xbf16>
    %cst_8 = arith.constant 0.000000e+00 : bf16
    %12 = vector.broadcast %cst_8 : bf16 to vector<16x1x32xbf16>
    %cst_9 = arith.constant 0.000000e+00 : bf16
    %13 = vector.broadcast %cst_9 : bf16 to vector<1x18x32xbf16>
    %c0_10 = arith.constant 0 : index
    %c0_11 = arith.constant 0 : index
    %c0_12 = arith.constant 0 : index
    %14 = vector.load %arg13[%c0_10, %c0_11, %c0_12] : memref<18x18x32xbf16, #tpu.memory_space<vmem>>, vector<1x18x32xbf16>
    tpu.vector_store %arg13[%c0_10, %c0_11, %c0_12], %13 {strides = array<i32>} : memref<18x18x32xbf16, #tpu.memory_space<vmem>>, vector<1x18x32xbf16>,
    %c17 = arith.constant 17 : index
    %c0_13 = arith.constant 0 : index
    %c0_14 = arith.constant 0 : index
    %15 = vector.load %arg13[%c17, %c0_13, %c0_14] : memref<18x18x32xbf16, #tpu.memory_space<vmem>>, vector<1x18x32xbf16>
    tpu.vector_store %arg13[%c17, %c0_13, %c0_14], %13 {strides = array<i32>} : memref<18x18x32xbf16, #tpu.memory_space<vmem>>, vector<1x18x32xbf16>,
    %16 = tpu.concatenate %12, %11, %12 in 1 : vector<16x1x32xbf16>, vector<16x16x32xbf16>, vector<16x1x32xbf16> -> vector<16x18x32xbf16>
    %c1 = arith.constant 1 : index
    %c0_15 = arith.constant 0 : index
    %c0_16 = arith.constant 0 : index
    %17 = vector.load %arg13[%c1, %c0_15, %c0_16] : memref<18x18x32xbf16, #tpu.memory_space<vmem>>, vector<16x18x32xbf16>
    tpu.vector_store %arg13[%c1, %c0_15, %c0_16], %16 {strides = array<i32>} : memref<18x18x32xbf16, #tpu.memory_space<vmem>>, vector<16x18x32xbf16>,
    %c0_17 = arith.constant 0 : index
    %c0_18 = arith.constant 0 : index
    %c0_19 = arith.constant 0 : index
    %18 = vector.load %arg13[%c0_17, %c0_18, %c0_19] : memref<18x18x32xbf16, #tpu.memory_space<vmem>>, vector<16x16x32xbf16>
    %c0_20 = arith.constant 0 : index
    %c1_21 = arith.constant 1 : index
    %c0_22 = arith.constant 0 : index
    %19 = vector.load %arg13[%c0_20, %c1_21, %c0_22] : memref<18x18x32xbf16, #tpu.memory_space<vmem>>, vector<16x16x32xbf16>
    %c0_23 = arith.constant 0 : index
    %c2 = arith.constant 2 : index
    %c0_24 = arith.constant 0 : index
    %20 = vector.load %arg13[%c0_23, %c2, %c0_24] : memref<18x18x32xbf16, #tpu.memory_space<vmem>>, vector<16x16x32xbf16>
    %21 = tpu.concatenate %18, %19, %20 in 2 : vector<16x16x32xbf16>, vector<16x16x32xbf16>, vector<16x16x32xbf16> -> vector<16x16x96xbf16>
    %22 = vector.shape_cast %21 : vector<16x16x96xbf16> to vector<256x96xbf16>
    %c0_25 = arith.constant 0 : index
    %c0_26 = arith.constant 0 : index
    %c0_27 = arith.constant 0 : index
    %23 = vector.load %arg4[%c0_25, %c0_26, %c0_27] : memref<3x96x32xbf16, #tpu.memory_space<vmem>>, vector<1x96x32xbf16>
    %24 = vector.shape_cast %23 : vector<1x96x32xbf16> to vector<96x32xbf16>
    %cst_28 = arith.constant dense<0.000000e+00> : vector<256x32xf32>
    %25 = tpu.matmul %22, %24, %cst_28 {dimension_numbers = #tpu.dot_dimension_numbers<[1], [0], [0], [1], [0, 0, 1, 1], [], []>} : vector<256x96xbf16>, vector<96x32xbf16>, vector<256x32xf32> -> vector<256x32xf32>
    %c1_29 = arith.constant 1 : index
    %c0_30 = arith.constant 0 : index
    %c0_31 = arith.constant 0 : index
    %26 = vector.load %arg13[%c1_29, %c0_30, %c0_31] : memref<18x18x32xbf16, #tpu.memory_space<vmem>>, vector<16x16x32xbf16>
    %c1_32 = arith.constant 1 : index
    %c1_33 = arith.constant 1 : index
    %c0_34 = arith.constant 0 : index
    %27 = vector.load %arg13[%c1_32, %c1_33, %c0_34] : memref<18x18x32xbf16, #tpu.memory_space<vmem>>, vector<16x16x32xbf16>
    %c1_35 = arith.constant 1 : index
    %c2_36 = arith.constant 2 : index
    %c0_37 = arith.constant 0 : index
    %28 = vector.load %arg13[%c1_35, %c2_36, %c0_37] : memref<18x18x32xbf16, #tpu.memory_space<vmem>>, vector<16x16x32xbf16>
    %29 = tpu.concatenate %26, %27, %28 in 2 : vector<16x16x32xbf16>, vector<16x16x32xbf16>, vector<16x16x32xbf16> -> vector<16x16x96xbf16>
    %30 = vector.shape_cast %29 : vector<16x16x96xbf16> to vector<256x96xbf16>
    %c1_38 = arith.constant 1 : index
    %c0_39 = arith.constant 0 : index
    %c0_40 = arith.constant 0 : index
    %31 = vector.load %arg4[%c1_38, %c0_39, %c0_40] : memref<3x96x32xbf16, #tpu.memory_space<vmem>>, vector<1x96x32xbf16>
    %32 = vector.shape_cast %31 : vector<1x96x32xbf16> to vector<96x32xbf16>
    %cst_41 = arith.constant dense<0.000000e+00> : vector<256x32xf32>
    %33 = tpu.matmul %30, %32, %cst_41 {dimension_numbers = #tpu.dot_dimension_numbers<[1], [0], [0], [1], [0, 0, 1, 1], [], []>} : vector<256x96xbf16>, vector<96x32xbf16>, vector<256x32xf32> -> vector<256x32xf32>
    %34 = arith.addf %25, %33 : vector<256x32xf32>
    %c2_42 = arith.constant 2 : index
    %c0_43 = arith.constant 0 : index
    %c0_44 = arith.constant 0 : index
    %35 = vector.load %arg13[%c2_42, %c0_43, %c0_44] : memref<18x18x32xbf16, #tpu.memory_space<vmem>>, vector<16x16x32xbf16>
    %c2_45 = arith.constant 2 : index
    %c1_46 = arith.constant 1 : index
    %c0_47 = arith.constant 0 : index
    %36 = vector.load %arg13[%c2_45, %c1_46, %c0_47] : memref<18x18x32xbf16, #tpu.memory_space<vmem>>, vector<16x16x32xbf16>
    %c2_48 = arith.constant 2 : index
    %c2_49 = arith.constant 2 : index
    %c0_50 = arith.constant 0 : index
    %37 = vector.load %arg13[%c2_48, %c2_49, %c0_50] : memref<18x18x32xbf16, #tpu.memory_space<vmem>>, vector<16x16x32xbf16>
    %38 = tpu.concatenate %35, %36, %37 in 2 : vector<16x16x32xbf16>, vector<16x16x32xbf16>, vector<16x16x32xbf16> -> vector<16x16x96xbf16>
    %39 = vector.shape_cast %38 : vector<16x16x96xbf16> to vector<256x96xbf16>
    %c2_51 = arith.constant 2 : index
    %c0_52 = arith.constant 0 : index
    %c0_53 = arith.constant 0 : index
    %40 = vector.load %arg4[%c2_51, %c0_52, %c0_53] : memref<3x96x32xbf16, #tpu.memory_space<vmem>>, vector<1x96x32xbf16>
    %41 = vector.shape_cast %40 : vector<1x96x32xbf16> to vector<96x32xbf16>
    %cst_54 = arith.constant dense<0.000000e+00> : vector<256x32xf32>
    %42 = tpu.matmul %39, %41, %cst_54 {dimension_numbers = #tpu.dot_dimension_numbers<[1], [0], [0], [1], [0, 0, 1, 1], [], []>} : vector<256x96xbf16>, vector<96x32xbf16>, vector<256x32xf32> -> vector<256x32xf32>
    %43 = arith.addf %34, %42 : vector<256x32xf32>
    %c0_55 = arith.constant 0 : index
    %c0_56 = arith.constant 0 : index
    %44 = vector.load %arg5[%c0_55, %c0_56] : memref<1x32xf32, #tpu.memory_space<vmem>>, vector<1x32xf32>
    %45 = vector.broadcast %44 : vector<1x32xf32> to vector<256x32xf32>
    %46 = arith.addf %43, %45 : vector<256x32xf32>
    %cst_57 = arith.constant 0.000000e+00 : f32
    %47 = vector.broadcast %cst_57 : f32 to vector<256x32xf32>
    %48 = arith.maximumf %46, %47 : vector<256x32xf32>
    %49 = arith.truncf %48 : vector<256x32xf32> to vector<256x32xbf16>
    %c0_58 = arith.constant 0 : index
    %c0_59 = arith.constant 0 : index
    %50 = vector.load %arg6[%c0_58, %c0_59] : memref<32x128xbf16, #tpu.memory_space<vmem>>, vector<32x128xbf16>
    %cst_60 = arith.constant dense<0.000000e+00> : vector<256x128xf32>
    %51 = tpu.matmul %49, %50, %cst_60 {dimension_numbers = #tpu.dot_dimension_numbers<[1], [0], [0], [1], [0, 0, 1, 1], [], []>} : vector<256x32xbf16>, vector<32x128xbf16>, vector<256x128xf32> -> vector<256x128xf32>
    %c0_61 = arith.constant 0 : index
    %c0_62 = arith.constant 0 : index
    %52 = vector.load %arg7[%c0_61, %c0_62] : memref<1x128xf32, #tpu.memory_space<vmem>>, vector<1x128xf32>
    %53 = vector.broadcast %52 : vector<1x128xf32> to vector<256x128xf32>
    %54 = arith.addf %51, %53 : vector<256x128xf32>
    %cst_63 = arith.constant dense<0.000000e+00> : vector<32xf32>
    %55 = vector.multi_reduction <add>, %48, %cst_63 [0] : vector<256x32xf32> to vector<32xf32>
    %56 = vector.shape_cast %55 : vector<32xf32> to vector<1x32xf32>
    %cst_64 = arith.constant 3.906250e-03 : f32
    %57 = vector.broadcast %cst_64 : f32 to vector<1x32xf32>
    %58 = arith.mulf %56, %57 : vector<1x32xf32>
    %c0_65 = arith.constant 0 : index
    %c0_66 = arith.constant 0 : index
    %59 = vector.load %arg6[%c0_65, %c0_66] : memref<32x128xbf16, #tpu.memory_space<vmem>>, vector<32x128xbf16>
    %60 = arith.extf %59 : vector<32x128xbf16> to vector<32x128xf32>
    %cst_67 = arith.constant dense<0.000000e+00> : vector<1x128xf32>
    %61 = tpu.matmul %58, %60, %cst_67 {dimension_numbers = #tpu.dot_dimension_numbers<[1], [0], [0], [1], [0, 0, 1, 1], [], []>} : vector<1x32xf32>, vector<32x128xf32>, vector<1x128xf32> -> vector<1x128xf32>
    %c0_68 = arith.constant 0 : index
    %c0_69 = arith.constant 0 : index
    %62 = vector.load %arg7[%c0_68, %c0_69] : memref<1x128xf32, #tpu.memory_space<vmem>>, vector<1x128xf32>
    %63 = arith.addf %61, %62 : vector<1x128xf32>
    %c0_70 = arith.constant 0 : index
    %c0_71 = arith.constant 0 : index
    %64 = vector.load %arg8[%c0_70, %c0_71] : memref<128x8xf32, #tpu.memory_space<vmem>>, vector<128x8xf32>
    %cst_72 = arith.constant dense<0.000000e+00> : vector<1x8xf32>
    %65 = tpu.matmul %63, %64, %cst_72 {dimension_numbers = #tpu.dot_dimension_numbers<[1], [0], [0], [1], [0, 0, 1, 1], [], []>} : vector<1x128xf32>, vector<128x8xf32>, vector<1x8xf32> -> vector<1x8xf32>
    %cst_73 = arith.constant 0.000000e+00 : f32
    %66 = vector.broadcast %cst_73 : f32 to vector<1x8xf32>
    %67 = arith.maximumf %65, %66 : vector<1x8xf32>
    %c0_74 = arith.constant 0 : index
    %c0_75 = arith.constant 0 : index
    %68 = vector.load %arg9[%c0_74, %c0_75] : memref<8x128xf32, #tpu.memory_space<vmem>>, vector<8x128xf32>
    %cst_76 = arith.constant dense<0.000000e+00> : vector<1x128xf32>
    %69 = tpu.matmul %67, %68, %cst_76 {dimension_numbers = #tpu.dot_dimension_numbers<[1], [0], [0], [1], [0, 0, 1, 1], [], []>} : vector<1x8xf32>, vector<8x128xf32>, vector<1x128xf32> -> vector<1x128xf32>
    %70 = arith.negf %69 : vector<1x128xf32>
    %71 = math.exp %70 : vector<1x128xf32>
    %cst_77 = arith.constant 1.000000e+00 : f32
    %72 = vector.broadcast %cst_77 : f32 to vector<1x128xf32>
    %73 = arith.addf %72, %71 : vector<1x128xf32>
    %74 = arith.divf %72, %73 : vector<1x128xf32>
    %75 = vector.shape_cast %1 : vector<16x16x64xbf16> to vector<256x64xbf16>
    %c0_78 = arith.constant 0 : index
    %c0_79 = arith.constant 0 : index
    %76 = vector.load %arg10[%c0_78, %c0_79] : memref<64x128xbf16, #tpu.memory_space<vmem>>, vector<64x128xbf16>
    %cst_80 = arith.constant dense<0.000000e+00> : vector<256x128xf32>
    %77 = tpu.matmul %75, %76, %cst_80 {dimension_numbers = #tpu.dot_dimension_numbers<[1], [0], [0], [1], [0, 0, 1, 1], [], []>} : vector<256x64xbf16>, vector<64x128xbf16>, vector<256x128xf32> -> vector<256x128xf32>
    %c0_81 = arith.constant 0 : index
    %c0_82 = arith.constant 0 : index
    %78 = vector.load %arg11[%c0_81, %c0_82] : memref<1x128xf32, #tpu.memory_space<vmem>>, vector<1x128xf32>
    %79 = vector.broadcast %78 : vector<1x128xf32> to vector<256x128xf32>
    %80 = arith.addf %77, %79 : vector<256x128xf32>
    %81 = vector.broadcast %74 : vector<1x128xf32> to vector<256x128xf32>
    %82 = arith.mulf %54, %81 : vector<256x128xf32>
    %83 = arith.addf %82, %80 : vector<256x128xf32>
    %cst_83 = arith.constant 0.000000e+00 : f32
    %84 = vector.broadcast %cst_83 : f32 to vector<256x128xf32>
    %85 = arith.maximumf %83, %84 : vector<256x128xf32>
    %86 = vector.shape_cast %85 : vector<256x128xf32> to vector<16x16x128xf32>
    %87 = arith.truncf %86 : vector<16x16x128xf32> to vector<16x16x128xbf16>
    %c0_84 = arith.constant 0 : index
    %c0_85 = arith.constant 0 : index
    %c0_86 = arith.constant 0 : index
    %c0_87 = arith.constant 0 : index
    %88 = vector.load %arg12[%c0_84, %c0_85, %c0_86, %c0_87] : memref<1x16x16x128xbf16, #tpu.memory_space<vmem>>, vector<1x16x16x128xbf16>
    %89 = vector.shape_cast %88 : vector<1x16x16x128xbf16> to vector<16x16x128xbf16>
    %90 = vector.shape_cast %87 : vector<16x16x128xbf16> to vector<1x16x16x128xbf16>
    tpu.vector_store %arg12[%c0_84, %c0_85, %c0_86, %c0_87], %90 {strides = array<i32>} : memref<1x16x16x128xbf16, #tpu.memory_space<vmem>>, vector<1x16x16x128xbf16>,
    return
  }
  func.func @transform_0(%arg0: i32) -> (i32, i32, i32, i32) {
    %c0_i32 = arith.constant 0 : i32
    %c0_i32_0 = arith.constant 0 : i32
    %c0_i32_1 = arith.constant 0 : i32
    %c0_i32_2 = arith.constant 0 : i32
    return %arg0, %c0_i32, %c0_i32_0, %c0_i32_1 : i32, i32, i32, i32
  }
  func.func @transform_1(%arg0: i32) -> (i32, i32) {
    %c0_i32 = arith.constant 0 : i32
    %c0_i32_0 = arith.constant 0 : i32
    %c0_i32_1 = arith.constant 0 : i32
    return %c0_i32, %c0_i32_0 : i32, i32
  }
  func.func @transform_2(%arg0: i32) -> (i32, i32) {
    %c0_i32 = arith.constant 0 : i32
    %c0_i32_0 = arith.constant 0 : i32
    %c0_i32_1 = arith.constant 0 : i32
    return %c0_i32, %c0_i32_0 : i32, i32
  }
  func.func @transform_3(%arg0: i32) -> (i32, i32, i32) {
    %c0_i32 = arith.constant 0 : i32
    %c0_i32_0 = arith.constant 0 : i32
    %c0_i32_1 = arith.constant 0 : i32
    %c0_i32_2 = arith.constant 0 : i32
    return %c0_i32, %c0_i32_0, %c0_i32_1 : i32, i32, i32
  }
  func.func @transform_4(%arg0: i32) -> (i32, i32) {
    %c0_i32 = arith.constant 0 : i32
    %c0_i32_0 = arith.constant 0 : i32
    %c0_i32_1 = arith.constant 0 : i32
    return %c0_i32, %c0_i32_0 : i32, i32
  }
  func.func @transform_5(%arg0: i32) -> (i32, i32) {
    %c0_i32 = arith.constant 0 : i32
    %c0_i32_0 = arith.constant 0 : i32
    %c0_i32_1 = arith.constant 0 : i32
    return %c0_i32, %c0_i32_0 : i32, i32
  }
  func.func @transform_6(%arg0: i32) -> (i32, i32) {
    %c0_i32 = arith.constant 0 : i32
    %c0_i32_0 = arith.constant 0 : i32
    %c0_i32_1 = arith.constant 0 : i32
    return %c0_i32, %c0_i32_0 : i32, i32
  }
  func.func @transform_7(%arg0: i32) -> (i32, i32) {
    %c0_i32 = arith.constant 0 : i32
    %c0_i32_0 = arith.constant 0 : i32
    %c0_i32_1 = arith.constant 0 : i32
    return %c0_i32, %c0_i32_0 : i32, i32
  }
  func.func @transform_8(%arg0: i32) -> (i32, i32) {
    %c0_i32 = arith.constant 0 : i32
    %c0_i32_0 = arith.constant 0 : i32
    %c0_i32_1 = arith.constant 0 : i32
    return %c0_i32, %c0_i32_0 : i32, i32
  }
  func.func @transform_9(%arg0: i32) -> (i32, i32) {
    %c0_i32 = arith.constant 0 : i32
    %c0_i32_0 = arith.constant 0 : i32
    %c0_i32_1 = arith.constant 0 : i32
    return %c0_i32, %c0_i32_0 : i32, i32
  }
  func.func @transform_10(%arg0: i32) -> (i32, i32) {
    %c0_i32 = arith.constant 0 : i32
    %c0_i32_0 = arith.constant 0 : i32
    %c0_i32_1 = arith.constant 0 : i32
    return %c0_i32, %c0_i32_0 : i32, i32
  }
  func.func @transform_11(%arg0: i32) -> (i32, i32, i32, i32) {
    %c0_i32 = arith.constant 0 : i32
    %c0_i32_0 = arith.constant 0 : i32
    %c0_i32_1 = arith.constant 0 : i32
    %c0_i32_2 = arith.constant 0 : i32
    return %arg0, %c0_i32, %c0_i32_0, %c0_i32_1 : i32, i32, i32, i32
  }
}

</mosaic_0001>

<llo_original>
// kernel: tpu_custom_call.1
$region0: #{tpu_custom_call.1}
  #allocation0 [shape = 'u32[]', space=smem, size = 0x4, offset = 0x4, fixed_abs, tag = 'smem constant byte address 0x4 - core index']
  #allocation1 [shape = 'u32[144,128]{1,0:T(1,128)}', space=vmem, size = 0x12000, scoped, tag = 'internal scratch']
  #allocation2 [shape = 'bf16[18,18,32]{2,1,0:T(8,128)(2,1)}', space=vmem, size = 0x1b000, scoped, tag = 'scratch operand']
  %s0 = inlined_call_operand.vmem [shape: bf16[2,16,16,64], index: 0, kind: input, shape index: {}]
  %s1 = inlined_call_operand.vmem [shape: bf16[64,32], index: 1, kind: input, shape index: {}]
  %s2 = inlined_call_operand.vmem [shape: f32[1,32], index: 2, kind: input, shape index: {}]
  %s3 = inlined_call_operand.vmem [shape: bf16[3,96,32], index: 3, kind: input, shape index: {}]
  %s4 = inlined_call_operand.vmem [shape: f32[1,32], index: 4, kind: input, shape index: {}]
  %s5 = inlined_call_operand.vmem [shape: bf16[32,128], index: 5, kind: input, shape index: {}]
  %s6 = inlined_call_operand.vmem [shape: f32[1,128], index: 6, kind: input, shape index: {}]
  %s7 = inlined_call_operand.vmem [shape: f32[128,8], index: 7, kind: input, shape index: {}]
  %s8 = inlined_call_operand.vmem [shape: f32[8,128], index: 8, kind: input, shape index: {}]
  %s9 = inlined_call_operand.vmem [shape: bf16[64,128], index: 9, kind: input, shape index: {}]
  %s10 = inlined_call_operand.vmem [shape: f32[1,128], index: 10, kind: input, shape index: {}]
  %s11 = inlined_call_operand.hbm [shape: bf16[2,16,16,128], index: 11, kind: output, shape index: {}]
  %s12 = sld [smem:[#allocation0]]
  $region77: #{tpu_custom_call.1} parent=0
    _
  %s14 = ssub.s32 1, %s12
  %s15 = scalar_select 0, %s14, %s12
  $region1: #{tpu_custom_call.1} parent=0
    #allocation3 [shape = 'u8[131072]{0}', space=vmem, size = 0x20000, scoped, tag = 'output window, operand 0']
    #allocation4 [shape = 's32[2]{0}', space=sflag, size = 0x8, scoped, tag = 'scoped memory for tpu_custom_call.1']
    %16 = vsyncpa [#allocation4], 0
    %s17 = scalar_lea.sflag [#allocation4], 1
    %18 = vsyncpa %s17, 0
    loop: start=0, step=1, limit=4
    $region2: #{tpu_custom_call.1} parent=1 // loop_pre_header
      _
    $region3: #{tpu_custom_call.1} parent=1 // loop_header
      %s20 = sphi 0, %s24
      %p21 = scmp.ge.s32.totalorder %s20, 4
      %s30 = sphi 0, %s32
      %s33 = sphi 0, %s30
      %s34 = sphi 0, %s33
      %s50 = sphi 0, %s34
      %s54 = sphi 0, %s54
      %s56 = sphi 0, %s54
      %s57 = sphi 0, %s56
      %s71 = sphi 0, %s57
      %s75 = sphi 0, %s75
      %s77 = sphi 0, %s75
      %s78 = sphi 0, %s77
      %s92 = sphi 0, %s78
      %s96 = sphi 0, %s96
      %s98 = sphi 0, %s96
      %s99 = sphi 0, %s98
      %s113 = sphi 0, %s99
      %s117 = sphi 0, %s117
      %s119 = sphi 0, %s117
      %s120 = sphi 0, %s119
      %s134 = sphi 0, %s120
      %s138 = sphi 0, %s138
      %s140 = sphi 0, %s138
      %s141 = sphi 0, %s140
      %s155 = sphi 0, %s141
      %s159 = sphi 0, %s159
      %s161 = sphi 0, %s159
      %s162 = sphi 0, %s161
      %s176 = sphi 0, %s162
      %s180 = sphi 0, %s180
      %s182 = sphi 0, %s180
      %s183 = sphi 0, %s182
      %s197 = sphi 0, %s183
      %s201 = sphi 0, %s201
      %s203 = sphi 0, %s201
      %s204 = sphi 0, %s203
      %s218 = sphi 0, %s204
      %s222 = sphi 0, %s222
      %s224 = sphi 0, %s222
      %s225 = sphi 0, %s224
      %s239 = sphi 0, %s225
      %s243 = sphi 0, %s243
      %s245 = sphi 0, %s243
      %s246 = sphi 0, %s245
      %s260 = sphi 0, %s246
      %s266 = sphi 0, %s268
      %s269 = sphi 0, %s266
      %s270 = sphi 0, %s269
      %s286 = sphi 0, %s270
    $region4: #{tpu_custom_call.1} parent=1 // loop_header_branch
      %23 = sbr.rel (%p21) target = $region8
    $region5: #{tpu_custom_call.1} parent=1 // loop_body
      %s25 = ssub.s32 %s20, 1
      %s26 = ssub.s32 %s20, 2
      %s27 = sadd.s32 %s20, 1
      %s28 = ssub.s32 %s20, %s27
      %p29 = scmp.eq.s32.totalorder %s28, 0
      %s31 = sadd.s32 %s30, 1
      %s32 = scalar_select %p29, %s30, %s31
      %p35 = pneg %p29
      %p36 = scmp.eq.s32.totalorder %s20, 1
      %p37 = por %p35, %p36
      %p38 = scmp.ne.s32.totalorder %s30, %s33
      %p39 = scmp.eq.s32.totalorder %s20, 0
      %p40 = por %p38, %p39
      %p41 = scmp.ne.s32.totalorder %s30, %s33
      %p42 = scmp.eq.s32.totalorder %s25, 1
      %p43 = por %p41, %p42
      %p44 = scmp.ne.s32.totalorder %s33, %s34
      %p45 = scmp.eq.s32.totalorder %s25, 0
      %p46 = por %p44, %p45
      %p47 = scmp.ne.s32.totalorder %s33, %s34
      %p48 = scmp.eq.s32.totalorder %s26, 1
      %p49 = por %p47, %p48
      %p51 = scmp.ne.s32.totalorder %s34, %s50
      %p52 = scmp.eq.s32.totalorder %s26, 0
      %p53 = por %p51, %p52
      %s55 = sadd.s32 %s54, 1
      %p58 = scmp.eq.s32.totalorder %s20, 1
      %p59 = scmp.ne.s32.totalorder %s54, %s56
      %p60 = scmp.eq.s32.totalorder %s20, 0
      %p61 = por %p59, %p60
      %p62 = scmp.ne.s32.totalorder %s54, %s56
      %p63 = scmp.eq.s32.totalorder %s25, 1
      %p64 = por %p62, %p63
      %p65 = scmp.ne.s32.totalorder %s56, %s57
      %p66 = scmp.eq.s32.totalorder %s25, 0
      %p67 = por %p65, %p66
      %p68 = scmp.ne.s32.totalorder %s56, %s57
      %p69 = scmp.eq.s32.totalorder %s26, 1
      %p70 = por %p68, %p69
      %p72 = scmp.ne.s32.totalorder %s57, %s71
      %p73 = scmp.eq.s32.totalorder %s26, 0
      %p74 = por %p72, %p73
      %s76 = sadd.s32 %s75, 1
      %p79 = scmp.eq.s32.totalorder %s20, 1
      %p80 = scmp.ne.s32.totalorder %s75, %s77
      %p81 = scmp.eq.s32.totalorder %s20, 0
      %p82 = por %p80, %p81
      %p83 = scmp.ne.s32.totalorder %s75, %s77
      %p84 = scmp.eq.s32.totalorder %s25, 1
      %p85 = por %p83, %p84
      %p86 = scmp.ne.s32.totalorder %s77, %s78
      %p87 = scmp.eq.s32.totalorder %s25, 0
      %p88 = por %p86, %p87
      %p89 = scmp.ne.s32.totalorder %s77, %s78
      %p90 = scmp.eq.s32.totalorder %s26, 1
      %p91 = por %p89, %p90
      %p93 = scmp.ne.s32.totalorder %s78, %s92
      %p94 = scmp.eq.s32.totalorder %s26, 0
      %p95 = por %p93, %p94
      %s97 = sadd.s32 %s96, 1
      %p100 = scmp.eq.s32.totalorder %s20, 1
      %p101 = scmp.ne.s32.totalorder %s96, %s98
      %p102 = scmp.eq.s32.totalorder %s20, 0
      %p103 = por %p101, %p102
      %p104 = scmp.ne.s32.totalorder %s96, %s98
      %p105 = scmp.eq.s32.totalorder %s25, 1
      %p106 = por %p104, %p105
      %p107 = scmp.ne.s32.totalorder %s98, %s99
      %p108 = scmp.eq.s32.totalorder %s25, 0
      %p109 = por %p107, %p108
      %p110 = scmp.ne.s32.totalorder %s98, %s99
      %p111 = scmp.eq.s32.totalorder %s26, 1
      %p112 = por %p110, %p111
      %p114 = scmp.ne.s32.totalorder %s99, %s113
      %p115 = scmp.eq.s32.totalorder %s26, 0
      %p116 = por %p114, %p115
      %s118 = sadd.s32 %s117, 1
      %p121 = scmp.eq.s32.totalorder %s20, 1
      %p122 = scmp.ne.s32.totalorder %s117, %s119
      %p123 = scmp.eq.s32.totalorder %s20, 0
      %p124 = por %p122, %p123
      %p125 = scmp.ne.s32.totalorder %s117, %s119
      %p126 = scmp.eq.s32.totalorder %s25, 1
      %p127 = por %p125, %p126
      %p128 = scmp.ne.s32.totalorder %s119, %s120
      %p129 = scmp.eq.s32.totalorder %s25, 0
      %p130 = por %p128, %p129
      %p131 = scmp.ne.s32.totalorder %s119, %s120
      %p132 = scmp.eq.s32.totalorder %s26, 1
      %p133 = por %p131, %p132
      %p135 = scmp.ne.s32.totalorder %s120, %s134
      %p136 = scmp.eq.s32.totalorder %s26, 0
      %p137 = por %p135, %p136
      %s139 = sadd.s32 %s138, 1
      %p142 = scmp.eq.s32.totalorder %s20, 1
      %p143 = scmp.ne.s32.totalorder %s138, %s140
      %p144 = scmp.eq.s32.totalorder %s20, 0
      %p145 = por %p143, %p144
      %p146 = scmp.ne.s32.totalorder %s138, %s140
      %p147 = scmp.eq.s32.totalorder %s25, 1
      %p148 = por %p146, %p147
      %p149 = scmp.ne.s32.totalorder %s140, %s141
      %p150 = scmp.eq.s32.totalorder %s25, 0
      %p151 = por %p149, %p150
      %p152 = scmp.ne.s32.totalorder %s140, %s141
      %p153 = scmp.eq.s32.totalorder %s26, 1
      %p154 = por %p152, %p153
      %p156 = scmp.ne.s32.totalorder %s141, %s155
      %p157 = scmp.eq.s32.totalorder %s26, 0
      %p158 = por %p156, %p157
      %s160 = sadd.s32 %s159, 1
      %p163 = scmp.eq.s32.totalorder %s20, 1
      %p164 = scmp.ne.s32.totalorder %s159, %s161
      %p165 = scmp.eq.s32.totalorder %s20, 0
      %p166 = por %p164, %p165
      %p167 = scmp.ne.s32.totalorder %s159, %s161
      %p168 = scmp.eq.s32.totalorder %s25, 1
      %p169 = por %p167, %p168
      %p170 = scmp.ne.s32.totalorder %s161, %s162
      %p171 = scmp.eq.s32.totalorder %s25, 0
      %p172 = por %p170, %p171
      %p173 = scmp.ne.s32.totalorder %s161, %s162
      %p174 = scmp.eq.s32.totalorder %s26, 1
      %p175 = por %p173, %p174
      %p177 = scmp.ne.s32.totalorder %s162, %s176
      %p178 = scmp.eq.s32.totalorder %s26, 0
      %p179 = por %p177, %p178
      %s181 = sadd.s32 %s180, 1
      %p184 = scmp.eq.s32.totalorder %s20, 1
      %p185 = scmp.ne.s32.totalorder %s180, %s182
      %p186 = scmp.eq.s32.totalorder %s20, 0
      %p187 = por %p185, %p186
      %p188 = scmp.ne.s32.totalorder %s180, %s182
      %p189 = scmp.eq.s32.totalorder %s25, 1
      %p190 = por %p188, %p189
      %p191 = scmp.ne.s32.totalorder %s182, %s183
      %p192 = scmp.eq.s32.totalorder %s25, 0
      %p193 = por %p191, %p192
      %p194 = scmp.ne.s32.totalorder %s182, %s183
      %p195 = scmp.eq.s32.totalorder %s26, 1
      %p196 = por %p194, %p195
      %p198 = scmp.ne.s32.totalorder %s183, %s197
      %p199 = scmp.eq.s32.totalorder %s26, 0
      %p200 = por %p198, %p199
      %s202 = sadd.s32 %s201, 1
      %p205 = scmp.eq.s32.totalorder %s20, 1
      %p206 = scmp.ne.s32.totalorder %s201, %s203
      %p207 = scmp.eq.s32.totalorder %s20, 0
      %p208 = por %p206, %p207
      %p209 = scmp.ne.s32.totalorder %s201, %s203
      %p210 = scmp.eq.s32.totalorder %s25, 1
      %p211 = por %p209, %p210
      %p212 = scmp.ne.s32.totalorder %s203, %s204
      %p213 = scmp.eq.s32.totalorder %s25, 0
      %p214 = por %p212, %p213
      %p215 = scmp.ne.s32.totalorder %s203, %s204
      %p216 = scmp.eq.s32.totalorder %s26, 1
      %p217 = por %p215, %p216
      %p219 = scmp.ne.s32.totalorder %s204, %s218
      %p220 = scmp.eq.s32.totalorder %s26, 0
      %p221 = por %p219, %p220
      %s223 = sadd.s32 %s222, 1
      %p226 = scmp.eq.s32.totalorder %s20, 1
      %p227 = scmp.ne.s32.totalorder %s222, %s224
      %p228 = scmp.eq.s32.totalorder %s20, 0
      %p229 = por %p227, %p228
      %p230 = scmp.ne.s32.totalorder %s222, %s224
      %p231 = scmp.eq.s32.totalorder %s25, 1
      %p232 = por %p230, %p231
      %p233 = scmp.ne.s32.totalorder %s224, %s225
      %p234 = scmp.eq.s32.totalorder %s25, 0
      %p235 = por %p233, %p234
      %p236 = scmp.ne.s32.totalorder %s224, %s225
      %p237 = scmp.eq.s32.totalorder %s26, 1
      %p238 = por %p236, %p237
      %p240 = scmp.ne.s32.totalorder %s225, %s239
      %p241 = scmp.eq.s32.totalorder %s26, 0
      %p242 = por %p240, %p241
      %s244 = sadd.s32 %s243, 1
      %p247 = scmp.eq.s32.totalorder %s20, 1
      %p248 = scmp.ne.s32.totalorder %s243, %s245
      %p249 = scmp.eq.s32.totalorder %s20, 0
      %p250 = por %p248, %p249
      %p251 = scmp.ne.s32.totalorder %s243, %s245
      %p252 = scmp.eq.s32.totalorder %s25, 1
      %p253 = por %p251, %p252
      %p254 = scmp.ne.s32.totalorder %s245, %s246
      %p255 = scmp.eq.s32.totalorder %s25, 0
      %p256 = por %p254, %p255
      %p257 = scmp.ne.s32.totalorder %s245, %s246
      %p258 = scmp.eq.s32.totalorder %s26, 1
      %p259 = por %p257, %p258
      %p261 = scmp.ne.s32.totalorder %s246, %s260
      %p262 = scmp.eq.s32.totalorder %s26, 0
      %p263 = por %p261, %p262
      %s264 = ssub.s32 %s20, %s27
      %p265 = scmp.eq.s32.totalorder %s264, 0
      %s267 = sadd.s32 %s266, 1
      %s268 = scalar_select %p265, %s266, %s267
      %p271 = pneg %p265
      %p272 = scmp.eq.s32.totalorder %s20, 1
      %p273 = por %p271, %p272
      %p274 = scmp.ne.s32.totalorder %s266, %s269
      %p275 = scmp.eq.s32.totalorder %s20, 0
      %p276 = por %p274, %p275
      %p277 = scmp.ne.s32.totalorder %s266, %s269
      %p278 = scmp.eq.s32.totalorder %s25, 1
      %p279 = por %p277, %p278
      %p280 = scmp.ne.s32.totalorder %s269, %s270
      %p281 = scmp.eq.s32.totalorder %s25, 0
      %p282 = por %p280, %p281
      %p283 = scmp.ne.s32.totalorder %s269, %s270
      %p284 = scmp.eq.s32.totalorder %s26, 1
      %p285 = por %p283, %p284
      %p287 = scmp.ne.s32.totalorder %s270, %s286
      %p288 = scmp.eq.s32.totalorder %s26, 0
      %p289 = por %p287, %p288
      %p290 = scmp.le.s32.totalorder 1, %s20
      %p291 = scmp.lt.s32.totalorder %s20, 3
      %p292 = pnand %p290, %p291
      %p293 = pneg %p292
      // Predicated region
      $region9: #{tpu_custom_call.1} parent=5 // pred_check
        _
      $region10: #{tpu_custom_call.1} parent=5 // pred_check_branch
        %295 = sbr.rel (%p292) target = $region12
      $region11: #{tpu_custom_call.1} parent=5 // pred_region
        %s296 = ssub.s32 %s20, 1
        // Predicated region
        $region13: #{tpu_custom_call.1} parent=11 // pred_check
          %p297 = pneg %p67
        $region14: #{tpu_custom_call.1} parent=11 // pred_check_branch
          %299 = sbr.rel (%p297) target = $region16
        $region15: #{tpu_custom_call.1} parent=11 // pred_region
          _
        $region16: #{tpu_custom_call.1} parent=11 // pred_fallthru
          _
        // Predicated region
        $region17: #{tpu_custom_call.1} parent=11 // pred_check
          %p300 = pneg %p88
        $region18: #{tpu_custom_call.1} parent=11 // pred_check_branch
          %302 = sbr.rel (%p300) target = $region20
        $region19: #{tpu_custom_call.1} parent=11 // pred_region
          _
        $region20: #{tpu_custom_call.1} parent=11 // pred_fallthru
          _
        // Predicated region
        $region21: #{tpu_custom_call.1} parent=11 // pred_check
          %p303 = pneg %p109
        $region22: #{tpu_custom_call.1} parent=11 // pred_check_branch
          %305 = sbr.rel (%p303) target = $region24
        $region23: #{tpu_custom_call.1} parent=11 // pred_region
          _
        $region24: #{tpu_custom_call.1} parent=11 // pred_fallthru
          _
        // Predicated region
        $region25: #{tpu_custom_call.1} parent=11 // pred_check
          %p306 = pneg %p130
        $region26: #{tpu_custom_call.1} parent=11 // pred_check_branch
          %308 = sbr.rel (%p306) target = $region28
        $region27: #{tpu_custom_call.1} parent=11 // pred_region
          _
        $region28: #{tpu_custom_call.1} parent=11 // pred_fallthru
          _
        // Predicated region
        $region29: #{tpu_custom_call.1} parent=11 // pred_check
          %p309 = pneg %p151
        $region30: #{tpu_custom_call.1} parent=11 // pred_check_branch
          %311 = sbr.rel (%p309) target = $region32
        $region31: #{tpu_custom_call.1} parent=11 // pred_region
          _
        $region32: #{tpu_custom_call.1} parent=11 // pred_fallthru
          _
        // Predicated region
        $region33: #{tpu_custom_call.1} parent=11 // pred_check
          %p312 = pneg %p172
        $region34: #{tpu_custom_call.1} parent=11 // pred_check_branch
          %314 = sbr.rel (%p312) target = $region36
        $region35: #{tpu_custom_call.1} parent=11 // pred_region
          _
        $region36: #{tpu_custom_call.1} parent=11 // pred_fallthru
          _
        // Predicated region
        $region37: #{tpu_custom_call.1} parent=11 // pred_check
          %p315 = pneg %p193
        $region38: #{tpu_custom_call.1} parent=11 // pred_check_branch
          %317 = sbr.rel (%p315) target = $region40
        $region39: #{tpu_custom_call.1} parent=11 // pred_region
          _
        $region40: #{tpu_custom_call.1} parent=11 // pred_fallthru
          _
        // Predicated region
        $region41: #{tpu_custom_call.1} parent=11 // pred_check
          %p318 = pneg %p214
        $region42: #{tpu_custom_call.1} parent=11 // pred_check_branch
          %320 = sbr.rel (%p318) target = $region44
        $region43: #{tpu_custom_call.1} parent=11 // pred_region
          _
        $region44: #{tpu_custom_call.1} parent=11 // pred_fallthru
          _
        // Predicated region
        $region45: #{tpu_custom_call.1} parent=11 // pred_check
          %p321 = pneg %p235
        $region46: #{tpu_custom_call.1} parent=11 // pred_check_branch
          %323 = sbr.rel (%p321) target = $region48
        $region47: #{tpu_custom_call.1} parent=11 // pred_region
          _
        $region48: #{tpu_custom_call.1} parent=11 // pred_fallthru
          _
        // Predicated region
        $region49: #{tpu_custom_call.1} parent=11 // pred_check
          %p324 = pneg %p256
        $region50: #{tpu_custom_call.1} parent=11 // pred_check_branch
          %326 = sbr.rel (%p324) target = $region52
        $region51: #{tpu_custom_call.1} parent=11 // pred_region
          _
        $region52: #{tpu_custom_call.1} parent=11 // pred_fallthru
          _
      $region12: #{tpu_custom_call.1} parent=5 // pred_fallthru
        _
      %p327 = scmp.lt.s32.totalorder %s20, 2
      // Predicated region
      $region53: #{tpu_custom_call.1} parent=5 // pred_check
        %p328 = pneg %p327
      $region54: #{tpu_custom_call.1} parent=5 // pred_check_branch
        %330 = sbr.rel (%p328) target = $region56
      $region55: #{tpu_custom_call.1} parent=5 // pred_region
        // Predicated region
        $region57: #{tpu_custom_call.1} parent=55 // pred_check
          %p331 = pneg %p40
        $region58: #{tpu_custom_call.1} parent=55 // pred_check_branch
          %333 = sbr.rel (%p331) target = $region60
        $region59: #{tpu_custom_call.1} parent=55 // pred_region
          %p334 = scmp.lt.s32.totalorder %s20, 1
          %s335 = scalar_select %p334, %s20, 1
          %s336 = smul.addr %s335, 32
          %s337 = smul.addr %s336, 4
          %s338 = scalar_lea.vmem %s0, %s337
        $region60: #{tpu_custom_call.1} parent=55 // pred_fallthru
          _
      $region56: #{tpu_custom_call.1} parent=5 // pred_fallthru
        _
      %p339 = scmp.le.s32.totalorder 1, %s20
      %p340 = scmp.lt.s32.totalorder %s20, 3
      %p341 = pnand %p339, %p340
      %p342 = pneg %p341
      // Predicated region
      $region61: #{tpu_custom_call.1} parent=5 // pred_check
        _
      $region62: #{tpu_custom_call.1} parent=5 // pred_check_branch
        %344 = sbr.rel (%p341) target = $region64
      $region63: #{tpu_custom_call.1} parent=5 // pred_region
        %s345 = ssub.s32 %s20, 1
        %p346 = scmp.lt.s32.totalorder %s25, 1
        %s347 = scalar_select %p346, %s25, 1
        %s348 = smul.addr %s347, 32
        %s349 = smul.addr %s348, 4
        %s350 = scalar_lea.vmem %s0, %s349
        %p351 = pneg %p46
        %p352 = pneg %p43
        %p353 = pneg %p67
        %p354 = pneg %p64
        %p355 = pneg %p88
        %p356 = pneg %p85
        %p357 = pneg %p109
        %p358 = pneg %p106
        %p359 = pneg %p130
        %p360 = pneg %p127
        %p361 = pneg %p151
        %p362 = pneg %p148
        %p363 = pneg %p172
        %p364 = pneg %p169
        %p365 = pneg %p193
        %p366 = pneg %p190
        %p367 = pneg %p214
        %p368 = pneg %p211
        %p369 = pneg %p235
        %p370 = pneg %p232
        %p371 = pneg %p256
        %p372 = pneg %p253
        %p373 = pneg %p282
        %p374 = pneg %p279
        %s375 = sand.u32 %s269, 1
        %s376 = scalar_lea.sflag [#allocation4], %s375
        %s377 = sand.u32 %s269, 1
        %s378 = smul.addr %s377, 128
        %s379 = scalar_lea.vmem [#allocation3], %s378
        %p380 = scmp.lt.s32.totalorder %s25, 1
        %s381 = scalar_select %p380, %s25, 1
        %s382 = smul.addr %s381, 32
        %s383 = smul.addr %s382, 4
        %s384 = scalar_lea.vmem %s0, %s383
        %v386 = vld [vmem:[%s384] sm:$0xf]
        %v387 = vld [vmem:[%s384 + $0x4] sm:$0xf]
        %v388 = vld [vmem:[%s384 + $0x8] sm:$0xf]
        %v389 = vld [vmem:[%s384 + $0xc] sm:$0xf]
        %v390 = vld [vmem:[%s384 + $0x10] sm:$0xf]
        %v391 = vld [vmem:[%s384 + $0x14] sm:$0xf]
        %v392 = vld [vmem:[%s384 + $0x18] sm:$0xf]
        %v393 = vld [vmem:[%s384 + $0x1c] sm:$0xf]
        %v394 = vld [vmem:[%s384 + $0x20] sm:$0xf]
        %v395 = vld [vmem:[%s384 + $0x24] sm:$0xf]
        %v396 = vld [vmem:[%s384 + $0x28] sm:$0xf]
        %v397 = vld [vmem:[%s384 + $0x2c] sm:$0xf]
        %v398 = vld [vmem:[%s384 + $0x30] sm:$0xf]
        %v399 = vld [vmem:[%s384 + $0x34] sm:$0xf]
        %v400 = vld [vmem:[%s384 + $0x38] sm:$0xf]
        %v401 = vld [vmem:[%s384 + $0x3c] sm:$0xf]
        %v402 = vld [vmem:[%s384 + $0x40] sm:$0xf]
        %v403 = vld [vmem:[%s384 + $0x44] sm:$0xf]
        %v404 = vld [vmem:[%s384 + $0x48] sm:$0xf]
        %v405 = vld [vmem:[%s384 + $0x4c] sm:$0xf]
        %v406 = vld [vmem:[%s384 + $0x50] sm:$0xf]
        %v407 = vld [vmem:[%s384 + $0x54] sm:$0xf]
        %v408 = vld [vmem:[%s384 + $0x58] sm:$0xf]
        %v409 = vld [vmem:[%s384 + $0x5c] sm:$0xf]
        %v410 = vld [vmem:[%s384 + $0x60] sm:$0xf]
        %v411 = vld [vmem:[%s384 + $0x64] sm:$0xf]
        %v412 = vld [vmem:[%s384 + $0x68] sm:$0xf]
        %v413 = vld [vmem:[%s384 + $0x6c] sm:$0xf]
        %v414 = vld [vmem:[%s384 + $0x70] sm:$0xf]
        %v415 = vld [vmem:[%s384 + $0x74] sm:$0xf]
        %v416 = vld [vmem:[%s384 + $0x78] sm:$0xf]
        %v417 = vld [vmem:[%s384 + $0x7c] sm:$0xf]
        %v418 = vld [vmem:[%s1] sm:$0xf]
        %v419 = vld [vmem:[%s1 + $0x4] sm:$0xf]
        %v420 = vld [vmem:[%s1 + $0x8] sm:$0xf]
        %v421 = vld [vmem:[%s1 + $0xc] sm:$0xf]
        %v422 = vld [vmem:[%s1 + $0x10] sm:$0xf]
        %v423 = vld [vmem:[%s1 + $0x14] sm:$0xf]
        %v424 = vld [vmem:[%s1 + $0x18] sm:$0xf]
        %v425 = vld [vmem:[%s1 + $0x1c] sm:$0xf]
        %v426 = vld [vmem:[%s2] sm:$0x1]
        %v428 = vlaneseq
        %v429 = vshrl.u32 %v428, 7
        %v430 = vsub.s32 0, %v429
        %v431 = vrot.slane %v426, %v430
        %v465 = vunpack.c.l.b16 %v386
        %v466 = vunpack.c.l.b16 %v387
        %v467 = vunpack.c.l.b16 %v388
        %v468 = vunpack.c.l.b16 %v389
        %v469 = vunpack.c.l.b16 %v390
        %v470 = vunpack.c.l.b16 %v391
        %v471 = vunpack.c.l.b16 %v392
        %v472 = vunpack.c.l.b16 %v393
        %v473 = vunpack.c.l.b16 %v394
        %v474 = vunpack.c.l.b16 %v395
        %v475 = vunpack.c.l.b16 %v396
        %v476 = vunpack.c.l.b16 %v397
        %v477 = vunpack.c.l.b16 %v398
        %v478 = vunpack.c.l.b16 %v399
        %v479 = vunpack.c.l.b16 %v400
        %v480 = vunpack.c.l.b16 %v401
        %v481 = vunpack.c.l.b16 %v402
        %v482 = vunpack.c.l.b16 %v403
        %v483 = vunpack.c.l.b16 %v404
        %v484 = vunpack.c.l.b16 %v405
        %v485 = vunpack.c.l.b16 %v406
        %v486 = vunpack.c.l.b16 %v407
        %v487 = vunpack.c.l.b16 %v408
        %v488 = vunpack.c.l.b16 %v409
        %v489 = vunpack.c.l.b16 %v410
        %v490 = vunpack.c.l.b16 %v411
        %v491 = vunpack.c.l.b16 %v412
        %v492 = vunpack.c.l.b16 %v413
        %v493 = vunpack.c.l.b16 %v414
        %v494 = vunpack.c.l.b16 %v415
        %v495 = vunpack.c.l.b16 %v416
        %v496 = vunpack.c.l.b16 %v417
        %v497 = vpack.c.b16 %v466, %v465
        %v498 = vpack.c.b16 %v468, %v467
        %v499 = vpack.c.b16 %v470, %v469
        %v500 = vpack.c.b16 %v472, %v471
        %v501 = vpack.c.b16 %v474, %v473
        %v502 = vpack.c.b16 %v476, %v475
        %v503 = vpack.c.b16 %v478, %v477
        %v504 = vpack.c.b16 %v480, %v479
        %v505 = vpack.c.b16 %v482, %v481
        %v506 = vpack.c.b16 %v484, %v483
        %v507 = vpack.c.b16 %v486, %v485
        %v508 = vpack.c.b16 %v488, %v487
        %v509 = vpack.c.b16 %v490, %v489
        %v510 = vpack.c.b16 %v492, %v491
        %v511 = vpack.c.b16 %v494, %v493
        %v512 = vpack.c.b16 %v496, %v495
        %v521 = vunpack.c.l.b16 %v418
        %v522 = vunpack.c.l.b16 %v419
        %v523 = vunpack.c.l.b16 %v420
        %v524 = vunpack.c.l.b16 %v421
        %v525 = vunpack.c.l.b16 %v422
        %v526 = vunpack.c.l.b16 %v423
        %v527 = vunpack.c.l.b16 %v424
        %v528 = vunpack.c.l.b16 %v425
        %v529 = vpack.c.b16 %v522, %v521
        %v530 = vpack.c.b16 %v524, %v523
        %v531 = vpack.c.b16 %v526, %v525
        %v532 = vpack.c.b16 %v528, %v527
        %vm537 = vcmask 523264
        %v539 = vsel %vm537, %v497, 0
        %v542 = vsel %vm537, %v498, 0
        %v545 = vsel %vm537, %v499, 0
        %v548 = vsel %vm537, %v500, 0
        %v551 = vsel %vm537, %v501, 0
        %v554 = vsel %vm537, %v502, 0
        %v557 = vsel %vm537, %v503, 0
        %v560 = vsel %vm537, %v504, 0
        %v563 = vsel %vm537, %v505, 0
        %v566 = vsel %vm537, %v506, 0
        %v569 = vsel %vm537, %v507, 0
        %v572 = vsel %vm537, %v508, 0
        %v575 = vsel %vm537, %v509, 0
        %v578 = vsel %vm537, %v510, 0
        %v581 = vsel %vm537, %v511, 0
        %v584 = vsel %vm537, %v512, 0
        %586 = vmatprep.subr.bf16.mxu0 0
        %587 = vmatpush1.bf16.msra.mxu0 %v529
        %588 = vmatprep.subr.bf16.mxu0 0
        %589 = vmatpush1.bf16.msra.mxu0 %v530
        %590 = vmatprep.subr.bf16.mxu0 0
        %591 = vmatpush1.bf16.msra.mxu0 %v531
        %592 = vmatprep.subr.bf16.mxu0 0
        %593 = vmatpush1.bf16.msra.mxu0 %v532
        %594 = vmatprep.subr.bf16.mxu0 0
        %595 = vmatpush1.bf16.msra.mxu0 0
        %596 = vmatprep.subr.bf16.mxu0 0
        %597 = vmatpush1.bf16.msra.mxu0 0
        %598 = vmatprep.subr.bf16.mxu0 0
        %599 = vmatpush1.bf16.msra.mxu0 0
        %600 = vmatprep.subr.bf16.mxu0 0
        %601 = vmatpush1.bf16.msra.mxu0 0
        %602 = vmatprep.subr.bf16.mxu0 0
        %603 = vmatpush1.bf16.msra.mxu0 0
        %604 = vmatprep.subr.bf16.mxu0 0
        %605 = vmatpush1.bf16.msra.mxu0 0
        %606 = vmatprep.subr.bf16.mxu0 0
        %607 = vmatpush1.bf16.msra.mxu0 0
        %608 = vmatprep.subr.bf16.mxu0 0
        %609 = vmatpush1.bf16.msra.mxu0 0
        %610 = vmatprep.subr.bf16.mxu0 0
        %611 = vmatpush1.bf16.msra.mxu0 0
        %612 = vmatprep.subr.bf16.mxu0 0
        %613 = vmatpush1.bf16.msra.mxu0 0
        %614 = vmatprep.subr.bf16.mxu0 0
        %615 = vmatpush1.bf16.msra.mxu0 0
        %616 = vmatprep.subr.bf16.mxu0 0
        %617 = vmatpush1.bf16.msra.mxu0 0
        %618 = vmatprep.mubr.bf16.mxu0 0
        %619 = vmatmul.mubr.bf16.gmra.mrb[0].mxu0 %v539
        %v620 = vpop.f32.mrb[0].mxu0
        %v621 = vadd.f32 %v431, %v620
        %v622 = vpop.f32.mrb[0].mxu0
        %v623 = vpop.f32.mrb[0].mxu0
        %v624 = vadd.f32 %v431, %v623
        %v625 = vpop.f32.mrb[0].mxu0
        %626 = vmatprep.mubr.bf16.mxu0 0
        %627 = vmatmul.mubr.bf16.gmra.mrb[0].mxu0 %v542
        %v628 = vpop.f32.mrb[0].mxu0
        %v629 = vadd.f32 %v431, %v628
        %v630 = vpop.f32.mrb[0].mxu0
        %v631 = vpop.f32.mrb[0].mxu0
        %v632 = vadd.f32 %v431, %v631
        %v633 = vpop.f32.mrb[0].mxu0
        %634 = vmatprep.mubr.bf16.mxu0 0
        %635 = vmatmul.mubr.bf16.gmra.mrb[0].mxu0 %v545
        %v636 = vpop.f32.mrb[0].mxu0
        %v637 = vadd.f32 %v431, %v636
        %v638 = vpop.f32.mrb[0].mxu0
        %v639 = vpop.f32.mrb[0].mxu0
        %v640 = vadd.f32 %v431, %v639
        %v641 = vpop.f32.mrb[0].mxu0
        %642 = vmatprep.mubr.bf16.mxu0 0
        %643 = vmatmul.mubr.bf16.gmra.mrb[0].mxu0 %v548
        %v644 = vpop.f32.mrb[0].mxu0
        %v645 = vadd.f32 %v431, %v644
        %v646 = vpop.f32.mrb[0].mxu0
        %v647 = vpop.f32.mrb[0].mxu0
        %v648 = vadd.f32 %v431, %v647
        %v649 = vpop.f32.mrb[0].mxu0
        %650 = vmatprep.mubr.bf16.mxu0 0
        %651 = vmatmul.mubr.bf16.gmra.mrb[0].mxu0 %v551
        %v652 = vpop.f32.mrb[0].mxu0
        %v653 = vadd.f32 %v431, %v652
        %v654 = vpop.f32.mrb[0].mxu0
        %v655 = vpop.f32.mrb[0].mxu0
        %v656 = vadd.f32 %v431, %v655
        %v657 = vpop.f32.mrb[0].mxu0
        %658 = vmatprep.mubr.bf16.mxu0 0
        %659 = vmatmul.mubr.bf16.gmra.mrb[0].mxu0 %v554
        %v660 = vpop.f32.mrb[0].mxu0
        %v661 = vadd.f32 %v431, %v660
        %v662 = vpop.f32.mrb[0].mxu0
        %v663 = vpop.f32.mrb[0].mxu0
        %v664 = vadd.f32 %v431, %v663
        %v665 = vpop.f32.mrb[0].mxu0
        %666 = vmatprep.mubr.bf16.mxu0 0
        %667 = vmatmul.mubr.bf16.gmra.mrb[0].mxu0 %v557
        %v668 = vpop.f32.mrb[0].mxu0
        %v669 = vadd.f32 %v431, %v668
        %v670 = vpop.f32.mrb[0].mxu0
        %v671 = vpop.f32.mrb[0].mxu0
        %v672 = vadd.f32 %v431, %v671
        %v673 = vpop.f32.mrb[0].mxu0
        %674 = vmatprep.mubr.bf16.mxu0 0
        %675 = vmatmul.mubr.bf16.gmra.mrb[0].mxu0 %v560
        %v676 = vpop.f32.mrb[0].mxu0
        %v677 = vadd.f32 %v431, %v676
        %v678 = vpop.f32.mrb[0].mxu0
        %v679 = vpop.f32.mrb[0].mxu0
        %v680 = vadd.f32 %v431, %v679
        %v681 = vpop.f32.mrb[0].mxu0
        %682 = vmatprep.mubr.bf16.mxu0 0
        %683 = vmatmul.mubr.bf16.gmra.mrb[0].mxu0 %v563
        %v684 = vpop.f32.mrb[0].mxu0
        %v685 = vadd.f32 %v431, %v684
        %v686 = vpop.f32.mrb[0].mxu0
        %v687 = vpop.f32.mrb[0].mxu0
        %v688 = vadd.f32 %v431, %v687
        %v689 = vpop.f32.mrb[0].mxu0
        %690 = vmatprep.mubr.bf16.mxu0 0
        %691 = vmatmul.mubr.bf16.gmra.mrb[0].mxu0 %v566
        %v692 = vpop.f32.mrb[0].mxu0
        %v693 = vadd.f32 %v431, %v692
        %v694 = vpop.f32.mrb[0].mxu0
        %v695 = vpop.f32.mrb[0].mxu0
        %v696 = vadd.f32 %v431, %v695
        %v697 = vpop.f32.mrb[0].mxu0
        %698 = vmatprep.mubr.bf16.mxu0 0
        %699 = vmatmul.mubr.bf16.gmra.mrb[0].mxu0 %v569
        %v700 = vpop.f32.mrb[0].mxu0
        %v701 = vadd.f32 %v431, %v700
        %v702 = vpop.f32.mrb[0].mxu0
        %v703 = vpop.f32.mrb[0].mxu0
        %v704 = vadd.f32 %v431, %v703
        %v705 = vpop.f32.mrb[0].mxu0
        %706 = vmatprep.mubr.bf16.mxu0 0
        %707 = vmatmul.mubr.bf16.gmra.mrb[0].mxu0 %v572
        %v708 = vpop.f32.mrb[0].mxu0
        %v709 = vadd.f32 %v431, %v708
        %v710 = vpop.f32.mrb[0].mxu0
        %v711 = vpop.f32.mrb[0].mxu0
        %v712 = vadd.f32 %v431, %v711
        %v713 = vpop.f32.mrb[0].mxu0
        %714 = vmatprep.mubr.bf16.mxu0 0
        %715 = vmatmul.mubr.bf16.gmra.mrb[0].mxu0 %v575
        %v716 = vpop.f32.mrb[0].mxu0
        %v717 = vadd.f32 %v431, %v716
        %v718 = vpop.f32.mrb[0].mxu0
        %v719 = vpop.f32.mrb[0].mxu0
        %v720 = vadd.f32 %v431, %v719
        %v721 = vpop.f32.mrb[0].mxu0
        %722 = vmatprep.mubr.bf16.mxu0 0
        %723 = vmatmul.mubr.bf16.gmra.mrb[0].mxu0 %v578
        %v724 = vpop.f32.mrb[0].mxu0
        %v725 = vadd.f32 %v431, %v724
        %v726 = vpop.f32.mrb[0].mxu0
        %v727 = vpop.f32.mrb[0].mxu0
        %v728 = vadd.f32 %v431, %v727
        %v729 = vpop.f32.mrb[0].mxu0
        %730 = vmatprep.mubr.bf16.mxu0 0
        %731 = vmatmul.mubr.bf16.gmra.mrb[0].mxu0 %v581
        %v732 = vpop.f32.mrb[0].mxu0
        %v733 = vadd.f32 %v431, %v732
        %v734 = vpop.f32.mrb[0].mxu0
        %v735 = vpop.f32.mrb[0].mxu0
        %v736 = vadd.f32 %v431, %v735
        %v737 = vpop.f32.mrb[0].mxu0
        %738 = vmatprep.mubr.bf16.mxu0 0
        %739 = vmatmul.mubr.bf16.gmra.mrb[0].mxu0 %v584
        %v740 = vpop.f32.mrb[0].mxu0
        %v741 = vadd.f32 %v431, %v740
        %v742 = vpop.f32.mrb[0].mxu0
        %v743 = vpop.f32.mrb[0].mxu0
        %v744 = vadd.f32 %v431, %v743
        %v745 = vpop.f32.mrb[0].mxu0
        %746 = vdwg.mxu0
        %v747 = vmax.f32 %v621, 0.0
        %v748 = vmax.f32 %v624, 0.0
        %v749 = vmax.f32 %v629, 0.0
        %v750 = vmax.f32 %v632, 0.0
        %v751 = vmax.f32 %v637, 0.0
        %v752 = vmax.f32 %v640, 0.0
        %v753 = vmax.f32 %v645, 0.0
        %v754 = vmax.f32 %v648, 0.0
        %v755 = vmax.f32 %v653, 0.0
        %v756 = vmax.f32 %v656, 0.0
        %v757 = vmax.f32 %v661, 0.0
        %v758 = vmax.f32 %v664, 0.0
        %v759 = vmax.f32 %v669, 0.0
        %v760 = vmax.f32 %v672, 0.0
        %v761 = vmax.f32 %v677, 0.0
        %v762 = vmax.f32 %v680, 0.0
        %v763 = vmax.f32 %v685, 0.0
        %v764 = vmax.f32 %v688, 0.0
        %v765 = vmax.f32 %v693, 0.0
        %v766 = vmax.f32 %v696, 0.0
        %v767 = vmax.f32 %v701, 0.0
        %v768 = vmax.f32 %v704, 0.0
        %v769 = vmax.f32 %v709, 0.0
        %v770 = vmax.f32 %v712, 0.0
        %v771 = vmax.f32 %v717, 0.0
        %v772 = vmax.f32 %v720, 0.0
        %v773 = vmax.f32 %v725, 0.0
        %v774 = vmax.f32 %v728, 0.0
        %v775 = vmax.f32 %v733, 0.0
        %v776 = vmax.f32 %v736, 0.0
        %v777 = vmax.f32 %v741, 0.0
        %v778 = vmax.f32 %v744, 0.0
        %v779 = vpack.c.bf16 %v748, %v747
        %v780 = vpack.c.bf16 %v750, %v749
        %v781 = vpack.c.bf16 %v752, %v751
        %v782 = vpack.c.bf16 %v754, %v753
        %v783 = vpack.c.bf16 %v756, %v755
        %v784 = vpack.c.bf16 %v758, %v757
        %v785 = vpack.c.bf16 %v760, %v759
        %v786 = vpack.c.bf16 %v762, %v761
        %v787 = vpack.c.bf16 %v764, %v763
        %v788 = vpack.c.bf16 %v766, %v765
        %v789 = vpack.c.bf16 %v768, %v767
        %v790 = vpack.c.bf16 %v770, %v769
        %v791 = vpack.c.bf16 %v772, %v771
        %v792 = vpack.c.bf16 %v774, %v773
        %v793 = vpack.c.bf16 %v776, %v775
        %v794 = vpack.c.bf16 %v778, %v777
        %vm795 = vcmask 257024
        %796 = vst.msk [vmem:[#allocation2] sm:$0xf] %vm795, 0
        %797 = vst.msk [vmem:[#allocation2 + $0x4] sm:$0xf] %vm795, 0
        %vm798 = vcmask 253952
        %799 = vst.msk [vmem:[#allocation2 + $0x8] sm:$0x1] %vm798, 0
        %s800 = scalar_lea.vmem [#allocation2], 204
        %801 = vst.msk [vmem:[%s800] sm:$0xf] %vm795, 0
        %802 = vst.msk [vmem:[%s800 + $0x4] sm:$0xf] %vm795, 0
        %803 = vst.msk [vmem:[%s800 + $0x8] sm:$0x1] %vm798, 0
        %v805 = vshrl.u32 %v779, 16
        %v807 = vrot.slane %v805, 7
        %v808 = vshll.u32 %v779, 16
        %v810 = vor.u32 %v807, %v808
        %v812 = vshrl.u32 %v780, 16
        %v814 = vrot.slane %v812, 7
        %v815 = vshll.u32 %v780, 16
        %v817 = vor.u32 %v814, %v815
        %v819 = vshrl.u32 %v781, 16
        %v821 = vrot.slane %v819, 7
        %v822 = vshll.u32 %v781, 16
        %v824 = vor.u32 %v821, %v822
        %v826 = vshrl.u32 %v782, 16
        %v828 = vrot.slane %v826, 7
        %v829 = vshll.u32 %v782, 16
        %v831 = vor.u32 %v828, %v829
        %v833 = vshrl.u32 %v783, 16
        %v835 = vrot.slane %v833, 7
        %v836 = vshll.u32 %v783, 16
        %v838 = vor.u32 %v835, %v836
        %v840 = vshrl.u32 %v784, 16
        %v842 = vrot.slane %v840, 7
        %v843 = vshll.u32 %v784, 16
        %v845 = vor.u32 %v842, %v843
        %v847 = vshrl.u32 %v785, 16
        %v849 = vrot.slane %v847, 7
        %v850 = vshll.u32 %v785, 16
        %v852 = vor.u32 %v849, %v850
        %v854 = vshrl.u32 %v786, 16
        %v856 = vrot.slane %v854, 7
        %v857 = vshll.u32 %v786, 16
        %v859 = vor.u32 %v856, %v857
        %v861 = vshrl.u32 %v787, 16
        %v863 = vrot.slane %v861, 7
        %v864 = vshll.u32 %v787, 16
        %v866 = vor.u32 %v863, %v864
        %v868 = vshrl.u32 %v788, 16
        %v870 = vrot.slane %v868, 7
        %v871 = vshll.u32 %v788, 16
        %v873 = vor.u32 %v870, %v871
        %v875 = vshrl.u32 %v789, 16
        %v877 = vrot.slane %v875, 7
        %v878 = vshll.u32 %v789, 16
        %v880 = vor.u32 %v877, %v878
        %v882 = vshrl.u32 %v790, 16
        %v884 = vrot.slane %v882, 7
        %v885 = vshll.u32 %v790, 16
        %v887 = vor.u32 %v884, %v885
        %v889 = vshrl.u32 %v791, 16
        %v891 = vrot.slane %v889, 7
        %v892 = vshll.u32 %v791, 16
        %v894 = vor.u32 %v891, %v892
        %v896 = vshrl.u32 %v792, 16
        %v898 = vrot.slane %v896, 7
        %v899 = vshll.u32 %v792, 16
        %v901 = vor.u32 %v898, %v899
        %v903 = vshrl.u32 %v793, 16
        %v905 = vrot.slane %v903, 7
        %v906 = vshll.u32 %v793, 16
        %v908 = vor.u32 %v905, %v906
        %v910 = vshrl.u32 %v794, 16
        %v912 = vrot.slane %v910, 7
        %v913 = vshll.u32 %v794, 16
        %v915 = vor.u32 %v912, %v913
        %vm948 = vcmask 1040384
        %vm949 = vsmask.f32 256
        %vm950 = vmand %vm948, %vm949
        %v951 = vsel %vm950, 0, %v810
        %v952 = vsel %vm950, 0, %v817
        %v953 = vsel %vm950, 0, %v824
        %v954 = vsel %vm950, 0, %v831
        %v955 = vsel %vm950, 0, %v838
        %v956 = vsel %vm950, 0, %v845
        %v957 = vsel %vm950, 0, %v852
        %v958 = vsel %vm950, 0, %v859
        %v959 = vsel %vm950, 0, %v866
        %v960 = vsel %vm950, 0, %v873
        %v961 = vsel %vm950, 0, %v880
        %v962 = vsel %vm950, 0, %v887
        %v963 = vsel %vm950, 0, %v894
        %v964 = vsel %vm950, 0, %v901
        %v965 = vsel %vm950, 0, %v908
        %v966 = vsel %vm950, 0, %v915
        %v967 = vsel %vm950, %v807, 0
        %v968 = vsel %vm950, %v814, 0
        %v969 = vsel %vm950, %v821, 0
        %v970 = vsel %vm950, %v828, 0
        %v971 = vsel %vm950, %v835, 0
        %v972 = vsel %vm950, %v842, 0
        %v973 = vsel %vm950, %v849, 0
        %v974 = vsel %vm950, %v856, 0
        %v975 = vsel %vm950, %v863, 0
        %v976 = vsel %vm950, %v870, 0
        %v977 = vsel %vm950, %v877, 0
        %v978 = vsel %vm950, %v884, 0
        %v979 = vsel %vm950, %v891, 0
        %v980 = vsel %vm950, %v898, 0
        %v981 = vsel %vm950, %v905, 0
        %v982 = vsel %vm950, %v912, 0
        %v1015 = vunpack.c.l.b16 %v951
        %v1016 = vunpack.c.h.b16 %v951
        %v1017 = vunpack.c.l.b16 %v967
        %v1018 = vunpack.c.l.b16 %v952
        %v1019 = vunpack.c.h.b16 %v952
        %v1020 = vunpack.c.l.b16 %v968
        %v1021 = vunpack.c.l.b16 %v953
        %v1022 = vunpack.c.h.b16 %v953
        %v1023 = vunpack.c.l.b16 %v969
        %v1024 = vunpack.c.l.b16 %v954
        %v1025 = vunpack.c.h.b16 %v954
        %v1026 = vunpack.c.l.b16 %v970
        %v1027 = vunpack.c.l.b16 %v955
        %v1028 = vunpack.c.h.b16 %v955
        %v1029 = vunpack.c.l.b16 %v971
        %v1030 = vunpack.c.l.b16 %v956
        %v1031 = vunpack.c.h.b16 %v956
        %v1032 = vunpack.c.l.b16 %v972
        %v1033 = vunpack.c.l.b16 %v957
        %v1034 = vunpack.c.h.b16 %v957
        %v1035 = vunpack.c.l.b16 %v973
        %v1036 = vunpack.c.l.b16 %v958
        %v1037 = vunpack.c.h.b16 %v958
        %v1038 = vunpack.c.l.b16 %v974
        %v1039 = vunpack.c.l.b16 %v959
        %v1040 = vunpack.c.h.b16 %v959
        %v1041 = vunpack.c.l.b16 %v975
        %v1042 = vunpack.c.l.b16 %v960
        %v1043 = vunpack.c.h.b16 %v960
        %v1044 = vunpack.c.l.b16 %v976
        %v1045 = vunpack.c.l.b16 %v961
        %v1046 = vunpack.c.h.b16 %v961
        %v1047 = vunpack.c.l.b16 %v977
        %v1048 = vunpack.c.l.b16 %v962
        %v1049 = vunpack.c.h.b16 %v962
        %v1050 = vunpack.c.l.b16 %v978
        %v1051 = vunpack.c.l.b16 %v963
        %v1052 = vunpack.c.h.b16 %v963
        %v1053 = vunpack.c.l.b16 %v979
        %v1054 = vunpack.c.l.b16 %v964
        %v1055 = vunpack.c.h.b16 %v964
        %v1056 = vunpack.c.l.b16 %v980
        %v1057 = vunpack.c.l.b16 %v965
        %v1058 = vunpack.c.h.b16 %v965
        %v1059 = vunpack.c.l.b16 %v981
        %v1060 = vunpack.c.l.b16 %v966
        %v1061 = vunpack.c.h.b16 %v966
        %v1062 = vunpack.c.l.b16 %v982
        %v1063 = vpack.c.b16 %v1015, %v1015
        %v1064 = vpack.c.b16 %v1016, %v1016
        %v1065 = vpack.c.b16 %v1017, %v1017
        %v1066 = vpack.c.b16 %v1018, %v1018
        %v1067 = vpack.c.b16 %v1019, %v1019
        %v1068 = vpack.c.b16 %v1020, %v1020
        %v1069 = vpack.c.b16 %v1021, %v1021
        %v1070 = vpack.c.b16 %v1022, %v1022
        %v1071 = vpack.c.b16 %v1023, %v1023
        %v1072 = vpack.c.b16 %v1024, %v1024
        %v1073 = vpack.c.b16 %v1025, %v1025
        %v1074 = vpack.c.b16 %v1026, %v1026
        %v1075 = vpack.c.b16 %v1027, %v1027
        %v1076 = vpack.c.b16 %v1028, %v1028
        %v1077 = vpack.c.b16 %v1029, %v1029
        %v1078 = vpack.c.b16 %v1030, %v1030
        %v1079 = vpack.c.b16 %v1031, %v1031
        %v1080 = vpack.c.b16 %v1032, %v1032
        %v1081 = vpack.c.b16 %v1033, %v1033
        %v1082 = vpack.c.b16 %v1034, %v1034
        %v1083 = vpack.c.b16 %v1035, %v1035
        %v1084 = vpack.c.b16 %v1036, %v1036
        %v1085 = vpack.c.b16 %v1037, %v1037
        %v1086 = vpack.c.b16 %v1038, %v1038
        %v1087 = vpack.c.b16 %v1039, %v1039
        %v1088 = vpack.c.b16 %v1040, %v1040
        %v1089 = vpack.c.b16 %v1041, %v1041
        %v1090 = vpack.c.b16 %v1042, %v1042
        %v1091 = vpack.c.b16 %v1043, %v1043
        %v1092 = vpack.c.b16 %v1044, %v1044
        %v1093 = vpack.c.b16 %v1045, %v1045
        %v1094 = vpack.c.b16 %v1046, %v1046
        %v1095 = vpack.c.b16 %v1047, %v1047
        %v1096 = vpack.c.b16 %v1048, %v1048
        %v1097 = vpack.c.b16 %v1049, %v1049
        %v1098 = vpack.c.b16 %v1050, %v1050
        %v1099 = vpack.c.b16 %v1051, %v1051
        %v1100 = vpack.c.b16 %v1052, %v1052
        %v1101 = vpack.c.b16 %v1053, %v1053
        %v1102 = vpack.c.b16 %v1054, %v1054
        %v1103 = vpack.c.b16 %v1055, %v1055
        %v1104 = vpack.c.b16 %v1056, %v1056
        %v1105 = vpack.c.b16 %v1057, %v1057
        %v1106 = vpack.c.b16 %v1058, %v1058
        %v1107 = vpack.c.b16 %v1059, %v1059
        %v1108 = vpack.c.b16 %v1060, %v1060
        %v1109 = vpack.c.b16 %v1061, %v1061
        %v1110 = vpack.c.b16 %v1062, %v1062
        %s1159 = scalar_lea.vmem [#allocation2], 12
        %1160 = vst.msk [vmem:[%s1159] sm:$0xf] %vm795, %v1063
        %1161 = vst.msk [vmem:[%s1159 + $0x4] sm:$0xf] %vm795, %v1064
        %1162 = vst.msk [vmem:[%s1159 + $0x8] sm:$0x1] %vm798, %v1065
        %1163 = vst.msk [vmem:[%s1159 + $0xc] sm:$0xf] %vm795, %v1066
        %1164 = vst.msk [vmem:[%s1159 + $0x10] sm:$0xf] %vm795, %v1067
        %1165 = vst.msk [vmem:[%s1159 + $0x14] sm:$0x1] %vm798, %v1068
        %1166 = vst.msk [vmem:[%s1159 + $0x18] sm:$0xf] %vm795, %v1069
        %1167 = vst.msk [vmem:[%s1159 + $0x1c] sm:$0xf] %vm795, %v1070
        %1168 = vst.msk [vmem:[%s1159 + $0x20] sm:$0x1] %vm798, %v1071
        %1169 = vst.msk [vmem:[%s1159 + $0x24] sm:$0xf] %vm795, %v1072
        %1170 = vst.msk [vmem:[%s1159 + $0x28] sm:$0xf] %vm795, %v1073
        %1171 = vst.msk [vmem:[%s1159 + $0x2c] sm:$0x1] %vm798, %v1074
        %1172 = vst.msk [vmem:[%s1159 + $0x30] sm:$0xf] %vm795, %v1075
        %1173 = vst.msk [vmem:[%s1159 + $0x34] sm:$0xf] %vm795, %v1076
        %1174 = vst.msk [vmem:[%s1159 + $0x38] sm:$0x1] %vm798, %v1077
        %1175 = vst.msk [vmem:[%s1159 + $0x3c] sm:$0xf] %vm795, %v1078
        %1176 = vst.msk [vmem:[%s1159 + $0x40] sm:$0xf] %vm795, %v1079
        %1177 = vst.msk [vmem:[%s1159 + $0x44] sm:$0x1] %vm798, %v1080
        %1178 = vst.msk [vmem:[%s1159 + $0x48] sm:$0xf] %vm795, %v1081
        %1179 = vst.msk [vmem:[%s1159 + $0x4c] sm:$0xf] %vm795, %v1082
        %1180 = vst.msk [vmem:[%s1159 + $0x50] sm:$0x1] %vm798, %v1083
        %1181 = vst.msk [vmem:[%s1159 + $0x54] sm:$0xf] %vm795, %v1084
        %1182 = vst.msk [vmem:[%s1159 + $0x58] sm:$0xf] %vm795, %v1085
        %1183 = vst.msk [vmem:[%s1159 + $0x5c] sm:$0x1] %vm798, %v1086
        %1184 = vst.msk [vmem:[%s1159 + $0x60] sm:$0xf] %vm795, %v1087
        %1185 = vst.msk [vmem:[%s1159 + $0x64] sm:$0xf] %vm795, %v1088
        %1186 = vst.msk [vmem:[%s1159 + $0x68] sm:$0x1] %vm798, %v1089
        %1187 = vst.msk [vmem:[%s1159 + $0x6c] sm:$0xf] %vm795, %v1090
        %1188 = vst.msk [vmem:[%s1159 + $0x70] sm:$0xf] %vm795, %v1091
        %1189 = vst.msk [vmem:[%s1159 + $0x74] sm:$0x1] %vm798, %v1092
        %1190 = vst.msk [vmem:[%s1159 + $0x78] sm:$0xf] %vm795, %v1093
        %1191 = vst.msk [vmem:[%s1159 + $0x7c] sm:$0xf] %vm795, %v1094
        %1192 = vst.msk [vmem:[%s1159 + $0x80] sm:$0x1] %vm798, %v1095
        %1193 = vst.msk [vmem:[%s1159 + $0x84] sm:$0xf] %vm795, %v1096
        %1194 = vst.msk [vmem:[%s1159 + $0x88] sm:$0xf] %vm795, %v1097
        %1195 = vst.msk [vmem:[%s1159 + $0x8c] sm:$0x1] %vm798, %v1098
        %1196 = vst.msk [vmem:[%s1159 + $0x90] sm:$0xf] %vm795, %v1099
        %1197 = vst.msk [vmem:[%s1159 + $0x94] sm:$0xf] %vm795, %v1100
        %1198 = vst.msk [vmem:[%s1159 + $0x98] sm:$0x1] %vm798, %v1101
        %1199 = vst.msk [vmem:[%s1159 + $0x9c] sm:$0xf] %vm795, %v1102
        %1200 = vst.msk [vmem:[%s1159 + $0xa0] sm:$0xf] %vm795, %v1103
        %1201 = vst.msk [vmem:[%s1159 + $0xa4] sm:$0x1] %vm798, %v1104
        %1202 = vst.msk [vmem:[%s1159 + $0xa8] sm:$0xf] %vm795, %v1105
        %1203 = vst.msk [vmem:[%s1159 + $0xac] sm:$0xf] %vm795, %v1106
        %1204 = vst.msk [vmem:[%s1159 + $0xb0] sm:$0x1] %vm798, %v1107
        %1205 = vst.msk [vmem:[%s1159 + $0xb4] sm:$0xf] %vm795, %v1108
        %1206 = vst.msk [vmem:[%s1159 + $0xb8] sm:$0xf] %vm795, %v1109
        %1207 = vst.msk [vmem:[%s1159 + $0xbc] sm:$0x1] %vm798, %v1110
        %v1208 = vld [vmem:[#allocation2] sm:$0xf]
        %v1209 = vld [vmem:[#allocation2 + $0x4] sm:$0xf]
        %v1210 = vld [vmem:[#allocation2 + $0xc] sm:$0xf]
        %v1211 = vld [vmem:[#allocation2 + $0x10] sm:$0xf]
        %v1212 = vld [vmem:[#allocation2 + $0x18] sm:$0xf]
        %v1213 = vld [vmem:[#allocation2 + $0x1c] sm:$0xf]
        %v1214 = vld [vmem:[#allocation2 + $0x24] sm:$0xf]
        %v1215 = vld [vmem:[#allocation2 + $0x28] sm:$0xf]
        %v1216 = vld [vmem:[#allocation2 + $0x30] sm:$0xf]
        %v1217 = vld [vmem:[#allocation2 + $0x34] sm:$0xf]
        %v1218 = vld [vmem:[#allocation2 + $0x3c] sm:$0xf]
        %v1219 = vld [vmem:[#allocation2 + $0x40] sm:$0xf]
        %v1220 = vld [vmem:[#allocation2 + $0x48] sm:$0xf]
        %v1221 = vld [vmem:[#allocation2 + $0x4c] sm:$0xf]
        %v1222 = vld [vmem:[#allocation2 + $0x54] sm:$0xf]
        %v1223 = vld [vmem:[#allocation2 + $0x58] sm:$0xf]
        %v1224 = vld [vmem:[#allocation2 + $0x60] sm:$0xf]
        %v1225 = vld [vmem:[#allocation2 + $0x64] sm:$0xf]
        %v1226 = vld [vmem:[#allocation2 + $0x6c] sm:$0xf]
        %v1227 = vld [vmem:[#allocation2 + $0x70] sm:$0xf]
        %v1228 = vld [vmem:[#allocation2 + $0x78] sm:$0xf]
        %v1229 = vld [vmem:[#allocation2 + $0x7c] sm:$0xf]
        %v1230 = vld [vmem:[#allocation2 + $0x84] sm:$0xf]
        %v1231 = vld [vmem:[#allocation2 + $0x88] sm:$0xf]
        %v1232 = vld [vmem:[#allocation2 + $0x90] sm:$0xf]
        %v1233 = vld [vmem:[#allocation2 + $0x94] sm:$0xf]
        %v1234 = vld [vmem:[#allocation2 + $0x9c] sm:$0xf]
        %v1235 = vld [vmem:[#allocation2 + $0xa0] sm:$0xf]
        %v1236 = vld [vmem:[#allocation2 + $0xa8] sm:$0xf]
        %v1237 = vld [vmem:[#allocation2 + $0xac] sm:$0xf]
        %v1238 = vld [vmem:[#allocation2 + $0xb4] sm:$0xf]
        %v1239 = vld [vmem:[#allocation2 + $0xb8] sm:$0xf]
        %v1240 = vld [vmem:[#allocation2 + $0x8] sm:$0x1]
        %v1241 = vld [vmem:[#allocation2 + $0x14] sm:$0x1]
        %v1242 = vld [vmem:[#allocation2 + $0x20] sm:$0x1]
        %v1243 = vld [vmem:[#allocation2 + $0x2c] sm:$0x1]
        %v1244 = vld [vmem:[#allocation2 + $0x38] sm:$0x1]
        %v1245 = vld [vmem:[#allocation2 + $0x44] sm:$0x1]
        %v1246 = vld [vmem:[#allocation2 + $0x50] sm:$0x1]
        %v1247 = vld [vmem:[#allocation2 + $0x5c] sm:$0x1]
        %v1248 = vld [vmem:[#allocation2 + $0x68] sm:$0x1]
        %v1249 = vld [vmem:[#allocation2 + $0x74] sm:$0x1]
        %v1250 = vld [vmem:[#allocation2 + $0x80] sm:$0x1]
        %v1251 = vld [vmem:[#allocation2 + $0x8c] sm:$0x1]
        %v1252 = vld [vmem:[#allocation2 + $0x98] sm:$0x1]
        %v1253 = vld [vmem:[#allocation2 + $0xa4] sm:$0x1]
        %v1254 = vld [vmem:[#allocation2 + $0xb0] sm:$0x1]
        %v1255 = vld [vmem:[#allocation2 + $0xbc] sm:$0x1]
        %v1256 = vld [vmem:[#allocation2] sm:$0xe]
        %v1257 = vld [vmem:[#allocation2 + $0xc] sm:$0xe]
        %v1258 = vld [vmem:[#allocation2 + $0x18] sm:$0xe]
        %v1259 = vld [vmem:[#allocation2 + $0x24] sm:$0xe]
        %v1260 = vld [vmem:[#allocation2 + $0x30] sm:$0xe]
        %v1261 = vld [vmem:[#allocation2 + $0x3c] sm:$0xe]
        %v1262 = vld [vmem:[#allocation2 + $0x48] sm:$0xe]
        %v1263 = vld [vmem:[#allocation2 + $0x54] sm:$0xe]
        %v1264 = vld [vmem:[#allocation2 + $0x60] sm:$0xe]
        %v1265 = vld [vmem:[#allocation2 + $0x6c] sm:$0xe]
        %v1266 = vld [vmem:[#allocation2 + $0x78] sm:$0xe]
        %v1267 = vld [vmem:[#allocation2 + $0x84] sm:$0xe]
        %v1268 = vld [vmem:[#allocation2 + $0x90] sm:$0xe]
        %v1269 = vld [vmem:[#allocation2 + $0x9c] sm:$0xe]
        %v1270 = vld [vmem:[#allocation2 + $0xa8] sm:$0xe]
        %v1271 = vld [vmem:[#allocation2 + $0xb4] sm:$0xe]
        %v1304 = vunpack.c.l.b16 %v1208
        %v1305 = vunpack.c.l.b16 %v1209
        %v1306 = vunpack.c.l.b16 %v1210
        %v1307 = vunpack.c.l.b16 %v1211
        %v1308 = vunpack.c.l.b16 %v1212
        %v1309 = vunpack.c.l.b16 %v1213
        %v1310 = vunpack.c.l.b16 %v1214
        %v1311 = vunpack.c.l.b16 %v1215
        %v1312 = vunpack.c.l.b16 %v1216
        %v1313 = vunpack.c.l.b16 %v1217
        %v1314 = vunpack.c.l.b16 %v1218
        %v1315 = vunpack.c.l.b16 %v1219
        %v1316 = vunpack.c.l.b16 %v1220
        %v1317 = vunpack.c.l.b16 %v1221
        %v1318 = vunpack.c.l.b16 %v1222
        %v1319 = vunpack.c.l.b16 %v1223
        %v1320 = vunpack.c.l.b16 %v1224
        %v1321 = vunpack.c.l.b16 %v1225
        %v1322 = vunpack.c.l.b16 %v1226
        %v1323 = vunpack.c.l.b16 %v1227
        %v1324 = vunpack.c.l.b16 %v1228
        %v1325 = vunpack.c.l.b16 %v1229
        %v1326 = vunpack.c.l.b16 %v1230
        %v1327 = vunpack.c.l.b16 %v1231
        %v1328 = vunpack.c.l.b16 %v1232
        %v1329 = vunpack.c.l.b16 %v1233
        %v1330 = vunpack.c.l.b16 %v1234
        %v1331 = vunpack.c.l.b16 %v1235
        %v1332 = vunpack.c.l.b16 %v1236
        %v1333 = vunpack.c.l.b16 %v1237
        %v1334 = vunpack.c.l.b16 %v1238
        %v1335 = vunpack.c.l.b16 %v1239
        %v1336 = vpack.c.b16 %v1305, %v1304
        %v1337 = vpack.c.b16 %v1307, %v1306
        %v1338 = vpack.c.b16 %v1309, %v1308
        %v1339 = vpack.c.b16 %v1311, %v1310
        %v1340 = vpack.c.b16 %v1313, %v1312
        %v1341 = vpack.c.b16 %v1315, %v1314
        %v1342 = vpack.c.b16 %v1317, %v1316
        %v1343 = vpack.c.b16 %v1319, %v1318
        %v1344 = vpack.c.b16 %v1321, %v1320
        %v1345 = vpack.c.b16 %v1323, %v1322
        %v1346 = vpack.c.b16 %v1325, %v1324
        %v1347 = vpack.c.b16 %v1327, %v1326
        %v1348 = vpack.c.b16 %v1329, %v1328
        %v1349 = vpack.c.b16 %v1331, %v1330
        %v1350 = vpack.c.b16 %v1333, %v1332
        %v1351 = vpack.c.b16 %v1335, %v1334
        %v1368 = vunpack.c.l.b16 %v1240
        %v1369 = vunpack.c.l.b16 %v1241
        %v1370 = vunpack.c.l.b16 %v1242
        %v1371 = vunpack.c.l.b16 %v1243
        %v1372 = vunpack.c.l.b16 %v1244
        %v1373 = vunpack.c.l.b16 %v1245
        %v1374 = vunpack.c.l.b16 %v1246
        %v1375 = vunpack.c.l.b16 %v1247
        %v1376 = vunpack.c.l.b16 %v1248
        %v1377 = vunpack.c.l.b16 %v1249
        %v1378 = vunpack.c.l.b16 %v1250
        %v1379 = vunpack.c.l.b16 %v1251
        %v1380 = vunpack.c.l.b16 %v1252
        %v1381 = vunpack.c.l.b16 %v1253
        %v1382 = vunpack.c.l.b16 %v1254
        %v1383 = vunpack.c.l.b16 %v1255
        %v1384 = vpack.c.b16 %v1368, %v1368
        %v1385 = vpack.c.b16 %v1369, %v1369
        %v1386 = vpack.c.b16 %v1370, %v1370
        %v1387 = vpack.c.b16 %v1371, %v1371
        %v1388 = vpack.c.b16 %v1372, %v1372
        %v1389 = vpack.c.b16 %v1373, %v1373
        %v1390 = vpack.c.b16 %v1374, %v1374
        %v1391 = vpack.c.b16 %v1375, %v1375
        %v1392 = vpack.c.b16 %v1376, %v1376
        %v1393 = vpack.c.b16 %v1377, %v1377
        %v1394 = vpack.c.b16 %v1378, %v1378
        %v1395 = vpack.c.b16 %v1379, %v1379
        %v1396 = vpack.c.b16 %v1380, %v1380
        %v1397 = vpack.c.b16 %v1381, %v1381
        %v1398 = vpack.c.b16 %v1382, %v1382
        %v1399 = vpack.c.b16 %v1383, %v1383
        %vm1400 = vsmask.f32 7424
        %v1402 = vshrl.u32 %v1336, 16
        %v1404 = vshll.u32 %v1336, 16
        %v1406 = vrot.slane %v1404, 1
        %v1407 = vor.u32 %v1402, %v1406
        %v1409 = vshll.u32 %v1384, 16
        %v1411 = vrot.slane %v1409, 1
        %v1412 = vsel %vm1400, %v1407, %v1411
        %v1414 = vshrl.u32 %v1337, 16
        %v1416 = vshll.u32 %v1337, 16
        %v1418 = vrot.slane %v1416, 1
        %v1419 = vor.u32 %v1414, %v1418
        %v1421 = vshll.u32 %v1385, 16
        %v1423 = vrot.slane %v1421, 1
        %v1424 = vsel %vm1400, %v1419, %v1423
        %v1426 = vshrl.u32 %v1338, 16
        %v1428 = vshll.u32 %v1338, 16
        %v1430 = vrot.slane %v1428, 1
        %v1431 = vor.u32 %v1426, %v1430
        %v1433 = vshll.u32 %v1386, 16
        %v1435 = vrot.slane %v1433, 1
        %v1436 = vsel %vm1400, %v1431, %v1435
        %v1438 = vshrl.u32 %v1339, 16
        %v1440 = vshll.u32 %v1339, 16
        %v1442 = vrot.slane %v1440, 1
        %v1443 = vor.u32 %v1438, %v1442
        %v1445 = vshll.u32 %v1387, 16
        %v1447 = vrot.slane %v1445, 1
        %v1448 = vsel %vm1400, %v1443, %v1447
        %v1450 = vshrl.u32 %v1340, 16
        %v1452 = vshll.u32 %v1340, 16
        %v1454 = vrot.slane %v1452, 1
        %v1455 = vor.u32 %v1450, %v1454
        %v1457 = vshll.u32 %v1388, 16
        %v1459 = vrot.slane %v1457, 1
        %v1460 = vsel %vm1400, %v1455, %v1459
        %v1462 = vshrl.u32 %v1341, 16
        %v1464 = vshll.u32 %v1341, 16
        %v1466 = vrot.slane %v1464, 1
        %v1467 = vor.u32 %v1462, %v1466
        %v1469 = vshll.u32 %v1389, 16
        %v1471 = vrot.slane %v1469, 1
        %v1472 = vsel %vm1400, %v1467, %v1471
        %v1474 = vshrl.u32 %v1342, 16
        %v1476 = vshll.u32 %v1342, 16
        %v1478 = vrot.slane %v1476, 1
        %v1479 = vor.u32 %v1474, %v1478
        %v1481 = vshll.u32 %v1390, 16
        %v1483 = vrot.slane %v1481, 1
        %v1484 = vsel %vm1400, %v1479, %v1483
        %v1486 = vshrl.u32 %v1343, 16
        %v1488 = vshll.u32 %v1343, 16
        %v1490 = vrot.slane %v1488, 1
        %v1491 = vor.u32 %v1486, %v1490
        %v1493 = vshll.u32 %v1391, 16
        %v1495 = vrot.slane %v1493, 1
        %v1496 = vsel %vm1400, %v1491, %v1495
        %v1498 = vshrl.u32 %v1344, 16
        %v1500 = vshll.u32 %v1344, 16
        %v1502 = vrot.slane %v1500, 1
        %v1503 = vor.u32 %v1498, %v1502
        %v1505 = vshll.u32 %v1392, 16
        %v1507 = vrot.slane %v1505, 1
        %v1508 = vsel %vm1400, %v1503, %v1507
        %v1510 = vshrl.u32 %v1345, 16
        %v1512 = vshll.u32 %v1345, 16
        %v1514 = vrot.slane %v1512, 1
        %v1515 = vor.u32 %v1510, %v1514
        %v1517 = vshll.u32 %v1393, 16
        %v1519 = vrot.slane %v1517, 1
        %v1520 = vsel %vm1400, %v1515, %v1519
        %v1522 = vshrl.u32 %v1346, 16
        %v1524 = vshll.u32 %v1346, 16
        %v1526 = vrot.slane %v1524, 1
        %v1527 = vor.u32 %v1522, %v1526
        %v1529 = vshll.u32 %v1394, 16
        %v1531 = vrot.slane %v1529, 1
        %v1532 = vsel %vm1400, %v1527, %v1531
        %v1534 = vshrl.u32 %v1347, 16
        %v1536 = vshll.u32 %v1347, 16
        %v1538 = vrot.slane %v1536, 1
        %v1539 = vor.u32 %v1534, %v1538
        %v1541 = vshll.u32 %v1395, 16
        %v1543 = vrot.slane %v1541, 1
        %v1544 = vsel %vm1400, %v1539, %v1543
        %v1546 = vshrl.u32 %v1348, 16
        %v1548 = vshll.u32 %v1348, 16
        %v1550 = vrot.slane %v1548, 1
        %v1551 = vor.u32 %v1546, %v1550
        %v1553 = vshll.u32 %v1396, 16
        %v1555 = vrot.slane %v1553, 1
        %v1556 = vsel %vm1400, %v1551, %v1555
        %v1558 = vshrl.u32 %v1349, 16
        %v1560 = vshll.u32 %v1349, 16
        %v1562 = vrot.slane %v1560, 1
        %v1563 = vor.u32 %v1558, %v1562
        %v1565 = vshll.u32 %v1397, 16
        %v1567 = vrot.slane %v1565, 1
        %v1568 = vsel %vm1400, %v1563, %v1567
        %v1570 = vshrl.u32 %v1350, 16
        %v1572 = vshll.u32 %v1350, 16
        %v1574 = vrot.slane %v1572, 1
        %v1575 = vor.u32 %v1570, %v1574
        %v1577 = vshll.u32 %v1398, 16
        %v1579 = vrot.slane %v1577, 1
        %v1580 = vsel %vm1400, %v1575, %v1579
        %v1582 = vshrl.u32 %v1351, 16
        %v1584 = vshll.u32 %v1351, 16
        %v1586 = vrot.slane %v1584, 1
        %v1587 = vor.u32 %v1582, %v1586
        %v1589 = vshll.u32 %v1399, 16
        %v1591 = vrot.slane %v1589, 1
        %v1592 = vsel %vm1400, %v1587, %v1591
        %1593 = vrot.lane.b32.xlu0 %v1412, 32
        %v1594 = vpop.permute.xlu0 %1593
        %1595 = vrot.lane.b32.xlu0 %v1424, 32
        %v1596 = vpop.permute.xlu0 %1595
        %1597 = vrot.lane.b32.xlu0 %v1436, 32
        %v1598 = vpop.permute.xlu0 %1597
        %1599 = vrot.lane.b32.xlu0 %v1448, 32
        %v1600 = vpop.permute.xlu0 %1599
        %1601 = vrot.lane.b32.xlu0 %v1460, 32
        %v1602 = vpop.permute.xlu0 %1601
        %1603 = vrot.lane.b32.xlu0 %v1472, 32
        %v1604 = vpop.permute.xlu0 %1603
        %1605 = vrot.lane.b32.xlu0 %v1484, 32
        %v1606 = vpop.permute.xlu0 %1605
        %1607 = vrot.lane.b32.xlu0 %v1496, 32
        %v1608 = vpop.permute.xlu0 %1607
        %1609 = vrot.lane.b32.xlu0 %v1508, 32
        %v1610 = vpop.permute.xlu0 %1609
        %1611 = vrot.lane.b32.xlu0 %v1520, 32
        %v1612 = vpop.permute.xlu0 %1611
        %1613 = vrot.lane.b32.xlu0 %v1532, 32
        %v1614 = vpop.permute.xlu0 %1613
        %1615 = vrot.lane.b32.xlu0 %v1544, 32
        %v1616 = vpop.permute.xlu0 %1615
        %1617 = vrot.lane.b32.xlu0 %v1556, 32
        %v1618 = vpop.permute.xlu0 %1617
        %1619 = vrot.lane.b32.xlu0 %v1568, 32
        %v1620 = vpop.permute.xlu0 %1619
        %1621 = vrot.lane.b32.xlu0 %v1580, 32
        %v1622 = vpop.permute.xlu0 %1621
        %1623 = vrot.lane.b32.xlu0 %v1592, 32
        %v1624 = vpop.permute.xlu0 %1623
        %v1641 = vunpack.c.l.b16 %v1256
        %v1642 = vunpack.c.l.b16 %v1257
        %v1643 = vunpack.c.l.b16 %v1258
        %v1644 = vunpack.c.l.b16 %v1259
        %v1645 = vunpack.c.l.b16 %v1260
        %v1646 = vunpack.c.l.b16 %v1261
        %v1647 = vunpack.c.l.b16 %v1262
        %v1648 = vunpack.c.l.b16 %v1263
        %v1649 = vunpack.c.l.b16 %v1264
        %v1650 = vunpack.c.l.b16 %v1265
        %v1651 = vunpack.c.l.b16 %v1266
        %v1652 = vunpack.c.l.b16 %v1267
        %v1653 = vunpack.c.l.b16 %v1268
        %v1654 = vunpack.c.l.b16 %v1269
        %v1655 = vunpack.c.l.b16 %v1270
        %v1656 = vunpack.c.l.b16 %v1271
        %v1657 = vpack.c.b16 %v1305, %v1641
        %v1658 = vpack.c.b16 %v1307, %v1642
        %v1659 = vpack.c.b16 %v1309, %v1643
        %v1660 = vpack.c.b16 %v1311, %v1644
        %v1661 = vpack.c.b16 %v1313, %v1645
        %v1662 = vpack.c.b16 %v1315, %v1646
        %v1663 = vpack.c.b16 %v1317, %v1647
        %v1664 = vpack.c.b16 %v1319, %v1648
        %v1665 = vpack.c.b16 %v1321, %v1649
        %v1666 = vpack.c.b16 %v1323, %v1650
        %v1667 = vpack.c.b16 %v1325, %v1651
        %v1668 = vpack.c.b16 %v1327, %v1652
        %v1669 = vpack.c.b16 %v1329, %v1653
        %v1670 = vpack.c.b16 %v1331, %v1654
        %v1671 = vpack.c.b16 %v1333, %v1655
        %v1672 = vpack.c.b16 %v1335, %v1656
        %vm1673 = vcmask 1046528
        %v1674 = vrot.slane %v1657, 1
        %v1675 = vrot.slane %v1384, 1
        %v1676 = vsel %vm1673, %v1674, %v1675
        %v1677 = vrot.slane %v1658, 1
        %v1678 = vrot.slane %v1385, 1
        %v1679 = vsel %vm1673, %v1677, %v1678
        %v1680 = vrot.slane %v1659, 1
        %v1681 = vrot.slane %v1386, 1
        %v1682 = vsel %vm1673, %v1680, %v1681
        %v1683 = vrot.slane %v1660, 1
        %v1684 = vrot.slane %v1387, 1
        %v1685 = vsel %vm1673, %v1683, %v1684
        %v1686 = vrot.slane %v1661, 1
        %v1687 = vrot.slane %v1388, 1
        %v1688 = vsel %vm1673, %v1686, %v1687
        %v1689 = vrot.slane %v1662, 1
        %v1690 = vrot.slane %v1389, 1
        %v1691 = vsel %vm1673, %v1689, %v1690
        %v1692 = vrot.slane %v1663, 1
        %v1693 = vrot.slane %v1390, 1
        %v1694 = vsel %vm1673, %v1692, %v1693
        %v1695 = vrot.slane %v1664, 1
        %v1696 = vrot.slane %v1391, 1
        %v1697 = vsel %vm1673, %v1695, %v1696
        %v1698 = vrot.slane %v1665, 1
        %v1699 = vrot.slane %v1392, 1
        %v1700 = vsel %vm1673, %v1698, %v1699
        %v1701 = vrot.slane %v1666, 1
        %v1702 = vrot.slane %v1393, 1
        %v1703 = vsel %vm1673, %v1701, %v1702
        %v1704 = vrot.slane %v1667, 1
        %v1705 = vrot.slane %v1394, 1
        %v1706 = vsel %vm1673, %v1704, %v1705
        %v1707 = vrot.slane %v1668, 1
        %v1708 = vrot.slane %v1395, 1
        %v1709 = vsel %vm1673, %v1707, %v1708
        %v1710 = vrot.slane %v1669, 1
        %v1711 = vrot.slane %v1396, 1
        %v1712 = vsel %vm1673, %v1710, %v1711
        %v1713 = vrot.slane %v1670, 1
        %v1714 = vrot.slane %v1397, 1
        %v1715 = vsel %vm1673, %v1713, %v1714
        %v1716 = vrot.slane %v1671, 1
        %v1717 = vrot.slane %v1398, 1
        %v1718 = vsel %vm1673, %v1716, %v1717
        %v1719 = vrot.slane %v1672, 1
        %v1720 = vrot.slane %v1399, 1
        %v1721 = vsel %vm1673, %v1719, %v1720
        %1722 = vrot.lane.b32.xlu0 %v1676, 64
        %v1723 = vpop.permute.xlu0 %1722
        %1724 = vrot.lane.b32.xlu0 %v1679, 64
        %v1725 = vpop.permute.xlu0 %1724
        %1726 = vrot.lane.b32.xlu0 %v1682, 64
        %v1727 = vpop.permute.xlu0 %1726
        %1728 = vrot.lane.b32.xlu0 %v1685, 64
        %v1729 = vpop.permute.xlu0 %1728
        %1730 = vrot.lane.b32.xlu0 %v1688, 64
        %v1731 = vpop.permute.xlu0 %1730
        %1732 = vrot.lane.b32.xlu0 %v1691, 64
        %v1733 = vpop.permute.xlu0 %1732
        %1734 = vrot.lane.b32.xlu0 %v1694, 64
        %v1735 = vpop.permute.xlu0 %1734
        %1736 = vrot.lane.b32.xlu0 %v1697, 64
        %v1737 = vpop.permute.xlu0 %1736
        %1738 = vrot.lane.b32.xlu0 %v1700, 64
        %v1739 = vpop.permute.xlu0 %1738
        %1740 = vrot.lane.b32.xlu0 %v1703, 64
        %v1741 = vpop.permute.xlu0 %1740
        %1742 = vrot.lane.b32.xlu0 %v1706, 64
        %v1743 = vpop.permute.xlu0 %1742
        %1744 = vrot.lane.b32.xlu0 %v1709, 64
        %v1745 = vpop.permute.xlu0 %1744
        %1746 = vrot.lane.b32.xlu0 %v1712, 64
        %v1747 = vpop.permute.xlu0 %1746
        %1748 = vrot.lane.b32.xlu0 %v1715, 64
        %v1749 = vpop.permute.xlu0 %1748
        %1750 = vrot.lane.b32.xlu0 %v1718, 64
        %v1751 = vpop.permute.xlu0 %1750
        %1752 = vrot.lane.b32.xlu0 %v1721, 64
        %v1753 = vpop.permute.xlu0 %1752
        %vm1754 = vcmask 261120
        %v1756 = vsel %vm1754, %v1336, %v1594
        %v1758 = vsel %vm1754, %v1337, %v1596
        %v1760 = vsel %vm1754, %v1338, %v1598
        %v1762 = vsel %vm1754, %v1339, %v1600
        %v1764 = vsel %vm1754, %v1340, %v1602
        %v1766 = vsel %vm1754, %v1341, %v1604
        %v1768 = vsel %vm1754, %v1342, %v1606
        %v1770 = vsel %vm1754, %v1343, %v1608
        %v1772 = vsel %vm1754, %v1344, %v1610
        %v1774 = vsel %vm1754, %v1345, %v1612
        %v1776 = vsel %vm1754, %v1346, %v1614
        %v1778 = vsel %vm1754, %v1347, %v1616
        %v1780 = vsel %vm1754, %v1348, %v1618
        %v1782 = vsel %vm1754, %v1349, %v1620
        %v1784 = vsel %vm1754, %v1350, %v1622
        %v1786 = vsel %vm1754, %v1351, %v1624
        %v1788 = vsel %vm537, %v1756, %v1723
        %v1790 = vsel %vm537, %v1758, %v1725
        %v1792 = vsel %vm537, %v1760, %v1727
        %v1794 = vsel %vm537, %v1762, %v1729
        %v1796 = vsel %vm537, %v1764, %v1731
        %v1798 = vsel %vm537, %v1766, %v1733
        %v1800 = vsel %vm537, %v1768, %v1735
        %v1802 = vsel %vm537, %v1770, %v1737
        %v1804 = vsel %vm537, %v1772, %v1739
        %v1806 = vsel %vm537, %v1774, %v1741
        %v1808 = vsel %vm537, %v1776, %v1743
        %v1810 = vsel %vm537, %v1778, %v1745
        %v1812 = vsel %vm537, %v1780, %v1747
        %v1814 = vsel %vm537, %v1782, %v1749
        %v1816 = vsel %vm537, %v1784, %v1751
        %v1818 = vsel %vm537, %v1786, %v1753
        %v1819 = vld [vmem:[%s3] sm:$0xf]
        %v1820 = vld [vmem:[%s3 + $0x4] sm:$0xf]
        %v1821 = vld [vmem:[%s3 + $0x8] sm:$0xf]
        %v1822 = vld [vmem:[%s3 + $0xc] sm:$0xf]
        %v1823 = vld [vmem:[%s3 + $0x10] sm:$0xf]
        %v1824 = vld [vmem:[%s3 + $0x14] sm:$0xf]
        %v1825 = vld [vmem:[%s3 + $0x18] sm:$0xf]
        %v1826 = vld [vmem:[%s3 + $0x1c] sm:$0xf]
        %v1827 = vld [vmem:[%s3 + $0x20] sm:$0xf]
        %v1828 = vld [vmem:[%s3 + $0x24] sm:$0xf]
        %v1829 = vld [vmem:[%s3 + $0x28] sm:$0xf]
        %v1830 = vld [vmem:[%s3 + $0x2c] sm:$0xf]
        %v1831 = vld [vmem:[%s1159] sm:$0xf]
        %v1832 = vld [vmem:[%s1159 + $0x4] sm:$0xf]
        %v1833 = vld [vmem:[%s1159 + $0xc] sm:$0xf]
        %v1834 = vld [vmem:[%s1159 + $0x10] sm:$0xf]
        %v1835 = vld [vmem:[%s1159 + $0x18] sm:$0xf]
        %v1836 = vld [vmem:[%s1159 + $0x1c] sm:$0xf]
        %v1837 = vld [vmem:[%s1159 + $0x24] sm:$0xf]
        %v1838 = vld [vmem:[%s1159 + $0x28] sm:$0xf]
        %v1839 = vld [vmem:[%s1159 + $0x30] sm:$0xf]
        %v1840 = vld [vmem:[%s1159 + $0x34] sm:$0xf]
        %v1841 = vld [vmem:[%s1159 + $0x3c] sm:$0xf]
        %v1842 = vld [vmem:[%s1159 + $0x40] sm:$0xf]
        %v1843 = vld [vmem:[%s1159 + $0x48] sm:$0xf]
        %v1844 = vld [vmem:[%s1159 + $0x4c] sm:$0xf]
        %v1845 = vld [vmem:[%s1159 + $0x54] sm:$0xf]
        %v1846 = vld [vmem:[%s1159 + $0x58] sm:$0xf]
        %v1847 = vld [vmem:[%s1159 + $0x60] sm:$0xf]
        %v1848 = vld [vmem:[%s1159 + $0x64] sm:$0xf]
        %v1849 = vld [vmem:[%s1159 + $0x6c] sm:$0xf]
        %v1850 = vld [vmem:[%s1159 + $0x70] sm:$0xf]
        %v1851 = vld [vmem:[%s1159 + $0x78] sm:$0xf]
        %v1852 = vld [vmem:[%s1159 + $0x7c] sm:$0xf]
        %v1853 = vld [vmem:[%s1159 + $0x84] sm:$0xf]
        %v1854 = vld [vmem:[%s1159 + $0x88] sm:$0xf]
        %v1855 = vld [vmem:[%s1159 + $0x90] sm:$0xf]
        %v1856 = vld [vmem:[%s1159 + $0x94] sm:$0xf]
        %v1857 = vld [vmem:[%s1159 + $0x9c] sm:$0xf]
        %v1858 = vld [vmem:[%s1159 + $0xa0] sm:$0xf]
        %v1859 = vld [vmem:[%s1159 + $0xa8] sm:$0xf]
        %v1860 = vld [vmem:[%s1159 + $0xac] sm:$0xf]
        %v1861 = vld [vmem:[%s1159 + $0xb4] sm:$0xf]
        %v1862 = vld [vmem:[%s1159 + $0xb8] sm:$0xf]
        %v1863 = vld [vmem:[%s1159 + $0x8] sm:$0x1]
        %v1864 = vld [vmem:[%s1159 + $0x14] sm:$0x1]
        %v1865 = vld [vmem:[%s1159 + $0x20] sm:$0x1]
        %v1866 = vld [vmem:[%s1159 + $0x2c] sm:$0x1]
        %v1867 = vld [vmem:[%s1159 + $0x38] sm:$0x1]
        %v1868 = vld [vmem:[%s1159 + $0x44] sm:$0x1]
        %v1869 = vld [vmem:[%s1159 + $0x50] sm:$0x1]
        %v1870 = vld [vmem:[%s1159 + $0x5c] sm:$0x1]
        %v1871 = vld [vmem:[%s1159 + $0x68] sm:$0x1]
        %v1872 = vld [vmem:[%s1159 + $0x74] sm:$0x1]
        %v1873 = vld [vmem:[%s1159 + $0x80] sm:$0x1]
        %v1874 = vld [vmem:[%s1159 + $0x8c] sm:$0x1]
        %v1875 = vld [vmem:[%s1159 + $0x98] sm:$0x1]
        %v1876 = vld [vmem:[%s1159 + $0xa4] sm:$0x1]
        %v1877 = vld [vmem:[%s1159 + $0xb0] sm:$0x1]
        %v1878 = vld [vmem:[%s1159 + $0xbc] sm:$0x1]
        %v1879 = vld [vmem:[%s1159] sm:$0xe]
        %v1880 = vld [vmem:[%s1159 + $0xc] sm:$0xe]
        %v1881 = vld [vmem:[%s1159 + $0x18] sm:$0xe]
        %v1882 = vld [vmem:[%s1159 + $0x24] sm:$0xe]
        %v1883 = vld [vmem:[%s1159 + $0x30] sm:$0xe]
        %v1884 = vld [vmem:[%s1159 + $0x3c] sm:$0xe]
        %v1885 = vld [vmem:[%s1159 + $0x48] sm:$0xe]
        %v1886 = vld [vmem:[%s1159 + $0x54] sm:$0xe]
        %v1887 = vld [vmem:[%s1159 + $0x60] sm:$0xe]
        %v1888 = vld [vmem:[%s1159 + $0x6c] sm:$0xe]
        %v1889 = vld [vmem:[%s1159 + $0x78] sm:$0xe]
        %v1890 = vld [vmem:[%s1159 + $0x84] sm:$0xe]
        %v1891 = vld [vmem:[%s1159 + $0x90] sm:$0xe]
        %v1892 = vld [vmem:[%s1159 + $0x9c] sm:$0xe]
        %v1893 = vld [vmem:[%s1159 + $0xa8] sm:$0xe]
        %v1894 = vld [vmem:[%s1159 + $0xb4] sm:$0xe]
        %v1927 = vunpack.c.l.b16 %v1831
        %v1928 = vunpack.c.l.b16 %v1832
        %v1929 = vunpack.c.l.b16 %v1833
        %v1930 = vunpack.c.l.b16 %v1834
        %v1931 = vunpack.c.l.b16 %v1835
        %v1932 = vunpack.c.l.b16 %v1836
        %v1933 = vunpack.c.l.b16 %v1837
        %v1934 = vunpack.c.l.b16 %v1838
        %v1935 = vunpack.c.l.b16 %v1839
        %v1936 = vunpack.c.l.b16 %v1840
        %v1937 = vunpack.c.l.b16 %v1841
        %v1938 = vunpack.c.l.b16 %v1842
        %v1939 = vunpack.c.l.b16 %v1843
        %v1940 = vunpack.c.l.b16 %v1844
        %v1941 = vunpack.c.l.b16 %v1845
        %v1942 = vunpack.c.l.b16 %v1846
        %v1943 = vunpack.c.l.b16 %v1847
        %v1944 = vunpack.c.l.b16 %v1848
        %v1945 = vunpack.c.l.b16 %v1849
        %v1946 = vunpack.c.l.b16 %v1850
        %v1947 = vunpack.c.l.b16 %v1851
        %v1948 = vunpack.c.l.b16 %v1852
        %v1949 = vunpack.c.l.b16 %v1853
        %v1950 = vunpack.c.l.b16 %v1854
        %v1951 = vunpack.c.l.b16 %v1855
        %v1952 = vunpack.c.l.b16 %v1856
        %v1953 = vunpack.c.l.b16 %v1857
        %v1954 = vunpack.c.l.b16 %v1858
        %v1955 = vunpack.c.l.b16 %v1859
        %v1956 = vunpack.c.l.b16 %v1860
        %v1957 = vunpack.c.l.b16 %v1861
        %v1958 = vunpack.c.l.b16 %v1862
        %v1959 = vpack.c.b16 %v1928, %v1927
        %v1960 = vpack.c.b16 %v1930, %v1929
        %v1961 = vpack.c.b16 %v1932, %v1931
        %v1962 = vpack.c.b16 %v1934, %v1933
        %v1963 = vpack.c.b16 %v1936, %v1935
        %v1964 = vpack.c.b16 %v1938, %v1937
        %v1965 = vpack.c.b16 %v1940, %v1939
        %v1966 = vpack.c.b16 %v1942, %v1941
        %v1967 = vpack.c.b16 %v1944, %v1943
        %v1968 = vpack.c.b16 %v1946, %v1945
        %v1969 = vpack.c.b16 %v1948, %v1947
        %v1970 = vpack.c.b16 %v1950, %v1949
        %v1971 = vpack.c.b16 %v1952, %v1951
        %v1972 = vpack.c.b16 %v1954, %v1953
        %v1973 = vpack.c.b16 %v1956, %v1955
        %v1974 = vpack.c.b16 %v1958, %v1957
        %v1991 = vunpack.c.l.b16 %v1863
        %v1992 = vunpack.c.l.b16 %v1864
        %v1993 = vunpack.c.l.b16 %v1865
        %v1994 = vunpack.c.l.b16 %v1866
        %v1995 = vunpack.c.l.b16 %v1867
        %v1996 = vunpack.c.l.b16 %v1868
        %v1997 = vunpack.c.l.b16 %v1869
        %v1998 = vunpack.c.l.b16 %v1870
        %v1999 = vunpack.c.l.b16 %v1871
        %v2000 = vunpack.c.l.b16 %v1872
        %v2001 = vunpack.c.l.b16 %v1873
        %v2002 = vunpack.c.l.b16 %v1874
        %v2003 = vunpack.c.l.b16 %v1875
        %v2004 = vunpack.c.l.b16 %v1876
        %v2005 = vunpack.c.l.b16 %v1877
        %v2006 = vunpack.c.l.b16 %v1878
        %v2007 = vpack.c.b16 %v1991, %v1991
        %v2008 = vpack.c.b16 %v1992, %v1992
        %v2009 = vpack.c.b16 %v1993, %v1993
        %v2010 = vpack.c.b16 %v1994, %v1994
        %v2011 = vpack.c.b16 %v1995, %v1995
        %v2012 = vpack.c.b16 %v1996, %v1996
        %v2013 = vpack.c.b16 %v1997, %v1997
        %v2014 = vpack.c.b16 %v1998, %v1998
        %v2015 = vpack.c.b16 %v1999, %v1999
        %v2016 = vpack.c.b16 %v2000, %v2000
        %v2017 = vpack.c.b16 %v2001, %v2001
        %v2018 = vpack.c.b16 %v2002, %v2002
        %v2019 = vpack.c.b16 %v2003, %v2003
        %v2020 = vpack.c.b16 %v2004, %v2004
        %v2021 = vpack.c.b16 %v2005, %v2005
        %v2022 = vpack.c.b16 %v2006, %v2006
        %v2024 = vshrl.u32 %v1959, 16
        %v2026 = vshll.u32 %v1959, 16
        %v2028 = vrot.slane %v2026, 1
        %v2029 = vor.u32 %v2024, %v2028
        %v2031 = vshll.u32 %v2007, 16
        %v2033 = vrot.slane %v2031, 1
        %v2034 = vsel %vm1400, %v2029, %v2033
        %v2036 = vshrl.u32 %v1960, 16
        %v2038 = vshll.u32 %v1960, 16
        %v2040 = vrot.slane %v2038, 1
        %v2041 = vor.u32 %v2036, %v2040
        %v2043 = vshll.u32 %v2008, 16
        %v2045 = vrot.slane %v2043, 1
        %v2046 = vsel %vm1400, %v2041, %v2045
        %v2048 = vshrl.u32 %v1961, 16
        %v2050 = vshll.u32 %v1961, 16
        %v2052 = vrot.slane %v2050, 1
        %v2053 = vor.u32 %v2048, %v2052
        %v2055 = vshll.u32 %v2009, 16
        %v2057 = vrot.slane %v2055, 1
        %v2058 = vsel %vm1400, %v2053, %v2057
        %v2060 = vshrl.u32 %v1962, 16
        %v2062 = vshll.u32 %v1962, 16
        %v2064 = vrot.slane %v2062, 1
        %v2065 = vor.u32 %v2060, %v2064
        %v2067 = vshll.u32 %v2010, 16
        %v2069 = vrot.slane %v2067, 1
        %v2070 = vsel %vm1400, %v2065, %v2069
        %v2072 = vshrl.u32 %v1963, 16
        %v2074 = vshll.u32 %v1963, 16
        %v2076 = vrot.slane %v2074, 1
        %v2077 = vor.u32 %v2072, %v2076
        %v2079 = vshll.u32 %v2011, 16
        %v2081 = vrot.slane %v2079, 1
        %v2082 = vsel %vm1400, %v2077, %v2081
        %v2084 = vshrl.u32 %v1964, 16
        %v2086 = vshll.u32 %v1964, 16
        %v2088 = vrot.slane %v2086, 1
        %v2089 = vor.u32 %v2084, %v2088
        %v2091 = vshll.u32 %v2012, 16
        %v2093 = vrot.slane %v2091, 1
        %v2094 = vsel %vm1400, %v2089, %v2093
        %v2096 = vshrl.u32 %v1965, 16
        %v2098 = vshll.u32 %v1965, 16
        %v2100 = vrot.slane %v2098, 1
        %v2101 = vor.u32 %v2096, %v2100
        %v2103 = vshll.u32 %v2013, 16
        %v2105 = vrot.slane %v2103, 1
        %v2106 = vsel %vm1400, %v2101, %v2105
        %v2108 = vshrl.u32 %v1966, 16
        %v2110 = vshll.u32 %v1966, 16
        %v2112 = vrot.slane %v2110, 1
        %v2113 = vor.u32 %v2108, %v2112
        %v2115 = vshll.u32 %v2014, 16
        %v2117 = vrot.slane %v2115, 1
        %v2118 = vsel %vm1400, %v2113, %v2117
        %v2120 = vshrl.u32 %v1967, 16
        %v2122 = vshll.u32 %v1967, 16
        %v2124 = vrot.slane %v2122, 1
        %v2125 = vor.u32 %v2120, %v2124
        %v2127 = vshll.u32 %v2015, 16
        %v2129 = vrot.slane %v2127, 1
        %v2130 = vsel %vm1400, %v2125, %v2129
        %v2132 = vshrl.u32 %v1968, 16
        %v2134 = vshll.u32 %v1968, 16
        %v2136 = vrot.slane %v2134, 1
        %v2137 = vor.u32 %v2132, %v2136
        %v2139 = vshll.u32 %v2016, 16
        %v2141 = vrot.slane %v2139, 1
        %v2142 = vsel %vm1400, %v2137, %v2141
        %v2144 = vshrl.u32 %v1969, 16
        %v2146 = vshll.u32 %v1969, 16
        %v2148 = vrot.slane %v2146, 1
        %v2149 = vor.u32 %v2144, %v2148
        %v2151 = vshll.u32 %v2017, 16
        %v2153 = vrot.slane %v2151, 1
        %v2154 = vsel %vm1400, %v2149, %v2153
        %v2156 = vshrl.u32 %v1970, 16
        %v2158 = vshll.u32 %v1970, 16
        %v2160 = vrot.slane %v2158, 1
        %v2161 = vor.u32 %v2156, %v2160
        %v2163 = vshll.u32 %v2018, 16
        %v2165 = vrot.slane %v2163, 1
        %v2166 = vsel %vm1400, %v2161, %v2165
        %v2168 = vshrl.u32 %v1971, 16
        %v2170 = vshll.u32 %v1971, 16
        %v2172 = vrot.slane %v2170, 1
        %v2173 = vor.u32 %v2168, %v2172
        %v2175 = vshll.u32 %v2019, 16
        %v2177 = vrot.slane %v2175, 1
        %v2178 = vsel %vm1400, %v2173, %v2177
        %v2180 = vshrl.u32 %v1972, 16
        %v2182 = vshll.u32 %v1972, 16
        %v2184 = vrot.slane %v2182, 1
        %v2185 = vor.u32 %v2180, %v2184
        %v2187 = vshll.u32 %v2020, 16
        %v2189 = vrot.slane %v2187, 1
        %v2190 = vsel %vm1400, %v2185, %v2189
        %v2192 = vshrl.u32 %v1973, 16
        %v2194 = vshll.u32 %v1973, 16
        %v2196 = vrot.slane %v2194, 1
        %v2197 = vor.u32 %v2192, %v2196
        %v2199 = vshll.u32 %v2021, 16
        %v2201 = vrot.slane %v2199, 1
        %v2202 = vsel %vm1400, %v2197, %v2201
        %v2204 = vshrl.u32 %v1974, 16
        %v2206 = vshll.u32 %v1974, 16
        %v2208 = vrot.slane %v2206, 1
        %v2209 = vor.u32 %v2204, %v2208
        %v2211 = vshll.u32 %v2022, 16
        %v2213 = vrot.slane %v2211, 1
        %v2214 = vsel %vm1400, %v2209, %v2213
        %2215 = vrot.lane.b32.xlu0 %v2034, 32
        %v2216 = vpop.permute.xlu0 %2215
        %2217 = vrot.lane.b32.xlu0 %v2046, 32
        %v2218 = vpop.permute.xlu0 %2217
        %2219 = vrot.lane.b32.xlu0 %v2058, 32
        %v2220 = vpop.permute.xlu0 %2219
        %2221 = vrot.lane.b32.xlu0 %v2070, 32
        %v2222 = vpop.permute.xlu0 %2221
        %2223 = vrot.lane.b32.xlu0 %v2082, 32
        %v2224 = vpop.permute.xlu0 %2223
        %2225 = vrot.lane.b32.xlu0 %v2094, 32
        %v2226 = vpop.permute.xlu0 %2225
        %2227 = vrot.lane.b32.xlu0 %v2106, 32
        %v2228 = vpop.permute.xlu0 %2227
        %2229 = vrot.lane.b32.xlu0 %v2118, 32
        %v2230 = vpop.permute.xlu0 %2229
        %2231 = vrot.lane.b32.xlu0 %v2130, 32
        %v2232 = vpop.permute.xlu0 %2231
        %2233 = vrot.lane.b32.xlu0 %v2142, 32
        %v2234 = vpop.permute.xlu0 %2233
        %2235 = vrot.lane.b32.xlu0 %v2154, 32
        %v2236 = vpop.permute.xlu0 %2235
        %2237 = vrot.lane.b32.xlu0 %v2166, 32
        %v2238 = vpop.permute.xlu0 %2237
        %2239 = vrot.lane.b32.xlu0 %v2178, 32
        %v2240 = vpop.permute.xlu0 %2239
        %2241 = vrot.lane.b32.xlu0 %v2190, 32
        %v2242 = vpop.permute.xlu0 %2241
        %2243 = vrot.lane.b32.xlu0 %v2202, 32
        %v2244 = vpop.permute.xlu0 %2243
        %2245 = vrot.lane.b32.xlu0 %v2214, 32
        %v2246 = vpop.permute.xlu0 %2245
        %v2263 = vunpack.c.l.b16 %v1879
        %v2264 = vunpack.c.l.b16 %v1880
        %v2265 = vunpack.c.l.b16 %v1881
        %v2266 = vunpack.c.l.b16 %v1882
        %v2267 = vunpack.c.l.b16 %v1883
        %v2268 = vunpack.c.l.b16 %v1884
        %v2269 = vunpack.c.l.b16 %v1885
        %v2270 = vunpack.c.l.b16 %v1886
        %v2271 = vunpack.c.l.b16 %v1887
        %v2272 = vunpack.c.l.b16 %v1888
        %v2273 = vunpack.c.l.b16 %v1889
        %v2274 = vunpack.c.l.b16 %v1890
        %v2275 = vunpack.c.l.b16 %v1891
        %v2276 = vunpack.c.l.b16 %v1892
        %v2277 = vunpack.c.l.b16 %v1893
        %v2278 = vunpack.c.l.b16 %v1894
        %v2279 = vpack.c.b16 %v1928, %v2263
        %v2280 = vpack.c.b16 %v1930, %v2264
        %v2281 = vpack.c.b16 %v1932, %v2265
        %v2282 = vpack.c.b16 %v1934, %v2266
        %v2283 = vpack.c.b16 %v1936, %v2267
        %v2284 = vpack.c.b16 %v1938, %v2268
        %v2285 = vpack.c.b16 %v1940, %v2269
        %v2286 = vpack.c.b16 %v1942, %v2270
        %v2287 = vpack.c.b16 %v1944, %v2271
        %v2288 = vpack.c.b16 %v1946, %v2272
        %v2289 = vpack.c.b16 %v1948, %v2273
        %v2290 = vpack.c.b16 %v1950, %v2274
        %v2291 = vpack.c.b16 %v1952, %v2275
        %v2292 = vpack.c.b16 %v1954, %v2276
        %v2293 = vpack.c.b16 %v1956, %v2277
        %v2294 = vpack.c.b16 %v1958, %v2278
        %v2295 = vrot.slane %v2279, 1
        %v2296 = vrot.slane %v2007, 1
        %v2297 = vsel %vm1673, %v2295, %v2296
        %v2298 = vrot.slane %v2280, 1
        %v2299 = vrot.slane %v2008, 1
        %v2300 = vsel %vm1673, %v2298, %v2299
        %v2301 = vrot.slane %v2281, 1
        %v2302 = vrot.slane %v2009, 1
        %v2303 = vsel %vm1673, %v2301, %v2302
        %v2304 = vrot.slane %v2282, 1
        %v2305 = vrot.slane %v2010, 1
        %v2306 = vsel %vm1673, %v2304, %v2305
        %v2307 = vrot.slane %v2283, 1
        %v2308 = vrot.slane %v2011, 1
        %v2309 = vsel %vm1673, %v2307, %v2308
        %v2310 = vrot.slane %v2284, 1
        %v2311 = vrot.slane %v2012, 1
        %v2312 = vsel %vm1673, %v2310, %v2311
        %v2313 = vrot.slane %v2285, 1
        %v2314 = vrot.slane %v2013, 1
        %v2315 = vsel %vm1673, %v2313, %v2314
        %v2316 = vrot.slane %v2286, 1
        %v2317 = vrot.slane %v2014, 1
        %v2318 = vsel %vm1673, %v2316, %v2317
        %v2319 = vrot.slane %v2287, 1
        %v2320 = vrot.slane %v2015, 1
        %v2321 = vsel %vm1673, %v2319, %v2320
        %v2322 = vrot.slane %v2288, 1
        %v2323 = vrot.slane %v2016, 1
        %v2324 = vsel %vm1673, %v2322, %v2323
        %v2325 = vrot.slane %v2289, 1
        %v2326 = vrot.slane %v2017, 1
        %v2327 = vsel %vm1673, %v2325, %v2326
        %v2328 = vrot.slane %v2290, 1
        %v2329 = vrot.slane %v2018, 1
        %v2330 = vsel %vm1673, %v2328, %v2329
        %v2331 = vrot.slane %v2291, 1
        %v2332 = vrot.slane %v2019, 1
        %v2333 = vsel %vm1673, %v2331, %v2332
        %v2334 = vrot.slane %v2292, 1
        %v2335 = vrot.slane %v2020, 1
        %v2336 = vsel %vm1673, %v2334, %v2335
        %v2337 = vrot.slane %v2293, 1
        %v2338 = vrot.slane %v2021, 1
        %v2339 = vsel %vm1673, %v2337, %v2338
        %v2340 = vrot.slane %v2294, 1
        %v2341 = vrot.slane %v2022, 1
        %v2342 = vsel %vm1673, %v2340, %v2341
        %2343 = vrot.lane.b32.xlu0 %v2297, 64
        %v2344 = vpop.permute.xlu0 %2343
        %2345 = vrot.lane.b32.xlu0 %v2300, 64
        %v2346 = vpop.permute.xlu0 %2345
        %2347 = vrot.lane.b32.xlu0 %v2303, 64
        %v2348 = vpop.permute.xlu0 %2347
        %2349 = vrot.lane.b32.xlu0 %v2306, 64
        %v2350 = vpop.permute.xlu0 %2349
        %2351 = vrot.lane.b32.xlu0 %v2309, 64
        %v2352 = vpop.permute.xlu0 %2351
        %2353 = vrot.lane.b32.xlu0 %v2312, 64
        %v2354 = vpop.permute.xlu0 %2353
        %2355 = vrot.lane.b32.xlu0 %v2315, 64
        %v2356 = vpop.permute.xlu0 %2355
        %2357 = vrot.lane.b32.xlu0 %v2318, 64
        %v2358 = vpop.permute.xlu0 %2357
        %2359 = vrot.lane.b32.xlu0 %v2321, 64
        %v2360 = vpop.permute.xlu0 %2359
        %2361 = vrot.lane.b32.xlu0 %v2324, 64
        %v2362 = vpop.permute.xlu0 %2361
        %2363 = vrot.lane.b32.xlu0 %v2327, 64
        %v2364 = vpop.permute.xlu0 %2363
        %2365 = vrot.lane.b32.xlu0 %v2330, 64
        %v2366 = vpop.permute.xlu0 %2365
        %2367 = vrot.lane.b32.xlu0 %v2333, 64
        %v2368 = vpop.permute.xlu0 %2367
        %2369 = vrot.lane.b32.xlu0 %v2336, 64
        %v2370 = vpop.permute.xlu0 %2369
        %2371 = vrot.lane.b32.xlu0 %v2339, 64
        %v2372 = vpop.permute.xlu0 %2371
        %2373 = vrot.lane.b32.xlu0 %v2342, 64
        %v2374 = vpop.permute.xlu0 %2373
        %v2376 = vsel %vm1754, %v1959, %v2216
        %v2378 = vsel %vm1754, %v1960, %v2218
        %v2380 = vsel %vm1754, %v1961, %v2220
        %v2382 = vsel %vm1754, %v1962, %v2222
        %v2384 = vsel %vm1754, %v1963, %v2224
        %v2386 = vsel %vm1754, %v1964, %v2226
        %v2388 = vsel %vm1754, %v1965, %v2228
        %v2390 = vsel %vm1754, %v1966, %v2230
        %v2392 = vsel %vm1754, %v1967, %v2232
        %v2394 = vsel %vm1754, %v1968, %v2234
        %v2396 = vsel %vm1754, %v1969, %v2236
        %v2398 = vsel %vm1754, %v1970, %v2238
        %v2400 = vsel %vm1754, %v1971, %v2240
        %v2402 = vsel %vm1754, %v1972, %v2242
        %v2404 = vsel %vm1754, %v1973, %v2244
        %v2406 = vsel %vm1754, %v1974, %v2246
        %v2408 = vsel %vm537, %v2376, %v2344
        %v2410 = vsel %vm537, %v2378, %v2346
        %v2412 = vsel %vm537, %v2380, %v2348
        %v2414 = vsel %vm537, %v2382, %v2350
        %v2416 = vsel %vm537, %v2384, %v2352
        %v2418 = vsel %vm537, %v2386, %v2354
        %v2420 = vsel %vm537, %v2388, %v2356
        %v2422 = vsel %vm537, %v2390, %v2358
        %v2424 = vsel %vm537, %v2392, %v2360
        %v2426 = vsel %vm537, %v2394, %v2362
        %v2428 = vsel %vm537, %v2396, %v2364
        %v2430 = vsel %vm537, %v2398, %v2366
        %v2432 = vsel %vm537, %v2400, %v2368
        %v2434 = vsel %vm537, %v2402, %v2370
        %v2436 = vsel %vm537, %v2404, %v2372
        %v2438 = vsel %vm537, %v2406, %v2374
        %s2439 = scalar_lea.vmem %s3, 48
        %v2440 = vld [vmem:[%s2439] sm:$0xf]
        %v2441 = vld [vmem:[%s2439 + $0x4] sm:$0xf]
        %v2442 = vld [vmem:[%s2439 + $0x8] sm:$0xf]
        %v2443 = vld [vmem:[%s2439 + $0xc] sm:$0xf]
        %v2444 = vld [vmem:[%s2439 + $0x10] sm:$0xf]
        %v2445 = vld [vmem:[%s2439 + $0x14] sm:$0xf]
        %v2446 = vld [vmem:[%s2439 + $0x18] sm:$0xf]
        %v2447 = vld [vmem:[%s2439 + $0x1c] sm:$0xf]
        %v2448 = vld [vmem:[%s2439 + $0x20] sm:$0xf]
        %v2449 = vld [vmem:[%s2439 + $0x24] sm:$0xf]
        %v2450 = vld [vmem:[%s2439 + $0x28] sm:$0xf]
        %v2451 = vld [vmem:[%s2439 + $0x2c] sm:$0xf]
        %v2464 = vunpack.c.l.b16 %v2440
        %v2465 = vunpack.c.l.b16 %v2441
        %v2466 = vunpack.c.l.b16 %v2442
        %v2467 = vunpack.c.l.b16 %v2443
        %v2468 = vunpack.c.l.b16 %v2444
        %v2469 = vunpack.c.l.b16 %v2445
        %v2470 = vunpack.c.l.b16 %v2446
        %v2471 = vunpack.c.l.b16 %v2447
        %v2472 = vunpack.c.l.b16 %v2448
        %v2473 = vunpack.c.l.b16 %v2449
        %v2474 = vunpack.c.l.b16 %v2450
        %v2475 = vunpack.c.l.b16 %v2451
        %v2476 = vpack.c.b16 %v2465, %v2464
        %v2477 = vpack.c.b16 %v2467, %v2466
        %v2478 = vpack.c.b16 %v2469, %v2468
        %v2479 = vpack.c.b16 %v2471, %v2470
        %v2480 = vpack.c.b16 %v2473, %v2472
        %v2481 = vpack.c.b16 %v2475, %v2474
        %vm2488 = vcmask 785408
        %v2489 = vsel %vm2488, %v2408, 0
        %v2491 = vsel %vm2488, %v2410, 0
        %v2493 = vsel %vm2488, %v2412, 0
        %v2495 = vsel %vm2488, %v2414, 0
        %v2497 = vsel %vm2488, %v2416, 0
        %v2499 = vsel %vm2488, %v2418, 0
        %v2501 = vsel %vm2488, %v2420, 0
        %v2503 = vsel %vm2488, %v2422, 0
        %v2505 = vsel %vm2488, %v2424, 0
        %v2507 = vsel %vm2488, %v2426, 0
        %v2509 = vsel %vm2488, %v2428, 0
        %v2511 = vsel %vm2488, %v2430, 0
        %v2513 = vsel %vm2488, %v2432, 0
        %v2515 = vsel %vm2488, %v2434, 0
        %v2517 = vsel %vm2488, %v2436, 0
        %v2519 = vsel %vm2488, %v2438, 0
        %2521 = vmatprep.subr.bf16.mxu0 0
        %2522 = vmatpush1.bf16.msra.mxu0 %v2476
        %2523 = vmatprep.subr.bf16.mxu0 0
        %2524 = vmatpush1.bf16.msra.mxu0 %v2477
        %2525 = vmatprep.subr.bf16.mxu0 0
        %2526 = vmatpush1.bf16.msra.mxu0 %v2478
        %2527 = vmatprep.subr.bf16.mxu0 0
        %2528 = vmatpush1.bf16.msra.mxu0 %v2479
        %2529 = vmatprep.subr.bf16.mxu0 0
        %2530 = vmatpush1.bf16.msra.mxu0 %v2480
        %2531 = vmatprep.subr.bf16.mxu0 0
        %2532 = vmatpush1.bf16.msra.mxu0 %v2481
        %2533 = vmatprep.subr.bf16.mxu0 0
        %2534 = vmatpush1.bf16.msra.mxu0 0
        %2535 = vmatprep.subr.bf16.mxu0 0
        %2536 = vmatpush1.bf16.msra.mxu0 0
        %2537 = vmatprep.subr.bf16.mxu0 0
        %2538 = vmatpush1.bf16.msra.mxu0 0
        %2539 = vmatprep.subr.bf16.mxu0 0
        %2540 = vmatpush1.bf16.msra.mxu0 0
        %2541 = vmatprep.subr.bf16.mxu0 0
        %2542 = vmatpush1.bf16.msra.mxu0 0
        %2543 = vmatprep.subr.bf16.mxu0 0
        %2544 = vmatpush1.bf16.msra.mxu0 0
        %2545 = vmatprep.subr.bf16.mxu0 0
        %2546 = vmatpush1.bf16.msra.mxu0 0
        %2547 = vmatprep.subr.bf16.mxu0 0
        %2548 = vmatpush1.bf16.msra.mxu0 0
        %2549 = vmatprep.subr.bf16.mxu0 0
        %2550 = vmatpush1.bf16.msra.mxu0 0
        %2551 = vmatprep.subr.bf16.mxu0 0
        %2552 = vmatpush1.bf16.msra.mxu0 0
        %2553 = vmatprep.mubr.bf16.mxu0 0
        %2554 = vmatmul.mubr.bf16.gmra.mrb[0].mxu0 %v2489
        %v2555 = vpop.f32.mrb[0].mxu0
        %v2556 = vadd.f32 0.0, %v2555
        %v2557 = vpop.f32.mrb[0].mxu0
        %v2558 = vpop.f32.mrb[0].mxu0
        %v2559 = vadd.f32 0.0, %v2558
        %v2560 = vpop.f32.mrb[0].mxu0
        %2561 = vmatprep.mubr.bf16.mxu0 0
        %2562 = vmatmul.mubr.bf16.gmra.mrb[0].mxu0 %v2491
        %v2563 = vpop.f32.mrb[0].mxu0
        %v2564 = vadd.f32 0.0, %v2563
        %v2565 = vpop.f32.mrb[0].mxu0
        %v2566 = vpop.f32.mrb[0].mxu0
        %v2567 = vadd.f32 0.0, %v2566
        %v2568 = vpop.f32.mrb[0].mxu0
        %2569 = vmatprep.mubr.bf16.mxu0 0
        %2570 = vmatmul.mubr.bf16.gmra.mrb[0].mxu0 %v2493
        %v2571 = vpop.f32.mrb[0].mxu0
        %v2572 = vadd.f32 0.0, %v2571
        %v2573 = vpop.f32.mrb[0].mxu0
        %v2574 = vpop.f32.mrb[0].mxu0
        %v2575 = vadd.f32 0.0, %v2574
        %v2576 = vpop.f32.mrb[0].mxu0
        %2577 = vmatprep.mubr.bf16.mxu0 0
        %2578 = vmatmul.mubr.bf16.gmra.mrb[0].mxu0 %v2495
        %v2579 = vpop.f32.mrb[0].mxu0
        %v2580 = vadd.f32 0.0, %v2579
        %v2581 = vpop.f32.mrb[0].mxu0
        %v2582 = vpop.f32.mrb[0].mxu0
        %v2583 = vadd.f32 0.0, %v2582
        %v2584 = vpop.f32.mrb[0].mxu0
        %2585 = vmatprep.mubr.bf16.mxu0 0
        %2586 = vmatmul.mubr.bf16.gmra.mrb[0].mxu0 %v2497
        %v2587 = vpop.f32.mrb[0].mxu0
        %v2588 = vadd.f32 0.0, %v2587
        %v2589 = vpop.f32.mrb[0].mxu0
        %v2590 = vpop.f32.mrb[0].mxu0
        %v2591 = vadd.f32 0.0, %v2590
        %v2592 = vpop.f32.mrb[0].mxu0
        %2593 = vmatprep.mubr.bf16.mxu0 0
        %2594 = vmatmul.mubr.bf16.gmra.mrb[0].mxu0 %v2499
        %v2595 = vpop.f32.mrb[0].mxu0
        %v2596 = vadd.f32 0.0, %v2595
        %v2597 = vpop.f32.mrb[0].mxu0
        %v2598 = vpop.f32.mrb[0].mxu0
        %v2599 = vadd.f32 0.0, %v2598
        %v2600 = vpop.f32.mrb[0].mxu0
        %2601 = vmatprep.mubr.bf16.mxu0 0
        %2602 = vmatmul.mubr.bf16.gmra.mrb[0].mxu0 %v2501
        %v2603 = vpop.f32.mrb[0].mxu0
        %v2604 = vadd.f32 0.0, %v2603
        %v2605 = vpop.f32.mrb[0].mxu0
        %v2606 = vpop.f32.mrb[0].mxu0
        %v2607 = vadd.f32 0.0, %v2606
        %v2608 = vpop.f32.mrb[0].mxu0
        %2609 = vmatprep.mubr.bf16.mxu0 0
        %2610 = vmatmul.mubr.bf16.gmra.mrb[0].mxu0 %v2503
        %v2611 = vpop.f32.mrb[0].mxu0
        %v2612 = vadd.f32 0.0, %v2611
        %v2613 = vpop.f32.mrb[0].mxu0
        %v2614 = vpop.f32.mrb[0].mxu0
        %v2615 = vadd.f32 0.0, %v2614
        %v2616 = vpop.f32.mrb[0].mxu0
        %2617 = vmatprep.mubr.bf16.mxu0 0
        %2618 = vmatmul.mubr.bf16.gmra.mrb[0].mxu0 %v2505
        %v2619 = vpop.f32.mrb[0].mxu0
        %v2620 = vadd.f32 0.0, %v2619
        %v2621 = vpop.f32.mrb[0].mxu0
        %v2622 = vpop.f32.mrb[0].mxu0
        %v2623 = vadd.f32 0.0, %v2622
        %v2624 = vpop.f32.mrb[0].mxu0
        %2625 = vmatprep.mubr.bf16.mxu0 0
        %2626 = vmatmul.mubr.bf16.gmra.mrb[0].mxu0 %v2507
        %v2627 = vpop.f32.mrb[0].mxu0
        %v2628 = vadd.f32 0.0, %v2627
        %v2629 = vpop.f32.mrb[0].mxu0
        %v2630 = vpop.f32.mrb[0].mxu0
        %v2631 = vadd.f32 0.0, %v2630
        %v2632 = vpop.f32.mrb[0].mxu0
        %2633 = vmatprep.mubr.bf16.mxu0 0
        %2634 = vmatmul.mubr.bf16.gmra.mrb[0].mxu0 %v2509
        %v2635 = vpop.f32.mrb[0].mxu0
        %v2636 = vadd.f32 0.0, %v2635
        %v2637 = vpop.f32.mrb[0].mxu0
        %v2638 = vpop.f32.mrb[0].mxu0
        %v2639 = vadd.f32 0.0, %v2638
        %v2640 = vpop.f32.mrb[0].mxu0
        %2641 = vmatprep.mubr.bf16.mxu0 0
        %2642 = vmatmul.mubr.bf16.gmra.mrb[0].mxu0 %v2511
        %v2643 = vpop.f32.mrb[0].mxu0
        %v2644 = vadd.f32 0.0, %v2643
        %v2645 = vpop.f32.mrb[0].mxu0
        %v2646 = vpop.f32.mrb[0].mxu0
        %v2647 = vadd.f32 0.0, %v2646
        %v2648 = vpop.f32.mrb[0].mxu0
        %2649 = vmatprep.mubr.bf16.mxu0 0
        %2650 = vmatmul.mubr.bf16.gmra.mrb[0].mxu0 %v2513
        %v2651 = vpop.f32.mrb[0].mxu0
        %v2652 = vadd.f32 0.0, %v2651
        %v2653 = vpop.f32.mrb[0].mxu0
        %v2654 = vpop.f32.mrb[0].mxu0
        %v2655 = vadd.f32 0.0, %v2654
        %v2656 = vpop.f32.mrb[0].mxu0
        %2657 = vmatprep.mubr.bf16.mxu0 0
        %2658 = vmatmul.mubr.bf16.gmra.mrb[0].mxu0 %v2515
        %v2659 = vpop.f32.mrb[0].mxu0
        %v2660 = vadd.f32 0.0, %v2659
        %v2661 = vpop.f32.mrb[0].mxu0
        %v2662 = vpop.f32.mrb[0].mxu0
        %v2663 = vadd.f32 0.0, %v2662
        %v2664 = vpop.f32.mrb[0].mxu0
        %2665 = vmatprep.mubr.bf16.mxu0 0
        %2666 = vmatmul.mubr.bf16.gmra.mrb[0].mxu0 %v2517
        %v2667 = vpop.f32.mrb[0].mxu0
        %v2668 = vadd.f32 0.0, %v2667
        %v2669 = vpop.f32.mrb[0].mxu0
        %v2670 = vpop.f32.mrb[0].mxu0
        %v2671 = vadd.f32 0.0, %v2670
        %v2672 = vpop.f32.mrb[0].mxu0
        %2673 = vmatprep.mubr.bf16.mxu0 0
        %2674 = vmatmul.mubr.bf16.gmra.mrb[0].mxu0 %v2519
        %v2675 = vpop.f32.mrb[0].mxu0
        %v2676 = vadd.f32 0.0, %v2675
        %v2677 = vpop.f32.mrb[0].mxu0
        %v2678 = vpop.f32.mrb[0].mxu0
        %v2679 = vadd.f32 0.0, %v2678
        %v2680 = vpop.f32.mrb[0].mxu0
        %2681 = vdwg.mxu0
        %v2694 = vunpack.c.l.b16 %v1819
        %v2695 = vunpack.c.l.b16 %v1820
        %v2696 = vunpack.c.l.b16 %v1821
        %v2697 = vunpack.c.l.b16 %v1822
        %v2698 = vunpack.c.l.b16 %v1823
        %v2699 = vunpack.c.l.b16 %v1824
        %v2700 = vunpack.c.l.b16 %v1825
        %v2701 = vunpack.c.l.b16 %v1826
        %v2702 = vunpack.c.l.b16 %v1827
        %v2703 = vunpack.c.l.b16 %v1828
        %v2704 = vunpack.c.l.b16 %v1829
        %v2705 = vunpack.c.l.b16 %v1830
        %v2706 = vpack.c.b16 %v2695, %v2694
        %v2707 = vpack.c.b16 %v2697, %v2696
        %v2708 = vpack.c.b16 %v2699, %v2698
        %v2709 = vpack.c.b16 %v2701, %v2700
        %v2710 = vpack.c.b16 %v2703, %v2702
        %v2711 = vpack.c.b16 %v2705, %v2704
        %v2718 = vsel %vm2488, %v1788, 0
        %v2720 = vsel %vm2488, %v1790, 0
        %v2722 = vsel %vm2488, %v1792, 0
        %v2724 = vsel %vm2488, %v1794, 0
        %v2726 = vsel %vm2488, %v1796, 0
        %v2728 = vsel %vm2488, %v1798, 0
        %v2730 = vsel %vm2488, %v1800, 0
        %v2732 = vsel %vm2488, %v1802, 0
        %v2734 = vsel %vm2488, %v1804, 0
        %v2736 = vsel %vm2488, %v1806, 0
        %v2738 = vsel %vm2488, %v1808, 0
        %v2740 = vsel %vm2488, %v1810, 0
        %v2742 = vsel %vm2488, %v1812, 0
        %v2744 = vsel %vm2488, %v1814, 0
        %v2746 = vsel %vm2488, %v1816, 0
        %v2748 = vsel %vm2488, %v1818, 0
        %2750 = vmatprep.subr.bf16.mxu0 0
        %2751 = vmatpush1.bf16.msra.mxu0 %v2706
        %2752 = vmatprep.subr.bf16.mxu0 0
        %2753 = vmatpush1.bf16.msra.mxu0 %v2707
        %2754 = vmatprep.subr.bf16.mxu0 0
        %2755 = vmatpush1.bf16.msra.mxu0 %v2708
        %2756 = vmatprep.subr.bf16.mxu0 0
        %2757 = vmatpush1.bf16.msra.mxu0 %v2709
        %2758 = vmatprep.subr.bf16.mxu0 0
        %2759 = vmatpush1.bf16.msra.mxu0 %v2710
        %2760 = vmatprep.subr.bf16.mxu0 0
        %2761 = vmatpush1.bf16.msra.mxu0 %v2711
        %2762 = vmatprep.subr.bf16.mxu0 0
        %2763 = vmatpush1.bf16.msra.mxu0 0
        %2764 = vmatprep.subr.bf16.mxu0 0
        %2765 = vmatpush1.bf16.msra.mxu0 0
        %2766 = vmatprep.subr.bf16.mxu0 0
        %2767 = vmatpush1.bf16.msra.mxu0 0
        %2768 = vmatprep.subr.bf16.mxu0 0
        %2769 = vmatpush1.bf16.msra.mxu0 0
        %2770 = vmatprep.subr.bf16.mxu0 0
        %2771 = vmatpush1.bf16.msra.mxu0 0
        %2772 = vmatprep.subr.bf16.mxu0 0
        %2773 = vmatpush1.bf16.msra.mxu0 0
        %2774 = vmatprep.subr.bf16.mxu0 0
        %2775 = vmatpush1.bf16.msra.mxu0 0
        %2776 = vmatprep.subr.bf16.mxu0 0
        %2777 = vmatpush1.bf16.msra.mxu0 0
        %2778 = vmatprep.subr.bf16.mxu0 0
        %2779 = vmatpush1.bf16.msra.mxu0 0
        %2780 = vmatprep.subr.bf16.mxu0 0
        %2781 = vmatpush1.bf16.msra.mxu0 0
        %2782 = vmatprep.mubr.bf16.mxu0 0
        %2783 = vmatmul.mubr.bf16.gmra.mrb[0].mxu0 %v2718
        %v2784 = vpop.f32.mrb[0].mxu0
        %v2785 = vadd.f32 %v2556, %v2784
        %v2786 = vpop.f32.mrb[0].mxu0
        %v2787 = vpop.f32.mrb[0].mxu0
        %v2788 = vadd.f32 %v2559, %v2787
        %v2789 = vpop.f32.mrb[0].mxu0
        %2790 = vmatprep.mubr.bf16.mxu0 0
        %2791 = vmatmul.mubr.bf16.gmra.mrb[0].mxu0 %v2720
        %v2792 = vpop.f32.mrb[0].mxu0
        %v2793 = vadd.f32 %v2564, %v2792
        %v2794 = vpop.f32.mrb[0].mxu0
        %v2795 = vpop.f32.mrb[0].mxu0
        %v2796 = vadd.f32 %v2567, %v2795
        %v2797 = vpop.f32.mrb[0].mxu0
        %2798 = vmatprep.mubr.bf16.mxu0 0
        %2799 = vmatmul.mubr.bf16.gmra.mrb[0].mxu0 %v2722
        %v2800 = vpop.f32.mrb[0].mxu0
        %v2801 = vadd.f32 %v2572, %v2800
        %v2802 = vpop.f32.mrb[0].mxu0
        %v2803 = vpop.f32.mrb[0].mxu0
        %v2804 = vadd.f32 %v2575, %v2803
        %v2805 = vpop.f32.mrb[0].mxu0
        %2806 = vmatprep.mubr.bf16.mxu0 0
        %2807 = vmatmul.mubr.bf16.gmra.mrb[0].mxu0 %v2724
        %v2808 = vpop.f32.mrb[0].mxu0
        %v2809 = vadd.f32 %v2580, %v2808
        %v2810 = vpop.f32.mrb[0].mxu0
        %v2811 = vpop.f32.mrb[0].mxu0
        %v2812 = vadd.f32 %v2583, %v2811
        %v2813 = vpop.f32.mrb[0].mxu0
        %2814 = vmatprep.mubr.bf16.mxu0 0
        %2815 = vmatmul.mubr.bf16.gmra.mrb[0].mxu0 %v2726
        %v2816 = vpop.f32.mrb[0].mxu0
        %v2817 = vadd.f32 %v2588, %v2816
        %v2818 = vpop.f32.mrb[0].mxu0
        %v2819 = vpop.f32.mrb[0].mxu0
        %v2820 = vadd.f32 %v2591, %v2819
        %v2821 = vpop.f32.mrb[0].mxu0
        %2822 = vmatprep.mubr.bf16.mxu0 0
        %2823 = vmatmul.mubr.bf16.gmra.mrb[0].mxu0 %v2728
        %v2824 = vpop.f32.mrb[0].mxu0
        %v2825 = vadd.f32 %v2596, %v2824
        %v2826 = vpop.f32.mrb[0].mxu0
        %v2827 = vpop.f32.mrb[0].mxu0
        %v2828 = vadd.f32 %v2599, %v2827
        %v2829 = vpop.f32.mrb[0].mxu0
        %2830 = vmatprep.mubr.bf16.mxu0 0
        %2831 = vmatmul.mubr.bf16.gmra.mrb[0].mxu0 %v2730
        %v2832 = vpop.f32.mrb[0].mxu0
        %v2833 = vadd.f32 %v2604, %v2832
        %v2834 = vpop.f32.mrb[0].mxu0
        %v2835 = vpop.f32.mrb[0].mxu0
        %v2836 = vadd.f32 %v2607, %v2835
        %v2837 = vpop.f32.mrb[0].mxu0
        %2838 = vmatprep.mubr.bf16.mxu0 0
        %2839 = vmatmul.mubr.bf16.gmra.mrb[0].mxu0 %v2732
        %v2840 = vpop.f32.mrb[0].mxu0
        %v2841 = vadd.f32 %v2612, %v2840
        %v2842 = vpop.f32.mrb[0].mxu0
        %v2843 = vpop.f32.mrb[0].mxu0
        %v2844 = vadd.f32 %v2615, %v2843
        %v2845 = vpop.f32.mrb[0].mxu0
        %2846 = vmatprep.mubr.bf16.mxu0 0
        %2847 = vmatmul.mubr.bf16.gmra.mrb[0].mxu0 %v2734
        %v2848 = vpop.f32.mrb[0].mxu0
        %v2849 = vadd.f32 %v2620, %v2848
        %v2850 = vpop.f32.mrb[0].mxu0
        %v2851 = vpop.f32.mrb[0].mxu0
        %v2852 = vadd.f32 %v2623, %v2851
        %v2853 = vpop.f32.mrb[0].mxu0
        %2854 = vmatprep.mubr.bf16.mxu0 0
        %2855 = vmatmul.mubr.bf16.gmra.mrb[0].mxu0 %v2736
        %v2856 = vpop.f32.mrb[0].mxu0
        %v2857 = vadd.f32 %v2628, %v2856
        %v2858 = vpop.f32.mrb[0].mxu0
        %v2859 = vpop.f32.mrb[0].mxu0
        %v2860 = vadd.f32 %v2631, %v2859
        %v2861 = vpop.f32.mrb[0].mxu0
        %2862 = vmatprep.mubr.bf16.mxu0 0
        %2863 = vmatmul.mubr.bf16.gmra.mrb[0].mxu0 %v2738
        %v2864 = vpop.f32.mrb[0].mxu0
        %v2865 = vadd.f32 %v2636, %v2864
        %v2866 = vpop.f32.mrb[0].mxu0
        %v2867 = vpop.f32.mrb[0].mxu0
        %v2868 = vadd.f32 %v2639, %v2867
        %v2869 = vpop.f32.mrb[0].mxu0
        %2870 = vmatprep.mubr.bf16.mxu0 0
        %2871 = vmatmul.mubr.bf16.gmra.mrb[0].mxu0 %v2740
        %v2872 = vpop.f32.mrb[0].mxu0
        %v2873 = vadd.f32 %v2644, %v2872
        %v2874 = vpop.f32.mrb[0].mxu0
        %v2875 = vpop.f32.mrb[0].mxu0
        %v2876 = vadd.f32 %v2647, %v2875
        %v2877 = vpop.f32.mrb[0].mxu0
        %2878 = vmatprep.mubr.bf16.mxu0 0
        %2879 = vmatmul.mubr.bf16.gmra.mrb[0].mxu0 %v2742
        %v2880 = vpop.f32.mrb[0].mxu0
        %v2881 = vadd.f32 %v2652, %v2880
        %v2882 = vpop.f32.mrb[0].mxu0
        %v2883 = vpop.f32.mrb[0].mxu0
        %v2884 = vadd.f32 %v2655, %v2883
        %v2885 = vpop.f32.mrb[0].mxu0
        %2886 = vmatprep.mubr.bf16.mxu0 0
        %2887 = vmatmul.mubr.bf16.gmra.mrb[0].mxu0 %v2744
        %v2888 = vpop.f32.mrb[0].mxu0
        %v2889 = vadd.f32 %v2660, %v2888
        %v2890 = vpop.f32.mrb[0].mxu0
        %v2891 = vpop.f32.mrb[0].mxu0
        %v2892 = vadd.f32 %v2663, %v2891
        %v2893 = vpop.f32.mrb[0].mxu0
        %2894 = vmatprep.mubr.bf16.mxu0 0
        %2895 = vmatmul.mubr.bf16.gmra.mrb[0].mxu0 %v2746
        %v2896 = vpop.f32.mrb[0].mxu0
        %v2897 = vadd.f32 %v2668, %v2896
        %v2898 = vpop.f32.mrb[0].mxu0
        %v2899 = vpop.f32.mrb[0].mxu0
        %v2900 = vadd.f32 %v2671, %v2899
        %v2901 = vpop.f32.mrb[0].mxu0
        %2902 = vmatprep.mubr.bf16.mxu0 0
        %2903 = vmatmul.mubr.bf16.gmra.mrb[0].mxu0 %v2748
        %v2904 = vpop.f32.mrb[0].mxu0
        %v2905 = vadd.f32 %v2676, %v2904
        %v2906 = vpop.f32.mrb[0].mxu0
        %v2907 = vpop.f32.mrb[0].mxu0
        %v2908 = vadd.f32 %v2679, %v2907
        %v2909 = vpop.f32.mrb[0].mxu0
        %2910 = vdwg.mxu0
        %s2911 = scalar_lea.vmem [#allocation2], 24
        %v2912 = vld [vmem:[%s2911] sm:$0xf]
        %v2913 = vld [vmem:[%s2911 + $0x4] sm:$0xf]
        %v2914 = vld [vmem:[%s2911 + $0xc] sm:$0xf]
        %v2915 = vld [vmem:[%s2911 + $0x10] sm:$0xf]
        %v2916 = vld [vmem:[%s2911 + $0x18] sm:$0xf]
        %v2917 = vld [vmem:[%s2911 + $0x1c] sm:$0xf]
        %v2918 = vld [vmem:[%s2911 + $0x24] sm:$0xf]
        %v2919 = vld [vmem:[%s2911 + $0x28] sm:$0xf]
        %v2920 = vld [vmem:[%s2911 + $0x30] sm:$0xf]
        %v2921 = vld [vmem:[%s2911 + $0x34] sm:$0xf]
        %v2922 = vld [vmem:[%s2911 + $0x3c] sm:$0xf]
        %v2923 = vld [vmem:[%s2911 + $0x40] sm:$0xf]
        %v2924 = vld [vmem:[%s2911 + $0x48] sm:$0xf]
        %v2925 = vld [vmem:[%s2911 + $0x4c] sm:$0xf]
        %v2926 = vld [vmem:[%s2911 + $0x54] sm:$0xf]
        %v2927 = vld [vmem:[%s2911 + $0x58] sm:$0xf]
        %v2928 = vld [vmem:[%s2911 + $0x60] sm:$0xf]
        %v2929 = vld [vmem:[%s2911 + $0x64] sm:$0xf]
        %v2930 = vld [vmem:[%s2911 + $0x6c] sm:$0xf]
        %v2931 = vld [vmem:[%s2911 + $0x70] sm:$0xf]
        %v2932 = vld [vmem:[%s2911 + $0x78] sm:$0xf]
        %v2933 = vld [vmem:[%s2911 + $0x7c] sm:$0xf]
        %v2934 = vld [vmem:[%s2911 + $0x84] sm:$0xf]
        %v2935 = vld [vmem:[%s2911 + $0x88] sm:$0xf]
        %v2936 = vld [vmem:[%s2911 + $0x90] sm:$0xf]
        %v2937 = vld [vmem:[%s2911 + $0x94] sm:$0xf]
        %v2938 = vld [vmem:[%s2911 + $0x9c] sm:$0xf]
        %v2939 = vld [vmem:[%s2911 + $0xa0] sm:$0xf]
        %v2940 = vld [vmem:[%s2911 + $0xa8] sm:$0xf]
        %v2941 = vld [vmem:[%s2911 + $0xac] sm:$0xf]
        %v2942 = vld [vmem:[%s2911 + $0xb4] sm:$0xf]
        %v2943 = vld [vmem:[%s2911 + $0xb8] sm:$0xf]
        %v2944 = vld [vmem:[%s2911 + $0x8] sm:$0x1]
        %v2945 = vld [vmem:[%s2911 + $0x14] sm:$0x1]
        %v2946 = vld [vmem:[%s2911 + $0x20] sm:$0x1]
        %v2947 = vld [vmem:[%s2911 + $0x2c] sm:$0x1]
        %v2948 = vld [vmem:[%s2911 + $0x38] sm:$0x1]
        %v2949 = vld [vmem:[%s2911 + $0x44] sm:$0x1]
        %v2950 = vld [vmem:[%s2911 + $0x50] sm:$0x1]
        %v2951 = vld [vmem:[%s2911 + $0x5c] sm:$0x1]
        %v2952 = vld [vmem:[%s2911 + $0x68] sm:$0x1]
        %v2953 = vld [vmem:[%s2911 + $0x74] sm:$0x1]
        %v2954 = vld [vmem:[%s2911 + $0x80] sm:$0x1]
        %v2955 = vld [vmem:[%s2911 + $0x8c] sm:$0x1]
        %v2956 = vld [vmem:[%s2911 + $0x98] sm:$0x1]
        %v2957 = vld [vmem:[%s2911 + $0xa4] sm:$0x1]
        %v2958 = vld [vmem:[%s2911 + $0xb0] sm:$0x1]
        %v2959 = vld [vmem:[%s2911 + $0xbc] sm:$0x1]
        %v2960 = vld [vmem:[%s2911] sm:$0xe]
        %v2961 = vld [vmem:[%s2911 + $0xc] sm:$0xe]
        %v2962 = vld [vmem:[%s2911 + $0x18] sm:$0xe]
        %v2963 = vld [vmem:[%s2911 + $0x24] sm:$0xe]
        %v2964 = vld [vmem:[%s2911 + $0x30] sm:$0xe]
        %v2965 = vld [vmem:[%s2911 + $0x3c] sm:$0xe]
        %v2966 = vld [vmem:[%s2911 + $0x48] sm:$0xe]
        %v2967 = vld [vmem:[%s2911 + $0x54] sm:$0xe]
        %v2968 = vld [vmem:[%s2911 + $0x60] sm:$0xe]
        %v2969 = vld [vmem:[%s2911 + $0x6c] sm:$0xe]
        %v2970 = vld [vmem:[%s2911 + $0x78] sm:$0xe]
        %v2971 = vld [vmem:[%s2911 + $0x84] sm:$0xe]
        %v2972 = vld [vmem:[%s2911 + $0x90] sm:$0xe]
        %v2973 = vld [vmem:[%s2911 + $0x9c] sm:$0xe]
        %v2974 = vld [vmem:[%s2911 + $0xa8] sm:$0xe]
        %v2975 = vld [vmem:[%s2911 + $0xb4] sm:$0xe]
        %v3008 = vunpack.c.l.b16 %v2912
        %v3009 = vunpack.c.l.b16 %v2913
        %v3010 = vunpack.c.l.b16 %v2914
        %v3011 = vunpack.c.l.b16 %v2915
        %v3012 = vunpack.c.l.b16 %v2916
        %v3013 = vunpack.c.l.b16 %v2917
        %v3014 = vunpack.c.l.b16 %v2918
        %v3015 = vunpack.c.l.b16 %v2919
        %v3016 = vunpack.c.l.b16 %v2920
        %v3017 = vunpack.c.l.b16 %v2921
        %v3018 = vunpack.c.l.b16 %v2922
        %v3019 = vunpack.c.l.b16 %v2923
        %v3020 = vunpack.c.l.b16 %v2924
        %v3021 = vunpack.c.l.b16 %v2925
        %v3022 = vunpack.c.l.b16 %v2926
        %v3023 = vunpack.c.l.b16 %v2927
        %v3024 = vunpack.c.l.b16 %v2928
        %v3025 = vunpack.c.l.b16 %v2929
        %v3026 = vunpack.c.l.b16 %v2930
        %v3027 = vunpack.c.l.b16 %v2931
        %v3028 = vunpack.c.l.b16 %v2932
        %v3029 = vunpack.c.l.b16 %v2933
        %v3030 = vunpack.c.l.b16 %v2934
        %v3031 = vunpack.c.l.b16 %v2935
        %v3032 = vunpack.c.l.b16 %v2936
        %v3033 = vunpack.c.l.b16 %v2937
        %v3034 = vunpack.c.l.b16 %v2938
        %v3035 = vunpack.c.l.b16 %v2939
        %v3036 = vunpack.c.l.b16 %v2940
        %v3037 = vunpack.c.l.b16 %v2941
        %v3038 = vunpack.c.l.b16 %v2942
        %v3039 = vunpack.c.l.b16 %v2943
        %v3040 = vpack.c.b16 %v3009, %v3008
        %v3041 = vpack.c.b16 %v3011, %v3010
        %v3042 = vpack.c.b16 %v3013, %v3012
        %v3043 = vpack.c.b16 %v3015, %v3014
        %v3044 = vpack.c.b16 %v3017, %v3016
        %v3045 = vpack.c.b16 %v3019, %v3018
        %v3046 = vpack.c.b16 %v3021, %v3020
        %v3047 = vpack.c.b16 %v3023, %v3022
        %v3048 = vpack.c.b16 %v3025, %v3024
        %v3049 = vpack.c.b16 %v3027, %v3026
        %v3050 = vpack.c.b16 %v3029, %v3028
        %v3051 = vpack.c.b16 %v3031, %v3030
        %v3052 = vpack.c.b16 %v3033, %v3032
        %v3053 = vpack.c.b16 %v3035, %v3034
        %v3054 = vpack.c.b16 %v3037, %v3036
        %v3055 = vpack.c.b16 %v3039, %v3038
        %v3072 = vunpack.c.l.b16 %v2944
        %v3073 = vunpack.c.l.b16 %v2945
        %v3074 = vunpack.c.l.b16 %v2946
        %v3075 = vunpack.c.l.b16 %v2947
        %v3076 = vunpack.c.l.b16 %v2948
        %v3077 = vunpack.c.l.b16 %v2949
        %v3078 = vunpack.c.l.b16 %v2950
        %v3079 = vunpack.c.l.b16 %v2951
        %v3080 = vunpack.c.l.b16 %v2952
        %v3081 = vunpack.c.l.b16 %v2953
        %v3082 = vunpack.c.l.b16 %v2954
        %v3083 = vunpack.c.l.b16 %v2955
        %v3084 = vunpack.c.l.b16 %v2956
        %v3085 = vunpack.c.l.b16 %v2957
        %v3086 = vunpack.c.l.b16 %v2958
        %v3087 = vunpack.c.l.b16 %v2959
        %v3088 = vpack.c.b16 %v3072, %v3072
        %v3089 = vpack.c.b16 %v3073, %v3073
        %v3090 = vpack.c.b16 %v3074, %v3074
        %v3091 = vpack.c.b16 %v3075, %v3075
        %v3092 = vpack.c.b16 %v3076, %v3076
        %v3093 = vpack.c.b16 %v3077, %v3077
        %v3094 = vpack.c.b16 %v3078, %v3078
        %v3095 = vpack.c.b16 %v3079, %v3079
        %v3096 = vpack.c.b16 %v3080, %v3080
        %v3097 = vpack.c.b16 %v3081, %v3081
        %v3098 = vpack.c.b16 %v3082, %v3082
        %v3099 = vpack.c.b16 %v3083, %v3083
        %v3100 = vpack.c.b16 %v3084, %v3084
        %v3101 = vpack.c.b16 %v3085, %v3085
        %v3102 = vpack.c.b16 %v3086, %v3086
        %v3103 = vpack.c.b16 %v3087, %v3087
        %v3105 = vshrl.u32 %v3040, 16
        %v3107 = vshll.u32 %v3040, 16
        %v3109 = vrot.slane %v3107, 1
        %v3110 = vor.u32 %v3105, %v3109
        %v3112 = vshll.u32 %v3088, 16
        %v3114 = vrot.slane %v3112, 1
        %v3115 = vsel %vm1400, %v3110, %v3114
        %v3117 = vshrl.u32 %v3041, 16
        %v3119 = vshll.u32 %v3041, 16
        %v3121 = vrot.slane %v3119, 1
        %v3122 = vor.u32 %v3117, %v3121
        %v3124 = vshll.u32 %v3089, 16
        %v3126 = vrot.slane %v3124, 1
        %v3127 = vsel %vm1400, %v3122, %v3126
        %v3129 = vshrl.u32 %v3042, 16
        %v3131 = vshll.u32 %v3042, 16
        %v3133 = vrot.slane %v3131, 1
        %v3134 = vor.u32 %v3129, %v3133
        %v3136 = vshll.u32 %v3090, 16
        %v3138 = vrot.slane %v3136, 1
        %v3139 = vsel %vm1400, %v3134, %v3138
        %v3141 = vshrl.u32 %v3043, 16
        %v3143 = vshll.u32 %v3043, 16
        %v3145 = vrot.slane %v3143, 1
        %v3146 = vor.u32 %v3141, %v3145
        %v3148 = vshll.u32 %v3091, 16
        %v3150 = vrot.slane %v3148, 1
        %v3151 = vsel %vm1400, %v3146, %v3150
        %v3153 = vshrl.u32 %v3044, 16
        %v3155 = vshll.u32 %v3044, 16
        %v3157 = vrot.slane %v3155, 1
        %v3158 = vor.u32 %v3153, %v3157
        %v3160 = vshll.u32 %v3092, 16
        %v3162 = vrot.slane %v3160, 1
        %v3163 = vsel %vm1400, %v3158, %v3162
        %v3165 = vshrl.u32 %v3045, 16
        %v3167 = vshll.u32 %v3045, 16
        %v3169 = vrot.slane %v3167, 1
        %v3170 = vor.u32 %v3165, %v3169
        %v3172 = vshll.u32 %v3093, 16
        %v3174 = vrot.slane %v3172, 1
        %v3175 = vsel %vm1400, %v3170, %v3174
        %v3177 = vshrl.u32 %v3046, 16
        %v3179 = vshll.u32 %v3046, 16
        %v3181 = vrot.slane %v3179, 1
        %v3182 = vor.u32 %v3177, %v3181
        %v3184 = vshll.u32 %v3094, 16
        %v3186 = vrot.slane %v3184, 1
        %v3187 = vsel %vm1400, %v3182, %v3186
        %v3189 = vshrl.u32 %v3047, 16
        %v3191 = vshll.u32 %v3047, 16
        %v3193 = vrot.slane %v3191, 1
        %v3194 = vor.u32 %v3189, %v3193
        %v3196 = vshll.u32 %v3095, 16
        %v3198 = vrot.slane %v3196, 1
        %v3199 = vsel %vm1400, %v3194, %v3198
        %v3201 = vshrl.u32 %v3048, 16
        %v3203 = vshll.u32 %v3048, 16
        %v3205 = vrot.slane %v3203, 1
        %v3206 = vor.u32 %v3201, %v3205
        %v3208 = vshll.u32 %v3096, 16
        %v3210 = vrot.slane %v3208, 1
        %v3211 = vsel %vm1400, %v3206, %v3210
        %v3213 = vshrl.u32 %v3049, 16
        %v3215 = vshll.u32 %v3049, 16
        %v3217 = vrot.slane %v3215, 1
        %v3218 = vor.u32 %v3213, %v3217
        %v3220 = vshll.u32 %v3097, 16
        %v3222 = vrot.slane %v3220, 1
        %v3223 = vsel %vm1400, %v3218, %v3222
        %v3225 = vshrl.u32 %v3050, 16
        %v3227 = vshll.u32 %v3050, 16
        %v3229 = vrot.slane %v3227, 1
        %v3230 = vor.u32 %v3225, %v3229
        %v3232 = vshll.u32 %v3098, 16
        %v3234 = vrot.slane %v3232, 1
        %v3235 = vsel %vm1400, %v3230, %v3234
        %v3237 = vshrl.u32 %v3051, 16
        %v3239 = vshll.u32 %v3051, 16
        %v3241 = vrot.slane %v3239, 1
        %v3242 = vor.u32 %v3237, %v3241
        %v3244 = vshll.u32 %v3099, 16
        %v3246 = vrot.slane %v3244, 1
        %v3247 = vsel %vm1400, %v3242, %v3246
        %v3249 = vshrl.u32 %v3052, 16
        %v3251 = vshll.u32 %v3052, 16
        %v3253 = vrot.slane %v3251, 1
        %v3254 = vor.u32 %v3249, %v3253
        %v3256 = vshll.u32 %v3100, 16
        %v3258 = vrot.slane %v3256, 1
        %v3259 = vsel %vm1400, %v3254, %v3258
        %v3261 = vshrl.u32 %v3053, 16
        %v3263 = vshll.u32 %v3053, 16
        %v3265 = vrot.slane %v3263, 1
        %v3266 = vor.u32 %v3261, %v3265
        %v3268 = vshll.u32 %v3101, 16
        %v3270 = vrot.slane %v3268, 1
        %v3271 = vsel %vm1400, %v3266, %v3270
        %v3273 = vshrl.u32 %v3054, 16
        %v3275 = vshll.u32 %v3054, 16
        %v3277 = vrot.slane %v3275, 1
        %v3278 = vor.u32 %v3273, %v3277
        %v3280 = vshll.u32 %v3102, 16
        %v3282 = vrot.slane %v3280, 1
        %v3283 = vsel %vm1400, %v3278, %v3282
        %v3285 = vshrl.u32 %v3055, 16
        %v3287 = vshll.u32 %v3055, 16
        %v3289 = vrot.slane %v3287, 1
        %v3290 = vor.u32 %v3285, %v3289
        %v3292 = vshll.u32 %v3103, 16
        %v3294 = vrot.slane %v3292, 1
        %v3295 = vsel %vm1400, %v3290, %v3294
        %3296 = vrot.lane.b32.xlu0 %v3115, 32
        %v3297 = vpop.permute.xlu0 %3296
        %3298 = vrot.lane.b32.xlu0 %v3127, 32
        %v3299 = vpop.permute.xlu0 %3298
        %3300 = vrot.lane.b32.xlu0 %v3139, 32
        %v3301 = vpop.permute.xlu0 %3300
        %3302 = vrot.lane.b32.xlu0 %v3151, 32
        %v3303 = vpop.permute.xlu0 %3302
        %3304 = vrot.lane.b32.xlu0 %v3163, 32
        %v3305 = vpop.permute.xlu0 %3304
        %3306 = vrot.lane.b32.xlu0 %v3175, 32
        %v3307 = vpop.permute.xlu0 %3306
        %3308 = vrot.lane.b32.xlu0 %v3187, 32
        %v3309 = vpop.permute.xlu0 %3308
        %3310 = vrot.lane.b32.xlu0 %v3199, 32
        %v3311 = vpop.permute.xlu0 %3310
        %3312 = vrot.lane.b32.xlu0 %v3211, 32
        %v3313 = vpop.permute.xlu0 %3312
        %3314 = vrot.lane.b32.xlu0 %v3223, 32
        %v3315 = vpop.permute.xlu0 %3314
        %3316 = vrot.lane.b32.xlu0 %v3235, 32
        %v3317 = vpop.permute.xlu0 %3316
        %3318 = vrot.lane.b32.xlu0 %v3247, 32
        %v3319 = vpop.permute.xlu0 %3318
        %3320 = vrot.lane.b32.xlu0 %v3259, 32
        %v3321 = vpop.permute.xlu0 %3320
        %3322 = vrot.lane.b32.xlu0 %v3271, 32
        %v3323 = vpop.permute.xlu0 %3322
        %3324 = vrot.lane.b32.xlu0 %v3283, 32
        %v3325 = vpop.permute.xlu0 %3324
        %3326 = vrot.lane.b32.xlu0 %v3295, 32
        %v3327 = vpop.permute.xlu0 %3326
        %v3344 = vunpack.c.l.b16 %v2960
        %v3345 = vunpack.c.l.b16 %v2961
        %v3346 = vunpack.c.l.b16 %v2962
        %v3347 = vunpack.c.l.b16 %v2963
        %v3348 = vunpack.c.l.b16 %v2964
        %v3349 = vunpack.c.l.b16 %v2965
        %v3350 = vunpack.c.l.b16 %v2966
        %v3351 = vunpack.c.l.b16 %v2967
        %v3352 = vunpack.c.l.b16 %v2968
        %v3353 = vunpack.c.l.b16 %v2969
        %v3354 = vunpack.c.l.b16 %v2970
        %v3355 = vunpack.c.l.b16 %v2971
        %v3356 = vunpack.c.l.b16 %v2972
        %v3357 = vunpack.c.l.b16 %v2973
        %v3358 = vunpack.c.l.b16 %v2974
        %v3359 = vunpack.c.l.b16 %v2975
        %v3360 = vpack.c.b16 %v3009, %v3344
        %v3361 = vpack.c.b16 %v3011, %v3345
        %v3362 = vpack.c.b16 %v3013, %v3346
        %v3363 = vpack.c.b16 %v3015, %v3347
        %v3364 = vpack.c.b16 %v3017, %v3348
        %v3365 = vpack.c.b16 %v3019, %v3349
        %v3366 = vpack.c.b16 %v3021, %v3350
        %v3367 = vpack.c.b16 %v3023, %v3351
        %v3368 = vpack.c.b16 %v3025, %v3352
        %v3369 = vpack.c.b16 %v3027, %v3353
        %v3370 = vpack.c.b16 %v3029, %v3354
        %v3371 = vpack.c.b16 %v3031, %v3355
        %v3372 = vpack.c.b16 %v3033, %v3356
        %v3373 = vpack.c.b16 %v3035, %v3357
        %v3374 = vpack.c.b16 %v3037, %v3358
        %v3375 = vpack.c.b16 %v3039, %v3359
        %v3376 = vrot.slane %v3360, 1
        %v3377 = vrot.slane %v3088, 1
        %v3378 = vsel %vm1673, %v3376, %v3377
        %v3379 = vrot.slane %v3361, 1
        %v3380 = vrot.slane %v3089, 1
        %v3381 = vsel %vm1673, %v3379, %v3380
        %v3382 = vrot.slane %v3362, 1
        %v3383 = vrot.slane %v3090, 1
        %v3384 = vsel %vm1673, %v3382, %v3383
        %v3385 = vrot.slane %v3363, 1
        %v3386 = vrot.slane %v3091, 1
        %v3387 = vsel %vm1673, %v3385, %v3386
        %v3388 = vrot.slane %v3364, 1
        %v3389 = vrot.slane %v3092, 1
        %v3390 = vsel %vm1673, %v3388, %v3389
        %v3391 = vrot.slane %v3365, 1
        %v3392 = vrot.slane %v3093, 1
        %v3393 = vsel %vm1673, %v3391, %v3392
        %v3394 = vrot.slane %v3366, 1
        %v3395 = vrot.slane %v3094, 1
        %v3396 = vsel %vm1673, %v3394, %v3395
        %v3397 = vrot.slane %v3367, 1
        %v3398 = vrot.slane %v3095, 1
        %v3399 = vsel %vm1673, %v3397, %v3398
        %v3400 = vrot.slane %v3368, 1
        %v3401 = vrot.slane %v3096, 1
        %v3402 = vsel %vm1673, %v3400, %v3401
        %v3403 = vrot.slane %v3369, 1
        %v3404 = vrot.slane %v3097, 1
        %v3405 = vsel %vm1673, %v3403, %v3404
        %v3406 = vrot.slane %v3370, 1
        %v3407 = vrot.slane %v3098, 1
        %v3408 = vsel %vm1673, %v3406, %v3407
        %v3409 = vrot.slane %v3371, 1
        %v3410 = vrot.slane %v3099, 1
        %v3411 = vsel %vm1673, %v3409, %v3410
        %v3412 = vrot.slane %v3372, 1
        %v3413 = vrot.slane %v3100, 1
        %v3414 = vsel %vm1673, %v3412, %v3413
        %v3415 = vrot.slane %v3373, 1
        %v3416 = vrot.slane %v3101, 1
        %v3417 = vsel %vm1673, %v3415, %v3416
        %v3418 = vrot.slane %v3374, 1
        %v3419 = vrot.slane %v3102, 1
        %v3420 = vsel %vm1673, %v3418, %v3419
        %v3421 = vrot.slane %v3375, 1
        %v3422 = vrot.slane %v3103, 1
        %v3423 = vsel %vm1673, %v3421, %v3422
        %3424 = vrot.lane.b32.xlu0 %v3378, 64
        %v3425 = vpop.permute.xlu0 %3424
        %3426 = vrot.lane.b32.xlu0 %v3381, 64
        %v3427 = vpop.permute.xlu0 %3426
        %3428 = vrot.lane.b32.xlu0 %v3384, 64
        %v3429 = vpop.permute.xlu0 %3428
        %3430 = vrot.lane.b32.xlu0 %v3387, 64
        %v3431 = vpop.permute.xlu0 %3430
        %3432 = vrot.lane.b32.xlu0 %v3390, 64
        %v3433 = vpop.permute.xlu0 %3432
        %3434 = vrot.lane.b32.xlu0 %v3393, 64
        %v3435 = vpop.permute.xlu0 %3434
        %3436 = vrot.lane.b32.xlu0 %v3396, 64
        %v3437 = vpop.permute.xlu0 %3436
        %3438 = vrot.lane.b32.xlu0 %v3399, 64
        %v3439 = vpop.permute.xlu0 %3438
        %3440 = vrot.lane.b32.xlu0 %v3402, 64
        %v3441 = vpop.permute.xlu0 %3440
        %3442 = vrot.lane.b32.xlu0 %v3405, 64
        %v3443 = vpop.permute.xlu0 %3442
        %3444 = vrot.lane.b32.xlu0 %v3408, 64
        %v3445 = vpop.permute.xlu0 %3444
        %3446 = vrot.lane.b32.xlu0 %v3411, 64
        %v3447 = vpop.permute.xlu0 %3446
        %3448 = vrot.lane.b32.xlu0 %v3414, 64
        %v3449 = vpop.permute.xlu0 %3448
        %3450 = vrot.lane.b32.xlu0 %v3417, 64
        %v3451 = vpop.permute.xlu0 %3450
        %3452 = vrot.lane.b32.xlu0 %v3420, 64
        %v3453 = vpop.permute.xlu0 %3452
        %3454 = vrot.lane.b32.xlu0 %v3423, 64
        %v3455 = vpop.permute.xlu0 %3454
        %v3457 = vsel %vm1754, %v3040, %v3297
        %v3459 = vsel %vm1754, %v3041, %v3299
        %v3461 = vsel %vm1754, %v3042, %v3301
        %v3463 = vsel %vm1754, %v3043, %v3303
        %v3465 = vsel %vm1754, %v3044, %v3305
        %v3467 = vsel %vm1754, %v3045, %v3307
        %v3469 = vsel %vm1754, %v3046, %v3309
        %v3471 = vsel %vm1754, %v3047, %v3311
        %v3473 = vsel %vm1754, %v3048, %v3313
        %v3475 = vsel %vm1754, %v3049, %v3315
        %v3477 = vsel %vm1754, %v3050, %v3317
        %v3479 = vsel %vm1754, %v3051, %v3319
        %v3481 = vsel %vm1754, %v3052, %v3321
        %v3483 = vsel %vm1754, %v3053, %v3323
        %v3485 = vsel %vm1754, %v3054, %v3325
        %v3487 = vsel %vm1754, %v3055, %v3327
        %v3489 = vsel %vm537, %v3457, %v3425
        %v3491 = vsel %vm537, %v3459, %v3427
        %v3493 = vsel %vm537, %v3461, %v3429
        %v3495 = vsel %vm537, %v3463, %v3431
        %v3497 = vsel %vm537, %v3465, %v3433
        %v3499 = vsel %vm537, %v3467, %v3435
        %v3501 = vsel %vm537, %v3469, %v3437
        %v3503 = vsel %vm537, %v3471, %v3439
        %v3505 = vsel %vm537, %v3473, %v3441
        %v3507 = vsel %vm537, %v3475, %v3443
        %v3509 = vsel %vm537, %v3477, %v3445
        %v3511 = vsel %vm537, %v3479, %v3447
        %v3513 = vsel %vm537, %v3481, %v3449
        %v3515 = vsel %vm537, %v3483, %v3451
        %v3517 = vsel %vm537, %v3485, %v3453
        %v3519 = vsel %vm537, %v3487, %v3455
        %s3520 = scalar_lea.vmem %s3, 96
        %v3521 = vld [vmem:[%s3520] sm:$0xf]
        %v3522 = vld [vmem:[%s3520 + $0x4] sm:$0xf]
        %v3523 = vld [vmem:[%s3520 + $0x8] sm:$0xf]
        %v3524 = vld [vmem:[%s3520 + $0xc] sm:$0xf]
        %v3525 = vld [vmem:[%s3520 + $0x10] sm:$0xf]
        %v3526 = vld [vmem:[%s3520 + $0x14] sm:$0xf]
        %v3527 = vld [vmem:[%s3520 + $0x18] sm:$0xf]
        %v3528 = vld [vmem:[%s3520 + $0x1c] sm:$0xf]
        %v3529 = vld [vmem:[%s3520 + $0x20] sm:$0xf]
        %v3530 = vld [vmem:[%s3520 + $0x24] sm:$0xf]
        %v3531 = vld [vmem:[%s3520 + $0x28] sm:$0xf]
        %v3532 = vld [vmem:[%s3520 + $0x2c] sm:$0xf]
        %v3545 = vunpack.c.l.b16 %v3521
        %v3546 = vunpack.c.l.b16 %v3522
        %v3547 = vunpack.c.l.b16 %v3523
        %v3548 = vunpack.c.l.b16 %v3524
        %v3549 = vunpack.c.l.b16 %v3525
        %v3550 = vunpack.c.l.b16 %v3526
        %v3551 = vunpack.c.l.b16 %v3527
        %v3552 = vunpack.c.l.b16 %v3528
        %v3553 = vunpack.c.l.b16 %v3529
        %v3554 = vunpack.c.l.b16 %v3530
        %v3555 = vunpack.c.l.b16 %v3531
        %v3556 = vunpack.c.l.b16 %v3532
        %v3557 = vpack.c.b16 %v3546, %v3545
        %v3558 = vpack.c.b16 %v3548, %v3547
        %v3559 = vpack.c.b16 %v3550, %v3549
        %v3560 = vpack.c.b16 %v3552, %v3551
        %v3561 = vpack.c.b16 %v3554, %v3553
        %v3562 = vpack.c.b16 %v3556, %v3555
        %v3569 = vsel %vm2488, %v3489, 0
        %v3571 = vsel %vm2488, %v3491, 0
        %v3573 = vsel %vm2488, %v3493, 0
        %v3575 = vsel %vm2488, %v3495, 0
        %v3577 = vsel %vm2488, %v3497, 0
        %v3579 = vsel %vm2488, %v3499, 0
        %v3581 = vsel %vm2488, %v3501, 0
        %v3583 = vsel %vm2488, %v3503, 0
        %v3585 = vsel %vm2488, %v3505, 0
        %v3587 = vsel %vm2488, %v3507, 0
        %v3589 = vsel %vm2488, %v3509, 0
        %v3591 = vsel %vm2488, %v3511, 0
        %v3593 = vsel %vm2488, %v3513, 0
        %v3595 = vsel %vm2488, %v3515, 0
        %v3597 = vsel %vm2488, %v3517, 0
        %v3599 = vsel %vm2488, %v3519, 0
        %3601 = vmatprep.subr.bf16.mxu0 0
        %3602 = vmatpush1.bf16.msra.mxu0 %v3557
        %3603 = vmatprep.subr.bf16.mxu0 0
        %3604 = vmatpush1.bf16.msra.mxu0 %v3558
        %3605 = vmatprep.subr.bf16.mxu0 0
        %3606 = vmatpush1.bf16.msra.mxu0 %v3559
        %3607 = vmatprep.subr.bf16.mxu0 0
        %3608 = vmatpush1.bf16.msra.mxu0 %v3560
        %3609 = vmatprep.subr.bf16.mxu0 0
        %3610 = vmatpush1.bf16.msra.mxu0 %v3561
        %3611 = vmatprep.subr.bf16.mxu0 0
        %3612 = vmatpush1.bf16.msra.mxu0 %v3562
        %3613 = vmatprep.subr.bf16.mxu0 0
        %3614 = vmatpush1.bf16.msra.mxu0 0
        %3615 = vmatprep.subr.bf16.mxu0 0
        %3616 = vmatpush1.bf16.msra.mxu0 0
        %3617 = vmatprep.subr.bf16.mxu0 0
        %3618 = vmatpush1.bf16.msra.mxu0 0
        %3619 = vmatprep.subr.bf16.mxu0 0
        %3620 = vmatpush1.bf16.msra.mxu0 0
        %3621 = vmatprep.subr.bf16.mxu0 0
        %3622 = vmatpush1.bf16.msra.mxu0 0
        %3623 = vmatprep.subr.bf16.mxu0 0
        %3624 = vmatpush1.bf16.msra.mxu0 0
        %3625 = vmatprep.subr.bf16.mxu0 0
        %3626 = vmatpush1.bf16.msra.mxu0 0
        %3627 = vmatprep.subr.bf16.mxu0 0
        %3628 = vmatpush1.bf16.msra.mxu0 0
        %3629 = vmatprep.subr.bf16.mxu0 0
        %3630 = vmatpush1.bf16.msra.mxu0 0
        %3631 = vmatprep.subr.bf16.mxu0 0
        %3632 = vmatpush1.bf16.msra.mxu0 0
        %3633 = vmatprep.mubr.bf16.mxu0 0
        %3634 = vmatmul.mubr.bf16.gmra.mrb[0].mxu0 %v3569
        %v3635 = vpop.f32.mrb[0].mxu0
        %v3636 = vadd.f32 0.0, %v3635
        %v3637 = vpop.f32.mrb[0].mxu0
        %v3638 = vpop.f32.mrb[0].mxu0
        %v3639 = vadd.f32 0.0, %v3638
        %v3640 = vpop.f32.mrb[0].mxu0
        %3641 = vmatprep.mubr.bf16.mxu0 0
        %3642 = vmatmul.mubr.bf16.gmra.mrb[0].mxu0 %v3571
        %v3643 = vpop.f32.mrb[0].mxu0
        %v3644 = vadd.f32 0.0, %v3643
        %v3645 = vpop.f32.mrb[0].mxu0
        %v3646 = vpop.f32.mrb[0].mxu0
        %v3647 = vadd.f32 0.0, %v3646
        %v3648 = vpop.f32.mrb[0].mxu0
        %3649 = vmatprep.mubr.bf16.mxu0 0
        %3650 = vmatmul.mubr.bf16.gmra.mrb[0].mxu0 %v3573
        %v3651 = vpop.f32.mrb[0].mxu0
        %v3652 = vadd.f32 0.0, %v3651
        %v3653 = vpop.f32.mrb[0].mxu0
        %v3654 = vpop.f32.mrb[0].mxu0
        %v3655 = vadd.f32 0.0, %v3654
        %v3656 = vpop.f32.mrb[0].mxu0
        %3657 = vmatprep.mubr.bf16.mxu0 0
        %3658 = vmatmul.mubr.bf16.gmra.mrb[0].mxu0 %v3575
        %v3659 = vpop.f32.mrb[0].mxu0
        %v3660 = vadd.f32 0.0, %v3659
        %v3661 = vpop.f32.mrb[0].mxu0
        %v3662 = vpop.f32.mrb[0].mxu0
        %v3663 = vadd.f32 0.0, %v3662
        %v3664 = vpop.f32.mrb[0].mxu0
        %3665 = vmatprep.mubr.bf16.mxu0 0
        %3666 = vmatmul.mubr.bf16.gmra.mrb[0].mxu0 %v3577
        %v3667 = vpop.f32.mrb[0].mxu0
        %v3668 = vadd.f32 0.0, %v3667
        %v3669 = vpop.f32.mrb[0].mxu0
        %v3670 = vpop.f32.mrb[0].mxu0
        %v3671 = vadd.f32 0.0, %v3670
        %v3672 = vpop.f32.mrb[0].mxu0
        %3673 = vmatprep.mubr.bf16.mxu0 0
        %3674 = vmatmul.mubr.bf16.gmra.mrb[0].mxu0 %v3579
        %v3675 = vpop.f32.mrb[0].mxu0
        %v3676 = vadd.f32 0.0, %v3675
        %v3677 = vpop.f32.mrb[0].mxu0
        %v3678 = vpop.f32.mrb[0].mxu0
        %v3679 = vadd.f32 0.0, %v3678
        %v3680 = vpop.f32.mrb[0].mxu0
        %3681 = vmatprep.mubr.bf16.mxu0 0
        %3682 = vmatmul.mubr.bf16.gmra.mrb[0].mxu0 %v3581
        %v3683 = vpop.f32.mrb[0].mxu0
        %v3684 = vadd.f32 0.0, %v3683
        %v3685 = vpop.f32.mrb[0].mxu0
        %v3686 = vpop.f32.mrb[0].mxu0
        %v3687 = vadd.f32 0.0, %v3686
        %v3688 = vpop.f32.mrb[0].mxu0
        %3689 = vmatprep.mubr.bf16.mxu0 0
        %3690 = vmatmul.mubr.bf16.gmra.mrb[0].mxu0 %v3583
        %v3691 = vpop.f32.mrb[0].mxu0
        %v3692 = vadd.f32 0.0, %v3691
        %v3693 = vpop.f32.mrb[0].mxu0
        %v3694 = vpop.f32.mrb[0].mxu0
        %v3695 = vadd.f32 0.0, %v3694
        %v3696 = vpop.f32.mrb[0].mxu0
        %3697 = vmatprep.mubr.bf16.mxu0 0
        %3698 = vmatmul.mubr.bf16.gmra.mrb[0].mxu0 %v3585
        %v3699 = vpop.f32.mrb[0].mxu0
        %v3700 = vadd.f32 0.0, %v3699
        %v3701 = vpop.f32.mrb[0].mxu0
        %v3702 = vpop.f32.mrb[0].mxu0
        %v3703 = vadd.f32 0.0, %v3702
        %v3704 = vpop.f32.mrb[0].mxu0
        %3705 = vmatprep.mubr.bf16.mxu0 0
        %3706 = vmatmul.mubr.bf16.gmra.mrb[0].mxu0 %v3587
        %v3707 = vpop.f32.mrb[0].mxu0
        %v3708 = vadd.f32 0.0, %v3707
        %v3709 = vpop.f32.mrb[0].mxu0
        %v3710 = vpop.f32.mrb[0].mxu0
        %v3711 = vadd.f32 0.0, %v3710
        %v3712 = vpop.f32.mrb[0].mxu0
        %3713 = vmatprep.mubr.bf16.mxu0 0
        %3714 = vmatmul.mubr.bf16.gmra.mrb[0].mxu0 %v3589
        %v3715 = vpop.f32.mrb[0].mxu0
        %v3716 = vadd.f32 0.0, %v3715
        %v3717 = vpop.f32.mrb[0].mxu0
        %v3718 = vpop.f32.mrb[0].mxu0
        %v3719 = vadd.f32 0.0, %v3718
        %v3720 = vpop.f32.mrb[0].mxu0
        %3721 = vmatprep.mubr.bf16.mxu0 0
        %3722 = vmatmul.mubr.bf16.gmra.mrb[0].mxu0 %v3591
        %v3723 = vpop.f32.mrb[0].mxu0
        %v3724 = vadd.f32 0.0, %v3723
        %v3725 = vpop.f32.mrb[0].mxu0
        %v3726 = vpop.f32.mrb[0].mxu0
        %v3727 = vadd.f32 0.0, %v3726
        %v3728 = vpop.f32.mrb[0].mxu0
        %3729 = vmatprep.mubr.bf16.mxu0 0
        %3730 = vmatmul.mubr.bf16.gmra.mrb[0].mxu0 %v3593
        %v3731 = vpop.f32.mrb[0].mxu0
        %v3732 = vadd.f32 0.0, %v3731
        %v3733 = vpop.f32.mrb[0].mxu0
        %v3734 = vpop.f32.mrb[0].mxu0
        %v3735 = vadd.f32 0.0, %v3734
        %v3736 = vpop.f32.mrb[0].mxu0
        %3737 = vmatprep.mubr.bf16.mxu0 0
        %3738 = vmatmul.mubr.bf16.gmra.mrb[0].mxu0 %v3595
        %v3739 = vpop.f32.mrb[0].mxu0
        %v3740 = vadd.f32 0.0, %v3739
        %v3741 = vpop.f32.mrb[0].mxu0
        %v3742 = vpop.f32.mrb[0].mxu0
        %v3743 = vadd.f32 0.0, %v3742
        %v3744 = vpop.f32.mrb[0].mxu0
        %3745 = vmatprep.mubr.bf16.mxu0 0
        %3746 = vmatmul.mubr.bf16.gmra.mrb[0].mxu0 %v3597
        %v3747 = vpop.f32.mrb[0].mxu0
        %v3748 = vadd.f32 0.0, %v3747
        %v3749 = vpop.f32.mrb[0].mxu0
        %v3750 = vpop.f32.mrb[0].mxu0
        %v3751 = vadd.f32 0.0, %v3750
        %v3752 = vpop.f32.mrb[0].mxu0
        %3753 = vmatprep.mubr.bf16.mxu0 0
        %3754 = vmatmul.mubr.bf16.gmra.mrb[0].mxu0 %v3599
        %v3755 = vpop.f32.mrb[0].mxu0
        %v3756 = vadd.f32 0.0, %v3755
        %v3757 = vpop.f32.mrb[0].mxu0
        %v3758 = vpop.f32.mrb[0].mxu0
        %v3759 = vadd.f32 0.0, %v3758
        %v3760 = vpop.f32.mrb[0].mxu0
        %3761 = vdwg.mxu0
        %v3762 = vadd.f32 %v2785, %v3636
        %v3763 = vadd.f32 %v2788, %v3639
        %v3764 = vadd.f32 %v2793, %v3644
        %v3765 = vadd.f32 %v2796, %v3647
        %v3766 = vadd.f32 %v2801, %v3652
        %v3767 = vadd.f32 %v2804, %v3655
        %v3768 = vadd.f32 %v2809, %v3660
        %v3769 = vadd.f32 %v2812, %v3663
        %v3770 = vadd.f32 %v2817, %v3668
        %v3771 = vadd.f32 %v2820, %v3671
        %v3772 = vadd.f32 %v2825, %v3676
        %v3773 = vadd.f32 %v2828, %v3679
        %v3774 = vadd.f32 %v2833, %v3684
        %v3775 = vadd.f32 %v2836, %v3687
        %v3776 = vadd.f32 %v2841, %v3692
        %v3777 = vadd.f32 %v2844, %v3695
        %v3778 = vadd.f32 %v2849, %v3700
        %v3779 = vadd.f32 %v2852, %v3703
        %v3780 = vadd.f32 %v2857, %v3708
        %v3781 = vadd.f32 %v2860, %v3711
        %v3782 = vadd.f32 %v2865, %v3716
        %v3783 = vadd.f32 %v2868, %v3719
        %v3784 = vadd.f32 %v2873, %v3724
        %v3785 = vadd.f32 %v2876, %v3727
        %v3786 = vadd.f32 %v2881, %v3732
        %v3787 = vadd.f32 %v2884, %v3735
        %v3788 = vadd.f32 %v2889, %v3740
        %v3789 = vadd.f32 %v2892, %v3743
        %v3790 = vadd.f32 %v2897, %v3748
        %v3791 = vadd.f32 %v2900, %v3751
        %v3792 = vadd.f32 %v2905, %v3756
        %v3793 = vadd.f32 %v2908, %v3759
        %v3794 = vld [vmem:[%s4] sm:$0x1]
        %v3796 = vlaneseq
        %v3797 = vshrl.u32 %v3796, 7
        %v3798 = vsub.s32 0, %v3797
        %v3799 = vrot.slane %v3794, %v3798
        %v3801 = vadd.f32 %v3762, %v3799
        %v3802 = vadd.f32 %v3763, %v3799
        %v3803 = vadd.f32 %v3764, %v3799
        %v3804 = vadd.f32 %v3765, %v3799
        %v3805 = vadd.f32 %v3766, %v3799
        %v3806 = vadd.f32 %v3767, %v3799
        %v3807 = vadd.f32 %v3768, %v3799
        %v3808 = vadd.f32 %v3769, %v3799
        %v3809 = vadd.f32 %v3770, %v3799
        %v3810 = vadd.f32 %v3771, %v3799
        %v3811 = vadd.f32 %v3772, %v3799
        %v3812 = vadd.f32 %v3773, %v3799
        %v3813 = vadd.f32 %v3774, %v3799
        %v3814 = vadd.f32 %v3775, %v3799
        %v3815 = vadd.f32 %v3776, %v3799
        %v3816 = vadd.f32 %v3777, %v3799
        %v3817 = vadd.f32 %v3778, %v3799
        %v3818 = vadd.f32 %v3779, %v3799
        %v3819 = vadd.f32 %v3780, %v3799
        %v3820 = vadd.f32 %v3781, %v3799
        %v3821 = vadd.f32 %v3782, %v3799
        %v3822 = vadd.f32 %v3783, %v3799
        %v3823 = vadd.f32 %v3784, %v3799
        %v3824 = vadd.f32 %v3785, %v3799
        %v3825 = vadd.f32 %v3786, %v3799
        %v3826 = vadd.f32 %v3787, %v3799
        %v3827 = vadd.f32 %v3788, %v3799
        %v3828 = vadd.f32 %v3789, %v3799
        %v3829 = vadd.f32 %v3790, %v3799
        %v3830 = vadd.f32 %v3791, %v3799
        %v3831 = vadd.f32 %v3792, %v3799
        %v3832 = vadd.f32 %v3793, %v3799
        %v3833 = vmax.f32 %v3801, 0.0
        %v3834 = vmax.f32 %v3802, 0.0
        %v3835 = vmax.f32 %v3803, 0.0
        %v3836 = vmax.f32 %v3804, 0.0
        %v3837 = vmax.f32 %v3805, 0.0
        %v3838 = vmax.f32 %v3806, 0.0
        %v3839 = vmax.f32 %v3807, 0.0
        %v3840 = vmax.f32 %v3808, 0.0
        %v3841 = vmax.f32 %v3809, 0.0
        %v3842 = vmax.f32 %v3810, 0.0
        %v3843 = vmax.f32 %v3811, 0.0
        %v3844 = vmax.f32 %v3812, 0.0
        %v3845 = vmax.f32 %v3813, 0.0
        %v3846 = vmax.f32 %v3814, 0.0
        %v3847 = vmax.f32 %v3815, 0.0
        %v3848 = vmax.f32 %v3816, 0.0
        %v3849 = vmax.f32 %v3817, 0.0
        %v3850 = vmax.f32 %v3818, 0.0
        %v3851 = vmax.f32 %v3819, 0.0
        %v3852 = vmax.f32 %v3820, 0.0
        %v3853 = vmax.f32 %v3821, 0.0
        %v3854 = vmax.f32 %v3822, 0.0
        %v3855 = vmax.f32 %v3823, 0.0
        %v3856 = vmax.f32 %v3824, 0.0
        %v3857 = vmax.f32 %v3825, 0.0
        %v3858 = vmax.f32 %v3826, 0.0
        %v3859 = vmax.f32 %v3827, 0.0
        %v3860 = vmax.f32 %v3828, 0.0
        %v3861 = vmax.f32 %v3829, 0.0
        %v3862 = vmax.f32 %v3830, 0.0
        %v3863 = vmax.f32 %v3831, 0.0
        %v3864 = vmax.f32 %v3832, 0.0
        %v3865 = vpack.c.bf16 %v3834, %v3833
        %v3866 = vpack.c.bf16 %v3836, %v3835
        %v3867 = vpack.c.bf16 %v3838, %v3837
        %v3868 = vpack.c.bf16 %v3840, %v3839
        %v3869 = vpack.c.bf16 %v3842, %v3841
        %v3870 = vpack.c.bf16 %v3844, %v3843
        %v3871 = vpack.c.bf16 %v3846, %v3845
        %v3872 = vpack.c.bf16 %v3848, %v3847
        %v3873 = vpack.c.bf16 %v3850, %v3849
        %v3874 = vpack.c.bf16 %v3852, %v3851
        %v3875 = vpack.c.bf16 %v3854, %v3853
        %v3876 = vpack.c.bf16 %v3856, %v3855
        %v3877 = vpack.c.bf16 %v3858, %v3857
        %v3878 = vpack.c.bf16 %v3860, %v3859
        %v3879 = vpack.c.bf16 %v3862, %v3861
        %v3880 = vpack.c.bf16 %v3864, %v3863
        %v3881 = vld [vmem:[%s5] sm:$0xf]
        %v3882 = vld [vmem:[%s5 + $0x4] sm:$0xf]
        %v3883 = vld [vmem:[%s5 + $0x8] sm:$0xf]
        %v3884 = vld [vmem:[%s5 + $0xc] sm:$0xf]
        %v3885 = vld [vmem:[%s6] sm:$0x1]
        %v3887 = vlaneseq
        %v3888 = vshrl.u32 %v3887, 7
        %v3889 = vsub.s32 0, %v3888
        %v3890 = vrot.slane %v3885, %v3889
        %v3896 = vunpack.c.l.b16 %v3881
        %v3897 = vunpack.c.l.b16 %v3882
        %v3898 = vunpack.c.l.b16 %v3883
        %v3899 = vunpack.c.l.b16 %v3884
        %v3900 = vpack.c.b16 %v3897, %v3896
        %v3901 = vpack.c.b16 %v3899, %v3898
        %v3905 = vsel %vm1754, %v3865, 0
        %v3908 = vsel %vm1754, %v3866, 0
        %v3911 = vsel %vm1754, %v3867, 0
        %v3914 = vsel %vm1754, %v3868, 0
        %v3917 = vsel %vm1754, %v3869, 0
        %v3920 = vsel %vm1754, %v3870, 0
        %v3923 = vsel %vm1754, %v3871, 0
        %v3926 = vsel %vm1754, %v3872, 0
        %v3929 = vsel %vm1754, %v3873, 0
        %v3932 = vsel %vm1754, %v3874, 0
        %v3935 = vsel %vm1754, %v3875, 0
        %v3938 = vsel %vm1754, %v3876, 0
        %v3941 = vsel %vm1754, %v3877, 0
        %v3944 = vsel %vm1754, %v3878, 0
        %v3947 = vsel %vm1754, %v3879, 0
        %v3950 = vsel %vm1754, %v3880, 0
        %3952 = vmatprep.subr.bf16.mxu0 0
        %3953 = vmatpush1.bf16.msra.mxu0 %v3900
        %3954 = vmatprep.subr.bf16.mxu0 0
        %3955 = vmatpush1.bf16.msra.mxu0 %v3901
        %3956 = vmatprep.subr.bf16.mxu0 0
        %3957 = vmatpush1.bf16.msra.mxu0 0
        %3958 = vmatprep.subr.bf16.mxu0 0
        %3959 = vmatpush1.bf16.msra.mxu0 0
        %3960 = vmatprep.subr.bf16.mxu0 0
        %3961 = vmatpush1.bf16.msra.mxu0 0
        %3962 = vmatprep.subr.bf16.mxu0 0
        %3963 = vmatpush1.bf16.msra.mxu0 0
        %3964 = vmatprep.subr.bf16.mxu0 0
        %3965 = vmatpush1.bf16.msra.mxu0 0
        %3966 = vmatprep.subr.bf16.mxu0 0
        %3967 = vmatpush1.bf16.msra.mxu0 0
        %3968 = vmatprep.subr.bf16.mxu0 0
        %3969 = vmatpush1.bf16.msra.mxu0 0
        %3970 = vmatprep.subr.bf16.mxu0 0
        %3971 = vmatpush1.bf16.msra.mxu0 0
        %3972 = vmatprep.subr.bf16.mxu0 0
        %3973 = vmatpush1.bf16.msra.mxu0 0
        %3974 = vmatprep.subr.bf16.mxu0 0
        %3975 = vmatpush1.bf16.msra.mxu0 0
        %3976 = vmatprep.subr.bf16.mxu0 0
        %3977 = vmatpush1.bf16.msra.mxu0 0
        %3978 = vmatprep.subr.bf16.mxu0 0
        %3979 = vmatpush1.bf16.msra.mxu0 0
        %3980 = vmatprep.subr.bf16.mxu0 0
        %3981 = vmatpush1.bf16.msra.mxu0 0
        %3982 = vmatprep.subr.bf16.mxu0 0
        %3983 = vmatpush1.bf16.msra.mxu0 0
        %3984 = vmatprep.mubr.bf16.mxu0 0
        %3985 = vmatmul.mubr.bf16.gmra.mrb[0].mxu0 %v3905
        %v3986 = vpop.f32.mrb[0].mxu0
        %v3987 = vadd.f32 %v3890, %v3986
        %v3988 = vpop.f32.mrb[0].mxu0
        %v3989 = vpop.f32.mrb[0].mxu0
        %v3990 = vadd.f32 %v3890, %v3989
        %v3991 = vpop.f32.mrb[0].mxu0
        %3992 = vmatprep.mubr.bf16.mxu0 0
        %3993 = vmatmul.mubr.bf16.gmra.mrb[0].mxu0 %v3908
        %v3994 = vpop.f32.mrb[0].mxu0
        %v3995 = vadd.f32 %v3890, %v3994
        %v3996 = vpop.f32.mrb[0].mxu0
        %v3997 = vpop.f32.mrb[0].mxu0
        %v3998 = vadd.f32 %v3890, %v3997
        %v3999 = vpop.f32.mrb[0].mxu0
        %4000 = vmatprep.mubr.bf16.mxu0 0
        %4001 = vmatmul.mubr.bf16.gmra.mrb[0].mxu0 %v3911
        %v4002 = vpop.f32.mrb[0].mxu0
        %v4003 = vadd.f32 %v3890, %v4002
        %v4004 = vpop.f32.mrb[0].mxu0
        %v4005 = vpop.f32.mrb[0].mxu0
        %v4006 = vadd.f32 %v3890, %v4005
        %v4007 = vpop.f32.mrb[0].mxu0
        %4008 = vmatprep.mubr.bf16.mxu0 0
        %4009 = vmatmul.mubr.bf16.gmra.mrb[0].mxu0 %v3914
        %v4010 = vpop.f32.mrb[0].mxu0
        %v4011 = vadd.f32 %v3890, %v4010
        %v4012 = vpop.f32.mrb[0].mxu0
        %v4013 = vpop.f32.mrb[0].mxu0
        %v4014 = vadd.f32 %v3890, %v4013
        %v4015 = vpop.f32.mrb[0].mxu0
        %4016 = vmatprep.mubr.bf16.mxu0 0
        %4017 = vmatmul.mubr.bf16.gmra.mrb[0].mxu0 %v3917
        %v4018 = vpop.f32.mrb[0].mxu0
        %v4019 = vadd.f32 %v3890, %v4018
        %v4020 = vpop.f32.mrb[0].mxu0
        %v4021 = vpop.f32.mrb[0].mxu0
        %v4022 = vadd.f32 %v3890, %v4021
        %v4023 = vpop.f32.mrb[0].mxu0
        %4024 = vmatprep.mubr.bf16.mxu0 0
        %4025 = vmatmul.mubr.bf16.gmra.mrb[0].mxu0 %v3920
        %v4026 = vpop.f32.mrb[0].mxu0
        %v4027 = vadd.f32 %v3890, %v4026
        %v4028 = vpop.f32.mrb[0].mxu0
        %v4029 = vpop.f32.mrb[0].mxu0
        %v4030 = vadd.f32 %v3890, %v4029
        %v4031 = vpop.f32.mrb[0].mxu0
        %4032 = vmatprep.mubr.bf16.mxu0 0
        %4033 = vmatmul.mubr.bf16.gmra.mrb[0].mxu0 %v3923
        %v4034 = vpop.f32.mrb[0].mxu0
        %v4035 = vadd.f32 %v3890, %v4034
        %v4036 = vpop.f32.mrb[0].mxu0
        %v4037 = vpop.f32.mrb[0].mxu0
        %v4038 = vadd.f32 %v3890, %v4037
        %v4039 = vpop.f32.mrb[0].mxu0
        %4040 = vmatprep.mubr.bf16.mxu0 0
        %4041 = vmatmul.mubr.bf16.gmra.mrb[0].mxu0 %v3926
        %v4042 = vpop.f32.mrb[0].mxu0
        %v4043 = vadd.f32 %v3890, %v4042
        %v4044 = vpop.f32.mrb[0].mxu0
        %v4045 = vpop.f32.mrb[0].mxu0
        %v4046 = vadd.f32 %v3890, %v4045
        %v4047 = vpop.f32.mrb[0].mxu0
        %4048 = vmatprep.mubr.bf16.mxu0 0
        %4049 = vmatmul.mubr.bf16.gmra.mrb[0].mxu0 %v3929
        %v4050 = vpop.f32.mrb[0].mxu0
        %v4051 = vadd.f32 %v3890, %v4050
        %v4052 = vpop.f32.mrb[0].mxu0
        %v4053 = vpop.f32.mrb[0].mxu0
        %v4054 = vadd.f32 %v3890, %v4053
        %v4055 = vpop.f32.mrb[0].mxu0
        %4056 = vmatprep.mubr.bf16.mxu0 0
        %4057 = vmatmul.mubr.bf16.gmra.mrb[0].mxu0 %v3932
        %v4058 = vpop.f32.mrb[0].mxu0
        %v4059 = vadd.f32 %v3890, %v4058
        %v4060 = vpop.f32.mrb[0].mxu0
        %v4061 = vpop.f32.mrb[0].mxu0
        %v4062 = vadd.f32 %v3890, %v4061
        %v4063 = vpop.f32.mrb[0].mxu0
        %4064 = vmatprep.mubr.bf16.mxu0 0
        %4065 = vmatmul.mubr.bf16.gmra.mrb[0].mxu0 %v3935
        %v4066 = vpop.f32.mrb[0].mxu0
        %v4067 = vadd.f32 %v3890, %v4066
        %v4068 = vpop.f32.mrb[0].mxu0
        %v4069 = vpop.f32.mrb[0].mxu0
        %v4070 = vadd.f32 %v3890, %v4069
        %v4071 = vpop.f32.mrb[0].mxu0
        %4072 = vmatprep.mubr.bf16.mxu0 0
        %4073 = vmatmul.mubr.bf16.gmra.mrb[0].mxu0 %v3938
        %v4074 = vpop.f32.mrb[0].mxu0
        %v4075 = vadd.f32 %v3890, %v4074
        %v4076 = vpop.f32.mrb[0].mxu0
        %v4077 = vpop.f32.mrb[0].mxu0
        %v4078 = vadd.f32 %v3890, %v4077
        %v4079 = vpop.f32.mrb[0].mxu0
        %4080 = vmatprep.mubr.bf16.mxu0 0
        %4081 = vmatmul.mubr.bf16.gmra.mrb[0].mxu0 %v3941
        %v4082 = vpop.f32.mrb[0].mxu0
        %v4083 = vadd.f32 %v3890, %v4082
        %v4084 = vpop.f32.mrb[0].mxu0
        %v4085 = vpop.f32.mrb[0].mxu0
        %v4086 = vadd.f32 %v3890, %v4085
        %v4087 = vpop.f32.mrb[0].mxu0
        %4088 = vmatprep.mubr.bf16.mxu0 0
        %4089 = vmatmul.mubr.bf16.gmra.mrb[0].mxu0 %v3944
        %v4090 = vpop.f32.mrb[0].mxu0
        %v4091 = vadd.f32 %v3890, %v4090
        %v4092 = vpop.f32.mrb[0].mxu0
        %v4093 = vpop.f32.mrb[0].mxu0
        %v4094 = vadd.f32 %v3890, %v4093
        %v4095 = vpop.f32.mrb[0].mxu0
        %4096 = vmatprep.mubr.bf16.mxu0 0
        %4097 = vmatmul.mubr.bf16.gmra.mrb[0].mxu0 %v3947
        %v4098 = vpop.f32.mrb[0].mxu0
        %v4099 = vadd.f32 %v3890, %v4098
        %v4100 = vpop.f32.mrb[0].mxu0
        %v4101 = vpop.f32.mrb[0].mxu0
        %v4102 = vadd.f32 %v3890, %v4101
        %v4103 = vpop.f32.mrb[0].mxu0
        %4104 = vmatprep.mubr.bf16.mxu0 0
        %4105 = vmatmul.mubr.bf16.gmra.mrb[0].mxu0 %v3950
        %v4106 = vpop.f32.mrb[0].mxu0
        %v4107 = vadd.f32 %v3890, %v4106
        %v4108 = vpop.f32.mrb[0].mxu0
        %v4109 = vpop.f32.mrb[0].mxu0
        %v4110 = vadd.f32 %v3890, %v4109
        %v4111 = vpop.f32.mrb[0].mxu0
        %4112 = vdwg.mxu0
        %v4113 = vsel %vm1754, %v3833, 0.0
        %v4114 = vsel %vm1754, %v3834, 0.0
        %v4115 = vadd.f32 %v4113, %v4114
        %v4116 = vsel %vm1754, %v3835, 0.0
        %v4117 = vadd.f32 %v4115, %v4116
        %v4118 = vsel %vm1754, %v3836, 0.0
        %v4119 = vadd.f32 %v4117, %v4118
        %v4120 = vsel %vm1754, %v3837, 0.0
        %v4121 = vadd.f32 %v4119, %v4120
        %v4122 = vsel %vm1754, %v3838, 0.0
        %v4123 = vadd.f32 %v4121, %v4122
        %v4124 = vsel %vm1754, %v3839, 0.0
        %v4125 = vadd.f32 %v4123, %v4124
        %v4126 = vsel %vm1754, %v3840, 0.0
        %v4127 = vadd.f32 %v4125, %v4126
        %v4128 = vsel %vm1754, %v3841, 0.0
        %v4129 = vadd.f32 %v4127, %v4128
        %v4130 = vsel %vm1754, %v3842, 0.0
        %v4131 = vadd.f32 %v4129, %v4130
        %v4132 = vsel %vm1754, %v3843, 0.0
        %v4133 = vadd.f32 %v4131, %v4132
        %v4134 = vsel %vm1754, %v3844, 0.0
        %v4135 = vadd.f32 %v4133, %v4134
        %v4136 = vsel %vm1754, %v3845, 0.0
        %v4137 = vadd.f32 %v4135, %v4136
        %v4138 = vsel %vm1754, %v3846, 0.0
        %v4139 = vadd.f32 %v4137, %v4138
        %v4140 = vsel %vm1754, %v3847, 0.0
        %v4141 = vadd.f32 %v4139, %v4140
        %v4142 = vsel %vm1754, %v3848, 0.0
        %v4143 = vadd.f32 %v4141, %v4142
        %v4144 = vsel %vm1754, %v3849, 0.0
        %v4145 = vadd.f32 %v4143, %v4144
        %v4146 = vsel %vm1754, %v3850, 0.0
        %v4147 = vadd.f32 %v4145, %v4146
        %v4148 = vsel %vm1754, %v3851, 0.0
        %v4149 = vadd.f32 %v4147, %v4148
        %v4150 = vsel %vm1754, %v3852, 0.0
        %v4151 = vadd.f32 %v4149, %v4150
        %v4152 = vsel %vm1754, %v3853, 0.0
        %v4153 = vadd.f32 %v4151, %v4152
        %v4154 = vsel %vm1754, %v3854, 0.0
        %v4155 = vadd.f32 %v4153, %v4154
        %v4156 = vsel %vm1754, %v3855, 0.0
        %v4157 = vadd.f32 %v4155, %v4156
        %v4158 = vsel %vm1754, %v3856, 0.0
        %v4159 = vadd.f32 %v4157, %v4158
        %v4160 = vsel %vm1754, %v3857, 0.0
        %v4161 = vadd.f32 %v4159, %v4160
        %v4162 = vsel %vm1754, %v3858, 0.0
        %v4163 = vadd.f32 %v4161, %v4162
        %v4164 = vsel %vm1754, %v3859, 0.0
        %v4165 = vadd.f32 %v4163, %v4164
        %v4166 = vsel %vm1754, %v3860, 0.0
        %v4167 = vadd.f32 %v4165, %v4166
        %v4168 = vsel %vm1754, %v3861, 0.0
        %v4169 = vadd.f32 %v4167, %v4168
        %v4170 = vsel %vm1754, %v3862, 0.0
        %v4171 = vadd.f32 %v4169, %v4170
        %v4172 = vsel %vm1754, %v3863, 0.0
        %v4173 = vadd.f32 %v4171, %v4172
        %v4174 = vsel %vm1754, %v3864, 0.0
        %v4175 = vadd.f32 %v4173, %v4174
        %v4176 = vrot.slane %v4175, 4
        %v4177 = vadd.f32 %v4175, %v4176
        %v4178 = vrot.slane %v4177, 2
        %v4179 = vadd.f32 %v4177, %v4178
        %v4180 = vrot.slane %v4179, 1
        %v4181 = vadd.f32 %v4179, %v4180
        %v4182 = vmul.f32 %v4181, 0.00390625
        %v4183 = vunpack.c.l.bf16 %v3881
        %v4184 = vunpack.c.l.bf16 %v3882
        %v4185 = vunpack.c.l.bf16 %v3883
        %v4186 = vunpack.c.l.bf16 %v3884
        %v4188 = vsel %vm1754, %v4182, 0
        %4190 = vmatprep.subr.mxu0 0.0
        %4191 = vmatpush1.msra.mxu0 %v4183
        %4192 = vmatprep.subr.mxu0 0.0
        %4193 = vmatpush1.msra.mxu0 %v4184
        %4194 = vmatprep.subr.mxu0 0.0
        %4195 = vmatpush1.msra.mxu0 %v4185
        %4196 = vmatprep.subr.mxu0 0.0
        %4197 = vmatpush1.msra.mxu0 %v4186
        %4198 = vmatprep.subr.mxu0 0.0
        %4199 = vmatpush1.msra.mxu0 0.0
        %4200 = vmatprep.subr.mxu0 0.0
        %4201 = vmatpush1.msra.mxu0 0.0
        %4202 = vmatprep.subr.mxu0 0.0
        %4203 = vmatpush1.msra.mxu0 0.0
        %4204 = vmatprep.subr.mxu0 0.0
        %4205 = vmatpush1.msra.mxu0 0.0
        %4206 = vmatprep.subr.mxu0 0.0
        %4207 = vmatpush1.msra.mxu0 0.0
        %4208 = vmatprep.subr.mxu0 0.0
        %4209 = vmatpush1.msra.mxu0 0.0
        %4210 = vmatprep.subr.mxu0 0.0
        %4211 = vmatpush1.msra.mxu0 0.0
        %4212 = vmatprep.subr.mxu0 0.0
        %4213 = vmatpush1.msra.mxu0 0.0
        %4214 = vmatprep.subr.mxu0 0.0
        %4215 = vmatpush1.msra.mxu0 0.0
        %4216 = vmatprep.subr.mxu0 0.0
        %4217 = vmatpush1.msra.mxu0 0.0
        %4218 = vmatprep.subr.mxu0 0.0
        %4219 = vmatpush1.msra.mxu0 0.0
        %4220 = vmatprep.subr.mxu0 0.0
        %4221 = vmatpush1.msra.mxu0 0.0
        %4222 = vmatprep.subr.mxu0 0.0
        %4223 = vmatpush1.msra.mxu0 0.0
        %4224 = vmatprep.subr.mxu0 0.0
        %4225 = vmatpush1.msra.mxu0 0.0
        %4226 = vmatprep.subr.mxu0 0.0
        %4227 = vmatpush1.msra.mxu0 0.0
        %4228 = vmatprep.subr.mxu0 0.0
        %4229 = vmatpush1.msra.mxu0 0.0
        %4230 = vmatprep.subr.mxu0 0.0
        %4231 = vmatpush1.msra.mxu0 0.0
        %4232 = vmatprep.subr.mxu0 0.0
        %4233 = vmatpush1.msra.mxu0 0.0
        %4234 = vmatprep.subr.mxu0 0.0
        %4235 = vmatpush1.msra.mxu0 0.0
        %4236 = vmatprep.subr.mxu0 0.0
        %4237 = vmatpush1.msra.mxu0 0.0
        %4238 = vmatprep.subr.mxu0 0.0
        %4239 = vmatpush1.msra.mxu0 0.0
        %4240 = vmatprep.subr.mxu0 0.0
        %4241 = vmatpush1.msra.mxu0 0.0
        %4242 = vmatprep.subr.mxu0 0.0
        %4243 = vmatpush1.msra.mxu0 0.0
        %4244 = vmatprep.subr.mxu0 0.0
        %4245 = vmatpush1.msra.mxu0 0.0
        %4246 = vmatprep.subr.mxu0 0.0
        %4247 = vmatpush1.msra.mxu0 0.0
        %4248 = vmatprep.subr.mxu0 0.0
        %4249 = vmatpush1.msra.mxu0 0.0
        %4250 = vmatprep.subr.mxu0 0.0
        %4251 = vmatpush1.msra.mxu0 0.0
        %4252 = vmatprep.subr.mxu0 0.0
        %4253 = vmatpush1.msra.mxu0 0.0
        %4254 = vmatprep.mubr.f32.mxu0 0.0
        %4255 = vmatmul.mubr.f32.gmra.mrb[0].mxu0 %v4188
        %v4256 = vpop.f32.mrb[0].mxu0
        %v4257 = vadd.f32 %v3885, %v4256
        %v4258 = vpop.f32.mrb[0].mxu0
        %4259 = vdwg.mxu0
        %v4260 = vld [vmem:[%s7] sm:$0xff]
        %v4261 = vld [vmem:[%s7 + $0x8] sm:$0xff]
        %v4262 = vld [vmem:[%s7 + $0x10] sm:$0xff]
        %v4263 = vld [vmem:[%s7 + $0x18] sm:$0xff]
        %v4264 = vld [vmem:[%s7 + $0x20] sm:$0xff]
        %v4265 = vld [vmem:[%s7 + $0x28] sm:$0xff]
        %v4266 = vld [vmem:[%s7 + $0x30] sm:$0xff]
        %v4267 = vld [vmem:[%s7 + $0x38] sm:$0xff]
        %v4268 = vld [vmem:[%s7 + $0x40] sm:$0xff]
        %v4269 = vld [vmem:[%s7 + $0x48] sm:$0xff]
        %v4270 = vld [vmem:[%s7 + $0x50] sm:$0xff]
        %v4271 = vld [vmem:[%s7 + $0x58] sm:$0xff]
        %v4272 = vld [vmem:[%s7 + $0x60] sm:$0xff]
        %v4273 = vld [vmem:[%s7 + $0x68] sm:$0xff]
        %v4274 = vld [vmem:[%s7 + $0x70] sm:$0xff]
        %v4275 = vld [vmem:[%s7 + $0x78] sm:$0xff]
        %4276 = vmatprep.subr.mxu0 0.0
        %4277 = vmatpush1.msra.mxu0 %v4260
        %4278 = vmatprep.subr.mxu0 0.0
        %4279 = vmatpush1.msra.mxu0 %v4261
        %4280 = vmatprep.subr.mxu0 0.0
        %4281 = vmatpush1.msra.mxu0 %v4262
        %4282 = vmatprep.subr.mxu0 0.0
        %4283 = vmatpush1.msra.mxu0 %v4263
        %4284 = vmatprep.subr.mxu0 0.0
        %4285 = vmatpush1.msra.mxu0 %v4264
        %4286 = vmatprep.subr.mxu0 0.0
        %4287 = vmatpush1.msra.mxu0 %v4265
        %4288 = vmatprep.subr.mxu0 0.0
        %4289 = vmatpush1.msra.mxu0 %v4266
        %4290 = vmatprep.subr.mxu0 0.0
        %4291 = vmatpush1.msra.mxu0 %v4267
        %4292 = vmatprep.subr.mxu0 0.0
        %4293 = vmatpush1.msra.mxu0 %v4268
        %4294 = vmatprep.subr.mxu0 0.0
        %4295 = vmatpush1.msra.mxu0 %v4269
        %4296 = vmatprep.subr.mxu0 0.0
        %4297 = vmatpush1.msra.mxu0 %v4270
        %4298 = vmatprep.subr.mxu0 0.0
        %4299 = vmatpush1.msra.mxu0 %v4271
        %4300 = vmatprep.subr.mxu0 0.0
        %4301 = vmatpush1.msra.mxu0 %v4272
        %4302 = vmatprep.subr.mxu0 0.0
        %4303 = vmatpush1.msra.mxu0 %v4273
        %4304 = vmatprep.subr.mxu0 0.0
        %4305 = vmatpush1.msra.mxu0 %v4274
        %4306 = vmatprep.subr.mxu0 0.0
        %4307 = vmatpush1.msra.mxu0 %v4275
        %4308 = vmatprep.subr.mxu0 0.0
        %4309 = vmatpush1.msra.mxu0 0.0
        %4310 = vmatprep.subr.mxu0 0.0
        %4311 = vmatpush1.msra.mxu0 0.0
        %4312 = vmatprep.subr.mxu0 0.0
        %4313 = vmatpush1.msra.mxu0 0.0
        %4314 = vmatprep.subr.mxu0 0.0
        %4315 = vmatpush1.msra.mxu0 0.0
        %4316 = vmatprep.subr.mxu0 0.0
        %4317 = vmatpush1.msra.mxu0 0.0
        %4318 = vmatprep.subr.mxu0 0.0
        %4319 = vmatpush1.msra.mxu0 0.0
        %4320 = vmatprep.subr.mxu0 0.0
        %4321 = vmatpush1.msra.mxu0 0.0
        %4322 = vmatprep.subr.mxu0 0.0
        %4323 = vmatpush1.msra.mxu0 0.0
        %4324 = vmatprep.subr.mxu0 0.0
        %4325 = vmatpush1.msra.mxu0 0.0
        %4326 = vmatprep.subr.mxu0 0.0
        %4327 = vmatpush1.msra.mxu0 0.0
        %4328 = vmatprep.subr.mxu0 0.0
        %4329 = vmatpush1.msra.mxu0 0.0
        %4330 = vmatprep.subr.mxu0 0.0
        %4331 = vmatpush1.msra.mxu0 0.0
        %4332 = vmatprep.subr.mxu0 0.0
        %4333 = vmatpush1.msra.mxu0 0.0
        %4334 = vmatprep.subr.mxu0 0.0
        %4335 = vmatpush1.msra.mxu0 0.0
        %4336 = vmatprep.subr.mxu0 0.0
        %4337 = vmatpush1.msra.mxu0 0.0
        %4338 = vmatprep.subr.mxu0 0.0
        %4339 = vmatpush1.msra.mxu0 0.0
        %4340 = vmatprep.mubr.f32.mxu0 0.0
        %4341 = vmatmul.mubr.f32.gmra.mrb[0].mxu0 %v4257
        %v4342 = vpop.f32.mrb[0].mxu0
        %v4343 = vadd.f32 0.0, %v4342
        %v4344 = vpop.f32.mrb[0].mxu0
        %4345 = vdwg.mxu0
        %v4346 = vmax.f32 %v4343, 0.0
        %v4347 = vld [vmem:[%s8] sm:$0xff]
        %vm4348 = vcmask 64512
        %v4350 = vsel %vm4348, %v4346, 0
        %4352 = vmatprep.subr.mxu0 0.0
        %4353 = vmatpush1.msra.mxu0 %v4347
        %4354 = vmatprep.subr.mxu0 0.0
        %4355 = vmatpush1.msra.mxu0 0.0
        %4356 = vmatprep.subr.mxu0 0.0
        %4357 = vmatpush1.msra.mxu0 0.0
        %4358 = vmatprep.subr.mxu0 0.0
        %4359 = vmatpush1.msra.mxu0 0.0
        %4360 = vmatprep.subr.mxu0 0.0
        %4361 = vmatpush1.msra.mxu0 0.0
        %4362 = vmatprep.subr.mxu0 0.0
        %4363 = vmatpush1.msra.mxu0 0.0
        %4364 = vmatprep.subr.mxu0 0.0
        %4365 = vmatpush1.msra.mxu0 0.0
        %4366 = vmatprep.subr.mxu0 0.0
        %4367 = vmatpush1.msra.mxu0 0.0
        %4368 = vmatprep.subr.mxu0 0.0
        %4369 = vmatpush1.msra.mxu0 0.0
        %4370 = vmatprep.subr.mxu0 0.0
        %4371 = vmatpush1.msra.mxu0 0.0
        %4372 = vmatprep.subr.mxu0 0.0
        %4373 = vmatpush1.msra.mxu0 0.0
        %4374 = vmatprep.subr.mxu0 0.0
        %4375 = vmatpush1.msra.mxu0 0.0
        %4376 = vmatprep.subr.mxu0 0.0
        %4377 = vmatpush1.msra.mxu0 0.0
        %4378 = vmatprep.subr.mxu0 0.0
        %4379 = vmatpush1.msra.mxu0 0.0
        %4380 = vmatprep.subr.mxu0 0.0
        %4381 = vmatpush1.msra.mxu0 0.0
        %4382 = vmatprep.subr.mxu0 0.0
        %4383 = vmatpush1.msra.mxu0 0.0
        %4384 = vmatprep.subr.mxu0 0.0
        %4385 = vmatpush1.msra.mxu0 0.0
        %4386 = vmatprep.subr.mxu0 0.0
        %4387 = vmatpush1.msra.mxu0 0.0
        %4388 = vmatprep.subr.mxu0 0.0
        %4389 = vmatpush1.msra.mxu0 0.0
        %4390 = vmatprep.subr.mxu0 0.0
        %4391 = vmatpush1.msra.mxu0 0.0
        %4392 = vmatprep.subr.mxu0 0.0
        %4393 = vmatpush1.msra.mxu0 0.0
        %4394 = vmatprep.subr.mxu0 0.0
        %4395 = vmatpush1.msra.mxu0 0.0
        %4396 = vmatprep.subr.mxu0 0.0
        %4397 = vmatpush1.msra.mxu0 0.0
        %4398 = vmatprep.subr.mxu0 0.0
        %4399 = vmatpush1.msra.mxu0 0.0
        %4400 = vmatprep.subr.mxu0 0.0
        %4401 = vmatpush1.msra.mxu0 0.0
        %4402 = vmatprep.subr.mxu0 0.0
        %4403 = vmatpush1.msra.mxu0 0.0
        %4404 = vmatprep.subr.mxu0 0.0
        %4405 = vmatpush1.msra.mxu0 0.0
        %4406 = vmatprep.subr.mxu0 0.0
        %4407 = vmatpush1.msra.mxu0 0.0
        %4408 = vmatprep.subr.mxu0 0.0
        %4409 = vmatpush1.msra.mxu0 0.0
        %4410 = vmatprep.subr.mxu0 0.0
        %4411 = vmatpush1.msra.mxu0 0.0
        %4412 = vmatprep.subr.mxu0 0.0
        %4413 = vmatpush1.msra.mxu0 0.0
        %4414 = vmatprep.subr.mxu0 0.0
        %4415 = vmatpush1.msra.mxu0 0.0
        %4416 = vmatprep.mubr.f32.mxu0 0.0
        %4417 = vmatmul.mubr.f32.gmra.mrb[0].mxu0 %v4350
        %v4418 = vpop.f32.mrb[0].mxu0
        %v4419 = vadd.f32 0.0, %v4418
        %v4420 = vpop.f32.mrb[0].mxu0
        %4421 = vdwg.mxu0
        %v4422 = vxor.u32 %v4419, 2147483648
        %v4423 = vmul.f32 %v4422, 1.442695
        %v4424 = vpow.pop %v4423
        %v4425 = vadd.f32 %v4424, 1.0
        %v4426 = vrcp.pop %v4425
        %v4427 = vmul.f32 1.0, %v4426
        %v4428 = vld [vmem:[%s9] sm:$0xf]
        %v4429 = vld [vmem:[%s9 + $0x4] sm:$0xf]
        %v4430 = vld [vmem:[%s9 + $0x8] sm:$0xf]
        %v4431 = vld [vmem:[%s9 + $0xc] sm:$0xf]
        %v4432 = vld [vmem:[%s9 + $0x10] sm:$0xf]
        %v4433 = vld [vmem:[%s9 + $0x14] sm:$0xf]
        %v4434 = vld [vmem:[%s9 + $0x18] sm:$0xf]
        %v4435 = vld [vmem:[%s9 + $0x1c] sm:$0xf]
        %v4436 = vld [vmem:[%s10] sm:$0x1]
        %v4438 = vlaneseq
        %v4439 = vshrl.u32 %v4438, 7
        %v4440 = vsub.s32 0, %v4439
        %v4441 = vrot.slane %v4436, %v4440
        %v4451 = vunpack.c.l.b16 %v4428
        %v4452 = vunpack.c.l.b16 %v4429
        %v4453 = vunpack.c.l.b16 %v4430
        %v4454 = vunpack.c.l.b16 %v4431
        %v4455 = vunpack.c.l.b16 %v4432
        %v4456 = vunpack.c.l.b16 %v4433
        %v4457 = vunpack.c.l.b16 %v4434
        %v4458 = vunpack.c.l.b16 %v4435
        %v4459 = vpack.c.b16 %v4452, %v4451
        %v4460 = vpack.c.b16 %v4454, %v4453
        %v4461 = vpack.c.b16 %v4456, %v4455
        %v4462 = vpack.c.b16 %v4458, %v4457
        %4467 = vmatprep.subr.bf16.mxu0 0
        %4468 = vmatpush1.bf16.msra.mxu0 %v4459
        %4469 = vmatprep.subr.bf16.mxu0 0
        %4470 = vmatpush1.bf16.msra.mxu0 %v4460
        %4471 = vmatprep.subr.bf16.mxu0 0
        %4472 = vmatpush1.bf16.msra.mxu0 %v4461
        %4473 = vmatprep.subr.bf16.mxu0 0
        %4474 = vmatpush1.bf16.msra.mxu0 %v4462
        %4475 = vmatprep.subr.bf16.mxu0 0
        %4476 = vmatpush1.bf16.msra.mxu0 0
        %4477 = vmatprep.subr.bf16.mxu0 0
        %4478 = vmatpush1.bf16.msra.mxu0 0
        %4479 = vmatprep.subr.bf16.mxu0 0
        %4480 = vmatpush1.bf16.msra.mxu0 0
        %4481 = vmatprep.subr.bf16.mxu0 0
        %4482 = vmatpush1.bf16.msra.mxu0 0
        %4483 = vmatprep.subr.bf16.mxu0 0
        %4484 = vmatpush1.bf16.msra.mxu0 0
        %4485 = vmatprep.subr.bf16.mxu0 0
        %4486 = vmatpush1.bf16.msra.mxu0 0
        %4487 = vmatprep.subr.bf16.mxu0 0
        %4488 = vmatpush1.bf16.msra.mxu0 0
        %4489 = vmatprep.subr.bf16.mxu0 0
        %4490 = vmatpush1.bf16.msra.mxu0 0
        %4491 = vmatprep.subr.bf16.mxu0 0
        %4492 = vmatpush1.bf16.msra.mxu0 0
        %4493 = vmatprep.subr.bf16.mxu0 0
        %4494 = vmatpush1.bf16.msra.mxu0 0
        %4495 = vmatprep.subr.bf16.mxu0 0
        %4496 = vmatpush1.bf16.msra.mxu0 0
        %4497 = vmatprep.subr.bf16.mxu0 0
        %4498 = vmatpush1.bf16.msra.mxu0 0
        %4499 = vmatprep.mubr.bf16.mxu0 0
        %4500 = vmatmul.mubr.bf16.gmra.mrb[0].mxu0 %v539
        %v4501 = vpop.f32.mrb[0].mxu0
        %v4502 = vadd.f32 %v4441, %v4501
        %v4503 = vpop.f32.mrb[0].mxu0
        %v4504 = vpop.f32.mrb[0].mxu0
        %v4505 = vadd.f32 %v4441, %v4504
        %v4506 = vpop.f32.mrb[0].mxu0
        %4507 = vmatprep.mubr.bf16.mxu0 0
        %4508 = vmatmul.mubr.bf16.gmra.mrb[0].mxu0 %v542
        %v4509 = vpop.f32.mrb[0].mxu0
        %v4510 = vadd.f32 %v4441, %v4509
        %v4511 = vpop.f32.mrb[0].mxu0
        %v4512 = vpop.f32.mrb[0].mxu0
        %v4513 = vadd.f32 %v4441, %v4512
        %v4514 = vpop.f32.mrb[0].mxu0
        %4515 = vmatprep.mubr.bf16.mxu0 0
        %4516 = vmatmul.mubr.bf16.gmra.mrb[0].mxu0 %v545
        %v4517 = vpop.f32.mrb[0].mxu0
        %v4518 = vadd.f32 %v4441, %v4517
        %v4519 = vpop.f32.mrb[0].mxu0
        %v4520 = vpop.f32.mrb[0].mxu0
        %v4521 = vadd.f32 %v4441, %v4520
        %v4522 = vpop.f32.mrb[0].mxu0
        %4523 = vmatprep.mubr.bf16.mxu0 0
        %4524 = vmatmul.mubr.bf16.gmra.mrb[0].mxu0 %v548
        %v4525 = vpop.f32.mrb[0].mxu0
        %v4526 = vadd.f32 %v4441, %v4525
        %v4527 = vpop.f32.mrb[0].mxu0
        %v4528 = vpop.f32.mrb[0].mxu0
        %v4529 = vadd.f32 %v4441, %v4528
        %v4530 = vpop.f32.mrb[0].mxu0
        %4531 = vmatprep.mubr.bf16.mxu0 0
        %4532 = vmatmul.mubr.bf16.gmra.mrb[0].mxu0 %v551
        %v4533 = vpop.f32.mrb[0].mxu0
        %v4534 = vadd.f32 %v4441, %v4533
        %v4535 = vpop.f32.mrb[0].mxu0
        %v4536 = vpop.f32.mrb[0].mxu0
        %v4537 = vadd.f32 %v4441, %v4536
        %v4538 = vpop.f32.mrb[0].mxu0
        %4539 = vmatprep.mubr.bf16.mxu0 0
        %4540 = vmatmul.mubr.bf16.gmra.mrb[0].mxu0 %v554
        %v4541 = vpop.f32.mrb[0].mxu0
        %v4542 = vadd.f32 %v4441, %v4541
        %v4543 = vpop.f32.mrb[0].mxu0
        %v4544 = vpop.f32.mrb[0].mxu0
        %v4545 = vadd.f32 %v4441, %v4544
        %v4546 = vpop.f32.mrb[0].mxu0
        %4547 = vmatprep.mubr.bf16.mxu0 0
        %4548 = vmatmul.mubr.bf16.gmra.mrb[0].mxu0 %v557
        %v4549 = vpop.f32.mrb[0].mxu0
        %v4550 = vadd.f32 %v4441, %v4549
        %v4551 = vpop.f32.mrb[0].mxu0
        %v4552 = vpop.f32.mrb[0].mxu0
        %v4553 = vadd.f32 %v4441, %v4552
        %v4554 = vpop.f32.mrb[0].mxu0
        %4555 = vmatprep.mubr.bf16.mxu0 0
        %4556 = vmatmul.mubr.bf16.gmra.mrb[0].mxu0 %v560
        %v4557 = vpop.f32.mrb[0].mxu0
        %v4558 = vadd.f32 %v4441, %v4557
        %v4559 = vpop.f32.mrb[0].mxu0
        %v4560 = vpop.f32.mrb[0].mxu0
        %v4561 = vadd.f32 %v4441, %v4560
        %v4562 = vpop.f32.mrb[0].mxu0
        %4563 = vmatprep.mubr.bf16.mxu0 0
        %4564 = vmatmul.mubr.bf16.gmra.mrb[0].mxu0 %v563
        %v4565 = vpop.f32.mrb[0].mxu0
        %v4566 = vadd.f32 %v4441, %v4565
        %v4567 = vpop.f32.mrb[0].mxu0
        %v4568 = vpop.f32.mrb[0].mxu0
        %v4569 = vadd.f32 %v4441, %v4568
        %v4570 = vpop.f32.mrb[0].mxu0
        %4571 = vmatprep.mubr.bf16.mxu0 0
        %4572 = vmatmul.mubr.bf16.gmra.mrb[0].mxu0 %v566
        %v4573 = vpop.f32.mrb[0].mxu0
        %v4574 = vadd.f32 %v4441, %v4573
        %v4575 = vpop.f32.mrb[0].mxu0
        %v4576 = vpop.f32.mrb[0].mxu0
        %v4577 = vadd.f32 %v4441, %v4576
        %v4578 = vpop.f32.mrb[0].mxu0
        %4579 = vmatprep.mubr.bf16.mxu0 0
        %4580 = vmatmul.mubr.bf16.gmra.mrb[0].mxu0 %v569
        %v4581 = vpop.f32.mrb[0].mxu0
        %v4582 = vadd.f32 %v4441, %v4581
        %v4583 = vpop.f32.mrb[0].mxu0
        %v4584 = vpop.f32.mrb[0].mxu0
        %v4585 = vadd.f32 %v4441, %v4584
        %v4586 = vpop.f32.mrb[0].mxu0
        %4587 = vmatprep.mubr.bf16.mxu0 0
        %4588 = vmatmul.mubr.bf16.gmra.mrb[0].mxu0 %v572
        %v4589 = vpop.f32.mrb[0].mxu0
        %v4590 = vadd.f32 %v4441, %v4589
        %v4591 = vpop.f32.mrb[0].mxu0
        %v4592 = vpop.f32.mrb[0].mxu0
        %v4593 = vadd.f32 %v4441, %v4592
        %v4594 = vpop.f32.mrb[0].mxu0
        %4595 = vmatprep.mubr.bf16.mxu0 0
        %4596 = vmatmul.mubr.bf16.gmra.mrb[0].mxu0 %v575
        %v4597 = vpop.f32.mrb[0].mxu0
        %v4598 = vadd.f32 %v4441, %v4597
        %v4599 = vpop.f32.mrb[0].mxu0
        %v4600 = vpop.f32.mrb[0].mxu0
        %v4601 = vadd.f32 %v4441, %v4600
        %v4602 = vpop.f32.mrb[0].mxu0
        %4603 = vmatprep.mubr.bf16.mxu0 0
        %4604 = vmatmul.mubr.bf16.gmra.mrb[0].mxu0 %v578
        %v4605 = vpop.f32.mrb[0].mxu0
        %v4606 = vadd.f32 %v4441, %v4605
        %v4607 = vpop.f32.mrb[0].mxu0
        %v4608 = vpop.f32.mrb[0].mxu0
        %v4609 = vadd.f32 %v4441, %v4608
        %v4610 = vpop.f32.mrb[0].mxu0
        %4611 = vmatprep.mubr.bf16.mxu0 0
        %4612 = vmatmul.mubr.bf16.gmra.mrb[0].mxu0 %v581
        %v4613 = vpop.f32.mrb[0].mxu0
        %v4614 = vadd.f32 %v4441, %v4613
        %v4615 = vpop.f32.mrb[0].mxu0
        %v4616 = vpop.f32.mrb[0].mxu0
        %v4617 = vadd.f32 %v4441, %v4616
        %v4618 = vpop.f32.mrb[0].mxu0
        %4619 = vmatprep.mubr.bf16.mxu0 0
        %4620 = vmatmul.mubr.bf16.gmra.mrb[0].mxu0 %v584
        %v4621 = vpop.f32.mrb[0].mxu0
        %v4622 = vadd.f32 %v4441, %v4621
        %v4623 = vpop.f32.mrb[0].mxu0
        %v4624 = vpop.f32.mrb[0].mxu0
        %v4625 = vadd.f32 %v4441, %v4624
        %v4626 = vpop.f32.mrb[0].mxu0
        %4627 = vdwg.mxu0
        %v4628 = vlaneseq
        %v4629 = vshrl.u32 %v4628, 7
        %v4630 = vsub.s32 0, %v4629
        %v4631 = vrot.slane %v4427, %v4630
        %v4632 = vmul.f32 %v3987, %v4631
        %v4633 = vmul.f32 %v3990, %v4631
        %v4634 = vmul.f32 %v3995, %v4631
        %v4635 = vmul.f32 %v3998, %v4631
        %v4636 = vmul.f32 %v4003, %v4631
        %v4637 = vmul.f32 %v4006, %v4631
        %v4638 = vmul.f32 %v4011, %v4631
        %v4639 = vmul.f32 %v4014, %v4631
        %v4640 = vmul.f32 %v4019, %v4631
        %v4641 = vmul.f32 %v4022, %v4631
        %v4642 = vmul.f32 %v4027, %v4631
        %v4643 = vmul.f32 %v4030, %v4631
        %v4644 = vmul.f32 %v4035, %v4631
        %v4645 = vmul.f32 %v4038, %v4631
        %v4646 = vmul.f32 %v4043, %v4631
        %v4647 = vmul.f32 %v4046, %v4631
        %v4648 = vmul.f32 %v4051, %v4631
        %v4649 = vmul.f32 %v4054, %v4631
        %v4650 = vmul.f32 %v4059, %v4631
        %v4651 = vmul.f32 %v4062, %v4631
        %v4652 = vmul.f32 %v4067, %v4631
        %v4653 = vmul.f32 %v4070, %v4631
        %v4654 = vmul.f32 %v4075, %v4631
        %v4655 = vmul.f32 %v4078, %v4631
        %v4656 = vmul.f32 %v4083, %v4631
        %v4657 = vmul.f32 %v4086, %v4631
        %v4658 = vmul.f32 %v4091, %v4631
        %v4659 = vmul.f32 %v4094, %v4631
        %v4660 = vmul.f32 %v4099, %v4631
        %v4661 = vmul.f32 %v4102, %v4631
        %v4662 = vmul.f32 %v4107, %v4631
        %v4663 = vmul.f32 %v4110, %v4631
        %v4664 = vadd.f32 %v4632, %v4502
        %v4665 = vadd.f32 %v4633, %v4505
        %v4666 = vadd.f32 %v4634, %v4510
        %v4667 = vadd.f32 %v4635, %v4513
        %v4668 = vadd.f32 %v4636, %v4518
        %v4669 = vadd.f32 %v4637, %v4521
        %v4670 = vadd.f32 %v4638, %v4526
        %v4671 = vadd.f32 %v4639, %v4529
        %v4672 = vadd.f32 %v4640, %v4534
        %v4673 = vadd.f32 %v4641, %v4537
        %v4674 = vadd.f32 %v4642, %v4542
        %v4675 = vadd.f32 %v4643, %v4545
        %v4676 = vadd.f32 %v4644, %v4550
        %v4677 = vadd.f32 %v4645, %v4553
        %v4678 = vadd.f32 %v4646, %v4558
        %v4679 = vadd.f32 %v4647, %v4561
        %v4680 = vadd.f32 %v4648, %v4566
        %v4681 = vadd.f32 %v4649, %v4569
        %v4682 = vadd.f32 %v4650, %v4574
        %v4683 = vadd.f32 %v4651, %v4577
        %v4684 = vadd.f32 %v4652, %v4582
        %v4685 = vadd.f32 %v4653, %v4585
        %v4686 = vadd.f32 %v4654, %v4590
        %v4687 = vadd.f32 %v4655, %v4593
        %v4688 = vadd.f32 %v4656, %v4598
        %v4689 = vadd.f32 %v4657, %v4601
        %v4690 = vadd.f32 %v4658, %v4606
        %v4691 = vadd.f32 %v4659, %v4609
        %v4692 = vadd.f32 %v4660, %v4614
        %v4693 = vadd.f32 %v4661, %v4617
        %v4694 = vadd.f32 %v4662, %v4622
        %v4695 = vadd.f32 %v4663, %v4625
        %v4696 = vmax.f32 %v4664, 0.0
        %v4697 = vmax.f32 %v4665, 0.0
        %v4698 = vmax.f32 %v4666, 0.0
        %v4699 = vmax.f32 %v4667, 0.0
        %v4700 = vmax.f32 %v4668, 0.0
        %v4701 = vmax.f32 %v4669, 0.0
        %v4702 = vmax.f32 %v4670, 0.0
        %v4703 = vmax.f32 %v4671, 0.0
        %v4704 = vmax.f32 %v4672, 0.0
        %v4705 = vmax.f32 %v4673, 0.0
        %v4706 = vmax.f32 %v4674, 0.0
        %v4707 = vmax.f32 %v4675, 0.0
        %v4708 = vmax.f32 %v4676, 0.0
        %v4709 = vmax.f32 %v4677, 0.0
        %v4710 = vmax.f32 %v4678, 0.0
        %v4711 = vmax.f32 %v4679, 0.0
        %v4712 = vmax.f32 %v4680, 0.0
        %v4713 = vmax.f32 %v4681, 0.0
        %v4714 = vmax.f32 %v4682, 0.0
        %v4715 = vmax.f32 %v4683, 0.0
        %v4716 = vmax.f32 %v4684, 0.0
        %v4717 = vmax.f32 %v4685, 0.0
        %v4718 = vmax.f32 %v4686, 0.0
        %v4719 = vmax.f32 %v4687, 0.0
        %v4720 = vmax.f32 %v4688, 0.0
        %v4721 = vmax.f32 %v4689, 0.0
        %v4722 = vmax.f32 %v4690, 0.0
        %v4723 = vmax.f32 %v4691, 0.0
        %v4724 = vmax.f32 %v4692, 0.0
        %v4725 = vmax.f32 %v4693, 0.0
        %v4726 = vmax.f32 %v4694, 0.0
        %v4727 = vmax.f32 %v4695, 0.0
        %v4728 = vpack.c.bf16 %v4697, %v4696
        %v4729 = vpack.c.bf16 %v4699, %v4698
        %v4730 = vpack.c.bf16 %v4701, %v4700
        %v4731 = vpack.c.bf16 %v4703, %v4702
        %v4732 = vpack.c.bf16 %v4705, %v4704
        %v4733 = vpack.c.bf16 %v4707, %v4706
        %v4734 = vpack.c.bf16 %v4709, %v4708
        %v4735 = vpack.c.bf16 %v4711, %v4710
        %v4736 = vpack.c.bf16 %v4713, %v4712
        %v4737 = vpack.c.bf16 %v4715, %v4714
        %v4738 = vpack.c.bf16 %v4717, %v4716
        %v4739 = vpack.c.bf16 %v4719, %v4718
        %v4740 = vpack.c.bf16 %v4721, %v4720
        %v4741 = vpack.c.bf16 %v4723, %v4722
        %v4742 = vpack.c.bf16 %v4725, %v4724
        %v4743 = vpack.c.bf16 %v4727, %v4726
        %v4760 = vunpack.c.l.b16 %v4728
        %v4761 = vunpack.c.h.b16 %v4728
        %v4762 = vunpack.c.l.b16 %v4729
        %v4763 = vunpack.c.h.b16 %v4729
        %v4764 = vunpack.c.l.b16 %v4730
        %v4765 = vunpack.c.h.b16 %v4730
        %v4766 = vunpack.c.l.b16 %v4731
        %v4767 = vunpack.c.h.b16 %v4731
        %v4768 = vunpack.c.l.b16 %v4732
        %v4769 = vunpack.c.h.b16 %v4732
        %v4770 = vunpack.c.l.b16 %v4733
        %v4771 = vunpack.c.h.b16 %v4733
        %v4772 = vunpack.c.l.b16 %v4734
        %v4773 = vunpack.c.h.b16 %v4734
        %v4774 = vunpack.c.l.b16 %v4735
        %v4775 = vunpack.c.h.b16 %v4735
        %v4776 = vunpack.c.l.b16 %v4736
        %v4777 = vunpack.c.h.b16 %v4736
        %v4778 = vunpack.c.l.b16 %v4737
        %v4779 = vunpack.c.h.b16 %v4737
        %v4780 = vunpack.c.l.b16 %v4738
        %v4781 = vunpack.c.h.b16 %v4738
        %v4782 = vunpack.c.l.b16 %v4739
        %v4783 = vunpack.c.h.b16 %v4739
        %v4784 = vunpack.c.l.b16 %v4740
        %v4785 = vunpack.c.h.b16 %v4740
        %v4786 = vunpack.c.l.b16 %v4741
        %v4787 = vunpack.c.h.b16 %v4741
        %v4788 = vunpack.c.l.b16 %v4742
        %v4789 = vunpack.c.h.b16 %v4742
        %v4790 = vunpack.c.l.b16 %v4743
        %v4791 = vunpack.c.h.b16 %v4743
        %v4792 = vpack.c.b16 %v4760, %v4760
        %v4793 = vpack.c.b16 %v4761, %v4761
        %v4794 = vpack.c.b16 %v4762, %v4762
        %v4795 = vpack.c.b16 %v4763, %v4763
        %v4796 = vpack.c.b16 %v4764, %v4764
        %v4797 = vpack.c.b16 %v4765, %v4765
        %v4798 = vpack.c.b16 %v4766, %v4766
        %v4799 = vpack.c.b16 %v4767, %v4767
        %v4800 = vpack.c.b16 %v4768, %v4768
        %v4801 = vpack.c.b16 %v4769, %v4769
        %v4802 = vpack.c.b16 %v4770, %v4770
        %v4803 = vpack.c.b16 %v4771, %v4771
        %v4804 = vpack.c.b16 %v4772, %v4772
        %v4805 = vpack.c.b16 %v4773, %v4773
        %v4806 = vpack.c.b16 %v4774, %v4774
        %v4807 = vpack.c.b16 %v4775, %v4775
        %v4808 = vpack.c.b16 %v4776, %v4776
        %v4809 = vpack.c.b16 %v4777, %v4777
        %v4810 = vpack.c.b16 %v4778, %v4778
        %v4811 = vpack.c.b16 %v4779, %v4779
        %v4812 = vpack.c.b16 %v4780, %v4780
        %v4813 = vpack.c.b16 %v4781, %v4781
        %v4814 = vpack.c.b16 %v4782, %v4782
        %v4815 = vpack.c.b16 %v4783, %v4783
        %v4816 = vpack.c.b16 %v4784, %v4784
        %v4817 = vpack.c.b16 %v4785, %v4785
        %v4818 = vpack.c.b16 %v4786, %v4786
        %v4819 = vpack.c.b16 %v4787, %v4787
        %v4820 = vpack.c.b16 %v4788, %v4788
        %v4821 = vpack.c.b16 %v4789, %v4789
        %v4822 = vpack.c.b16 %v4790, %v4790
        %v4823 = vpack.c.b16 %v4791, %v4791
        %4856 = vst [vmem:[%s379] sm:$0xf] %v4792
        %4857 = vst [vmem:[%s379 + $0x4] sm:$0xf] %v4793
        %4858 = vst [vmem:[%s379 + $0x8] sm:$0xf] %v4794
        %4859 = vst [vmem:[%s379 + $0xc] sm:$0xf] %v4795
        %4860 = vst [vmem:[%s379 + $0x10] sm:$0xf] %v4796
        %4861 = vst [vmem:[%s379 + $0x14] sm:$0xf] %v4797
        %4862 = vst [vmem:[%s379 + $0x18] sm:$0xf] %v4798
        %4863 = vst [vmem:[%s379 + $0x1c] sm:$0xf] %v4799
        %4864 = vst [vmem:[%s379 + $0x20] sm:$0xf] %v4800
        %4865 = vst [vmem:[%s379 + $0x24] sm:$0xf] %v4801
        %4866 = vst [vmem:[%s379 + $0x28] sm:$0xf] %v4802
        %4867 = vst [vmem:[%s379 + $0x2c] sm:$0xf] %v4803
        %4868 = vst [vmem:[%s379 + $0x30] sm:$0xf] %v4804
        %4869 = vst [vmem:[%s379 + $0x34] sm:$0xf] %v4805
        %4870 = vst [vmem:[%s379 + $0x38] sm:$0xf] %v4806
        %4871 = vst [vmem:[%s379 + $0x3c] sm:$0xf] %v4807
        %4872 = vst [vmem:[%s379 + $0x40] sm:$0xf] %v4808
        %4873 = vst [vmem:[%s379 + $0x44] sm:$0xf] %v4809
        %4874 = vst [vmem:[%s379 + $0x48] sm:$0xf] %v4810
        %4875 = vst [vmem:[%s379 + $0x4c] sm:$0xf] %v4811
        %4876 = vst [vmem:[%s379 + $0x50] sm:$0xf] %v4812
        %4877 = vst [vmem:[%s379 + $0x54] sm:$0xf] %v4813
        %4878 = vst [vmem:[%s379 + $0x58] sm:$0xf] %v4814
        %4879 = vst [vmem:[%s379 + $0x5c] sm:$0xf] %v4815
        %4880 = vst [vmem:[%s379 + $0x60] sm:$0xf] %v4816
        %4881 = vst [vmem:[%s379 + $0x64] sm:$0xf] %v4817
        %4882 = vst [vmem:[%s379 + $0x68] sm:$0xf] %v4818
        %4883 = vst [vmem:[%s379 + $0x6c] sm:$0xf] %v4819
        %4884 = vst [vmem:[%s379 + $0x70] sm:$0xf] %v4820
        %4885 = vst [vmem:[%s379 + $0x74] sm:$0xf] %v4821
        %4886 = vst [vmem:[%s379 + $0x78] sm:$0xf] %v4822
        %4887 = vst [vmem:[%s379 + $0x7c] sm:$0xf] %v4823
        %s4888 = sand.u32 %s269, 1
        %s4889 = scalar_lea.sflag [#allocation4], %s4888
        %s4890 = sand.u32 %s269, 1
        %s4891 = smul.addr %s4890, 128
        %s4892 = scalar_lea.vmem [#allocation3], %s4891
        // Predicated region
        $region65: #{tpu_custom_call.1} parent=63 // pred_check
          %p4893 = pneg %p279
        $region66: #{tpu_custom_call.1} parent=63 // pred_check_branch
          %4895 = sbr.rel (%p4893) target = $region68
        $region67: #{tpu_custom_call.1} parent=63 // pred_region
          %s4897 = ssub.s32 2048, 2048
          %4898 = vsyncadd %s4889, %s4897
          %s4899 = smul.addr %s25, 32
          %s4900 = smul.addr %s4899, 64
          %s4901 = scalar_lea.hbm %s11, %s4900
          %s4902 = sshll.u32 %s4892, 4
          %s4903 = int_to_ptr.vmem [resolvable:$true] %s4902
          %4908 = dma.vmem_to_hbm [thread:$0]  %s4903, 2048, %s4901, %s4889, 64, 64, 4
        $region68: #{tpu_custom_call.1} parent=63 // pred_fallthru
          _
      $region64: #{tpu_custom_call.1} parent=5 // pred_fallthru
        _
      %p4909 = scmp.le.s32.totalorder 2, %s20
      // Predicated region
      $region69: #{tpu_custom_call.1} parent=5 // pred_check
        %p4910 = pneg %p4909
      $region70: #{tpu_custom_call.1} parent=5 // pred_check_branch
        %4912 = sbr.rel (%p4910) target = $region72
      $region71: #{tpu_custom_call.1} parent=5 // pred_region
        %s4913 = ssub.s32 %s20, 2
        // Predicated region
        $region73: #{tpu_custom_call.1} parent=71 // pred_check
          %p4914 = pneg %p285
        $region74: #{tpu_custom_call.1} parent=71 // pred_check_branch
          %4916 = sbr.rel (%p4914) target = $region76
        $region75: #{tpu_custom_call.1} parent=71 // pred_region
          %s4917 = sand.u32 %s270, 1
          %s4918 = scalar_lea.sflag [#allocation4], %s4917
          %s4919 = sand.u32 %s270, 1
          %s4920 = smul.addr %s4919, 128
          %s4921 = scalar_lea.vmem [#allocation3], %s4920
          %4922 = dma.done %s4918, 2048
        $region76: #{tpu_custom_call.1} parent=71 // pred_fallthru
          _
      $region72: #{tpu_custom_call.1} parent=5 // pred_fallthru
        _
    $region6: #{tpu_custom_call.1} parent=1 // loop_footer
      %s24 = sadd.s32 1, %s20
    $region7: #{tpu_custom_call.1} parent=1 // loop_footer_branch
      %19 = sbr.rel target = $region3
    $region8: #{tpu_custom_call.1} parent=1 // loop_exit
      _
    %4923 = vsyncpa [#allocation4], 1
    %s4924 = scalar_lea.sflag [#allocation4], 1
    %4925 = vsyncpa %s4924, 1

</llo_original>
